<compile_context>
chip_gen: v7x
topology: tpu7x:2x2x1
jax: 0.10.0
libtpu: 0.0.40
codegen_flags: <defaults>
</compile_context>

<pallas_src>
import jax
import jax.numpy as jnp
import numpy as np
from jax.experimental import pallas as pl
from jax.experimental.pallas import tpu as pltpu

LANE = 128


# ----------------------------------------------------------------------------
# Small helpers
# ----------------------------------------------------------------------------
def _round_up(x, m):
    return (x + m - 1) // m * m


def _compiler_params(dims):
    try:
        phys = pltpu.get_tpu_info().vmem_capacity_bytes
        limit = min(int(phys * 3 // 4), 100 * 1024 * 1024)
    except Exception:
        limit = 48 * 1024 * 1024
    return pltpu.CompilerParams(dimension_semantics=dims,
                                vmem_limit_bytes=limit)


def _pad2(a, rows, cols):
    out = jnp.zeros((rows, cols), jnp.float32)
    return out.at[:a.shape[0], :a.shape[1]].set(a.astype(jnp.float32))


def _pad_row(v, cols):
    out = jnp.zeros((1, cols), jnp.float32)
    return out.at[0, :v.shape[0]].set(v.astype(jnp.float32))


# ----------------------------------------------------------------------------
# Fused bottleneck kernel (one grid step per image)
# ----------------------------------------------------------------------------
def _make_block_kernel(*, H, W, Ho, Wo, Cp, Cxp, stride, seon, proj, cd):
    HW = H * W

    def kernel(*refs):
        it = iter(refs)
        x_ref = next(it)
        w1_ref, b1_ref = next(it), next(it)
        w2_ref, b2_ref = next(it), next(it)
        w3_ref, b3_ref = next(it), next(it)
        sew1_ref = next(it) if seon else None
        sew2_ref = next(it) if seon else None
        ws_ref = next(it) if proj else None
        bs_ref = next(it) if proj else None
        o_ref = next(it)
        hbuf_ref = next(it)   # (H+2, W+16, Cp) f32: zero-framed conv1 output
        y_ref = next(it)      # (H+2, W, 3*Cp)  f32: kx-shifted triple

        cin = x_ref.shape[-1]
        x = x_ref[0].reshape(HW, cin)                       # compute dtype

        # ---- conv1 (1x1) + BN + ReLU: one full-K matmul, weights resident.
        h1 = jnp.dot(x, w1_ref[...], preferred_element_type=jnp.float32)
        h1 = jnp.maximum(h1 + b1_ref[...], 0.0)

        # ---- zero-framed copy of h1 in VMEM.  Interior starts at sublane 8,
        # so the store below is fully aligned; rows 0 / H+1 and columns
        # 0..7 / W+8.. are the (zero) conv padding.
        hbuf_ref[...] = jnp.zeros_like(hbuf_ref)
        hbuf_ref[1:H + 1, 8:8 + W, :] = h1.reshape(H, W, Cp)

        # ---- build the kx-shifted triple ONCE (3 shifted reads, not 9):
        #      y[r, w, kx*Cp:(kx+1)*Cp] = h1_padded[r, w + kx]
        for kx in range(3):
            y_ref[:, :, kx * Cp:(kx + 1) * Cp] = \
                hbuf_ref[:, kx + 7:kx + 7 + W, :]

        # ---- conv2 (3x3) + BN + ReLU: three deep (K = 3*Cp) matmuls.
        acc = jnp.zeros((HW, Cp), jnp.float32)
        for ky in range(3):
            lhs = y_ref[ky:ky + H].reshape(HW, 3 * Cp).astype(cd)
            acc += jnp.dot(lhs, w2_ref[ky],
                           preferred_element_type=jnp.float32)
        h2 = jnp.maximum(acc + b2_ref[...], 0.0)

        # ---- conv2 stride>1 == stride-1 output subsampled (pad=1, k=3).
        if stride > 1:
            # TODO(synk): computes the full stride-1 conv2 then subsamples;
            # correct but wasteful (only the stride==1 path is exercised here).
            h2 = h2.reshape(H, W, Cp)[::stride, ::stride, :]
            h2 = h2.reshape(Ho * Wo, Cp)
            xs = x_ref[0][::stride, ::stride, :].reshape(Ho * Wo, cin)
        else:
            xs = x

        # ---- conv3 (1x1) + BN (kept in f32 through the epilogue).
        y3 = jnp.dot(h2.astype(cd), w3_ref[...],
                     preferred_element_type=jnp.float32) + b3_ref[...]

        # ---- SE: global-avg-pool + FC1 + ReLU + FC2 + sigmoid + rescale.
        if seon:
            pooled = jnp.mean(y3, axis=0, keepdims=True)       # (1, Cxp)
            hfc = jnp.maximum(
                jnp.dot(pooled, sew1_ref[...],
                        preferred_element_type=jnp.float32), 0.0)
            gate = jax.nn.sigmoid(
                jnp.dot(hfc, sew2_ref[...],
                        preferred_element_type=jnp.float32))
            y3 = y3 * gate

        # ---- shortcut (identity or fused 1x1 projection) + residual + ReLU.
        if proj:
            sc = jnp.dot(xs, ws_ref[...],
                         preferred_element_type=jnp.float32) + bs_ref[...]
        else:
            sc = xs.astype(jnp.float32)
        out = jnp.maximum(y3 + sc, 0.0)
        o_ref[...] = out.reshape(1, Ho, Wo, Cxp).astype(o_ref.dtype)

    return kernel


def _bottleneck_block(x_pad, prep, *, stride, seon, H, W, Ho, Wo):
    N, _, _, cin_p = x_pad.shape
    Cp = prep["w1"].shape[1]
    Cxp = prep["w3"].shape[1]
    proj = "ws" in prep
    cd = x_pad.dtype

    inputs = [x_pad, prep["w1"], prep["b1"], prep["w2"], prep["b2"],
              prep["w3"], prep["b3"]]
    in_specs = [
        pl.BlockSpec((1, H, W, cin_p), lambda b: (b, 0, 0, 0)),
        pl.BlockSpec((cin_p, Cp), lambda b: (0, 0)),
        pl.BlockSpec((1, Cp), lambda b: (0, 0)),
        pl.BlockSpec((3, 3 * Cp, Cp), lambda b: (0, 0, 0)),
        pl.BlockSpec((1, Cp), lambda b: (0, 0)),
        pl.BlockSpec((Cp, Cxp), lambda b: (0, 0)),
        pl.BlockSpec((1, Cxp), lambda b: (0, 0)),
    ]
    if seon:
        rp = prep["se_w1"].shape[1]
        inputs += [prep["se_w1"], prep["se_w2"]]
        in_specs += [pl.BlockSpec((Cxp, rp), lambda b: (0, 0)),
                     pl.BlockSpec((rp, Cxp), lambda b: (0, 0))]
    if proj:
        inputs += [prep["ws"], prep["bs"]]
        in_specs += [pl.BlockSpec((cin_p, Cxp), lambda b: (0, 0)),
                     pl.BlockSpec((1, Cxp), lambda b: (0, 0))]

    kernel = _make_block_kernel(H=H, W=W, Ho=Ho, Wo=Wo, Cp=Cp, Cxp=Cxp,
                                stride=stride, seon=seon, proj=proj, cd=cd)
    return pl.pallas_call(
        kernel,
        out_shape=jax.ShapeDtypeStruct((N, Ho, Wo, Cxp), jnp.float32),
        grid=(N,),
        in_specs=in_specs,
        out_specs=pl.BlockSpec((1, Ho, Wo, Cxp), lambda b: (b, 0, 0, 0)),
        scratch_shapes=[pltpu.VMEM((H + 2, W + 16, Cp), jnp.float32),
                        pltpu.VMEM((H + 2, W, 3 * Cp), jnp.float32)],
        compiler_params=_compiler_params(("parallel",)),
    )(*inputs)


# ----------------------------------------------------------------------------
# Wrapper (layout plumbing; all hot-path compute lives in the kernel)
# ----------------------------------------------------------------------------
def bottleneck_forward(x_nchw, prep, *, cexp, stride=1, seon=False):
    """NCHW forward for one _Bottleneck block. `prep` from prepare_params."""
    x = jnp.transpose(x_nchw, (0, 2, 3, 1))                  # NHWC
    N, H, W, cin = x.shape
    cin_p = prep["w1"].shape[0]
    cd = prep["w1"].dtype
    Ho = (H - 1) // stride + 1
    Wo = (W - 1) // stride + 1
    x_pad = jnp.zeros((N, H, W, cin_p), cd).at[..., :cin].set(x.astype(cd))
    out = _bottleneck_block(x_pad, prep, stride=stride, seon=seon,
                            H=H, W=W, Ho=Ho, Wo=Wo)
    out = out[..., :cexp]
    return jnp.transpose(out, (0, 3, 1, 2))                  # back to NCHW


def prepare_params(p, *, compute_dtype=jnp.bfloat16):
    """Fold BN into conv weights, pad channels to 128, repack w2 per-ky.

    Runs eagerly, ONCE, outside the jitted forward.
    """
    cd = compute_dtype
    inplanes, planes = p["w1"].shape
    cexp = p["w3"].shape[1]
    r = p["se_w1"].shape[1]
    cin_p = _round_up(inplanes, LANE)
    pp = _round_up(planes, LANE)
    cxp = _round_up(cexp, LANE)
    rp = _round_up(r, LANE)

    prep = {}
    prep["w1"] = _pad2(p["w1"] * p["s1"][None, :], cin_p, pp).astype(cd)
    prep["b1"] = _pad_row(p["b1"], pp)
    w2 = p["w2_hwio"] * p["s2"][None, None, None, :]          # (3,3,pl,pl)
    w2p = jnp.zeros((3, 3, pp, pp), jnp.float32)
    w2p = w2p.at[:, :, :planes, :planes].set(w2)
    prep["w2"] = w2p.reshape(3, 3 * pp, pp).astype(cd)        # per-ky, K=3*pp
    prep["b2"] = _pad_row(p["b2"], pp)
    prep["w3"] = _pad2(p["w3"] * p["s3"][None, :], pp, cxp).astype(cd)
    prep["b3"] = _pad_row(p["b3"], cxp)
    prep["se_w1"] = _pad2(p["se_w1"], cxp, rp)                # f32 (tiny)
    prep["se_w2"] = _pad2(p["se_w2"], rp, cxp)
    if "ws" in p:
        prep["ws"] = _pad2(p["ws"] * p["ss"][None, :], cin_p, cxp).astype(cd)
        prep["bs"] = _pad_row(p["bs"], cxp)
    return prep


# ----------------------------------------------------------------------------
# Deterministic parameter construction + pure-JAX reference
# ----------------------------------------------------------------------------
def _fold_bn(key, c, eps=1e-5):
    k1, k2, k3, k4 = jax.random.split(key, 4)
    gamma = 1.0 + 0.1 * jax.random.normal(k1, (c,), jnp.float32)
    beta = 0.1 * jax.random.normal(k2, (c,), jnp.float32)
    mean = 0.1 * jax.random.normal(k3, (c,), jnp.float32)
    var = 1.0 + 0.1 * jax.random.uniform(k4, (c,), jnp.float32)
    scale = gamma / jnp.sqrt(var + eps)
    bias = beta - mean * scale
    return scale, bias


def make_params(key, inplanes, planes, stride, reduction=16, expansion=4):
    cexp = expansion * planes
    r = max(cexp // reduction, 1)
    keys = jax.random.split(key, 10)
    p = {}
    p["w1"] = 0.1 * jax.random.normal(keys[0], (inplanes, planes), jnp.float32)
    p["s1"], p["b1"] = _fold_bn(keys[1], planes)
    p["w2_hwio"] = 0.1 * jax.random.normal(keys[2], (3, 3, planes, planes),
                                           jnp.float32)
    p["s2"], p["b2"] = _fold_bn(keys[3], planes)
    p["w3"] = 0.1 * jax.random.normal(keys[4], (planes, cexp), jnp.float32)
    p["s3"], p["b3"] = _fold_bn(keys[5], cexp)
    p["se_w1"] = 0.1 * jax.random.normal(keys[6], (cexp, r), jnp.float32)
    p["se_w2"] = 0.1 * jax.random.normal(keys[7], (r, cexp), jnp.float32)
    if stride != 1 or inplanes != cexp:
        p["ws"] = 0.1 * jax.random.normal(keys[8], (inplanes, cexp), jnp.float32)
        p["ss"], p["bs"] = _fold_bn(keys[9], cexp)
    return p


def reference_forward(x_nchw, p, *, stride=1, seon=False):
    x = jnp.transpose(x_nchw, (0, 2, 3, 1)).astype(jnp.float32)
    dn = ("NHWC", "HWIO", "NHWC")
    conv = jax.lax.conv_general_dilated
    out = conv(x, p["w1"][None, None], (1, 1), "VALID", dimension_numbers=dn)
    out = jnp.maximum(out * p["s1"] + p["b1"], 0.0)
    out = conv(out, p["w2_hwio"], (stride, stride), ((1, 1), (1, 1)),
               dimension_numbers=dn)
    out = jnp.maximum(out * p["s2"] + p["b2"], 0.0)
    out = conv(out, p["w3"][None, None], (1, 1), "VALID", dimension_numbers=dn)
    out = out * p["s3"] + p["b3"]
    if seon:
        pooled = jnp.mean(out, axis=(1, 2))
        s = jax.nn.sigmoid(jnp.maximum(pooled @ p["se_w1"], 0.0) @ p["se_w2"])
        out = out * s[:, None, None, :]
    if "ws" in p:
        xs = x[:, ::stride, ::stride, :]
        sc = conv(xs, p["ws"][None, None], (1, 1), "VALID", dimension_numbers=dn)
        sc = sc * p["ss"] + p["bs"]
    else:
        sc = x
    return jnp.transpose(jnp.maximum(out + sc, 0.0), (0, 3, 1, 2))


# ----------------------------------------------------------------------------
if __name__ == "__main__":
    key = jax.random.PRNGKey(0)
    kx_, kp1, kp2 = jax.random.split(key, 3)

    fwd = jax.jit(bottleneck_forward,
                  static_argnames=("cexp", "stride", "seon"))

    # Case 1: projection shortcut + SE (inplanes != expansion*planes).
    N, inplanes, H, W = 2, 16, 16, 16
    planes, stride, seon = 8, 1, True
    cexp = 4 * planes
    x = jax.random.normal(kx_, (N, inplanes, H, W), jnp.float32)
    params = make_params(kp1, inplanes, planes, stride)

    ref = jax.block_until_ready(
        reference_forward(x, params, stride=stride, seon=seon))

    # f32 compute path (tight parity check).
    prep_f32 = prepare_params(params, compute_dtype=jnp.float32)
    out_f32 = jax.block_until_ready(
        fwd(x, prep_f32, cexp=cexp, stride=stride, seon=seon))
    assert out_f32.shape == (N, cexp, H, W), out_f32.shape
    np.testing.assert_allclose(np.asarray(out_f32), np.asarray(ref),
                               rtol=1e-4, atol=1e-4)

    # bf16 operands (default; MXU path on v5e/v6e/v7x); f32 accumulate/epilogue.
    prep_bf16 = prepare_params(params)
    out_bf16 = jax.block_until_ready(
        fwd(x, prep_bf16, cexp=cexp, stride=stride, seon=seon))
    np.testing.assert_allclose(np.asarray(out_bf16), np.asarray(ref),
                               rtol=5e-2, atol=5e-2)

    # Case 2: identity shortcut, no SE (inplanes == expansion*planes).
    inplanes2, planes2 = 32, 8
    cexp2 = 4 * planes2
    x2 = jax.random.normal(kx_, (N, inplanes2, H, W), jnp.float32)
    params2 = make_params(kp2, inplanes2, planes2, 1)
    assert "ws" not in params2
    ref2 = jax.block_until_ready(
        reference_forward(x2, params2, stride=1, seon=False))
    prep2 = prepare_params(params2, compute_dtype=jnp.float32)
    out2 = jax.block_until_ready(
        fwd(x2, prep2, cexp=cexp2, stride=1, seon=False))
    np.testing.assert_allclose(np.asarray(out2), np.asarray(ref2),
                               rtol=1e-4, atol=1e-4)

    print("KERNEL_OK")
</pallas_src>

<mosaic_0001>
module attributes {stable_mosaic.version = 11 : i64} {
  func.func @kernel(%arg0: i32, %arg1: memref<1x16x16x128xf32, #tpu.memory_space<vmem>>, %arg2: memref<128x128xf32, #tpu.memory_space<vmem>>, %arg3: memref<1x128xf32, #tpu.memory_space<vmem>>, %arg4: memref<3x384x128xf32, #tpu.memory_space<vmem>>, %arg5: memref<1x128xf32, #tpu.memory_space<vmem>>, %arg6: memref<128x128xf32, #tpu.memory_space<vmem>>, %arg7: memref<1x128xf32, #tpu.memory_space<vmem>>, %arg8: memref<128x128xf32, #tpu.memory_space<vmem>>, %arg9: memref<128x128xf32, #tpu.memory_space<vmem>>, %arg10: memref<128x128xf32, #tpu.memory_space<vmem>>, %arg11: memref<1x128xf32, #tpu.memory_space<vmem>>, %arg12: memref<1x16x16x128xf32, #tpu.memory_space<vmem>>, %arg13: memref<18x32x128xf32, #tpu.memory_space<vmem>>, %arg14: memref<18x16x384xf32, #tpu.memory_space<vmem>>) attributes {dimension_semantics = [#tpu.dimension_semantics<parallel>], iteration_bounds = array<i64: 2>, scalar_prefetch = 0 : i64, scratch_operands = 2 : i64, tpu.core_type = #tpu.core_type<tc>, window_params = [{transform_indices = @transform_0, window_bounds = array<i64: 1, 16, 16, 128>}, {pipeline_mode = #tpu.pipeline_mode<synchronous>, transform_indices = @transform_1, window_bounds = array<i64: 128, 128>}, {pipeline_mode = #tpu.pipeline_mode<synchronous>, transform_indices = @transform_2, window_bounds = array<i64: 1, 128>}, {pipeline_mode = #tpu.pipeline_mode<synchronous>, transform_indices = @transform_3, window_bounds = array<i64: 3, 384, 128>}, {pipeline_mode = #tpu.pipeline_mode<synchronous>, transform_indices = @transform_4, window_bounds = array<i64: 1, 128>}, {pipeline_mode = #tpu.pipeline_mode<synchronous>, transform_indices = @transform_5, window_bounds = array<i64: 128, 128>}, {pipeline_mode = #tpu.pipeline_mode<synchronous>, transform_indices = @transform_6, window_bounds = array<i64: 1, 128>}, {pipeline_mode = #tpu.pipeline_mode<synchronous>, transform_indices = @transform_7, window_bounds = array<i64: 128, 128>}, {pipeline_mode = #tpu.pipeline_mode<synchronous>, transform_indices = @transform_8, window_bounds = array<i64: 128, 128>}, {pipeline_mode = #tpu.pipeline_mode<synchronous>, transform_indices = @transform_9, window_bounds = array<i64: 128, 128>}, {pipeline_mode = #tpu.pipeline_mode<synchronous>, transform_indices = @transform_10, window_bounds = array<i64: 1, 128>}, {transform_indices = @transform_11, window_bounds = array<i64: 1, 16, 16, 128>}]} {
    %c0 = arith.constant 0 : index
    %c0_0 = arith.constant 0 : index
    %c0_1 = arith.constant 0 : index
    %c0_2 = arith.constant 0 : index
    %0 = vector.load %arg1[%c0, %c0_0, %c0_1, %c0_2] : memref<1x16x16x128xf32, #tpu.memory_space<vmem>>, vector<1x16x16x128xf32>
    %1 = vector.shape_cast %0 : vector<1x16x16x128xf32> to vector<16x16x128xf32>
    %2 = vector.shape_cast %1 : vector<16x16x128xf32> to vector<256x128xf32>
    %c0_3 = arith.constant 0 : index
    %c0_4 = arith.constant 0 : index
    %3 = vector.load %arg2[%c0_3, %c0_4] : memref<128x128xf32, #tpu.memory_space<vmem>>, vector<128x128xf32>
    %cst = arith.constant dense<0.000000e+00> : vector<256x128xf32>
    %4 = tpu.matmul %2, %3, %cst {dimension_numbers = #tpu.dot_dimension_numbers<[1], [0], [0], [1], [0, 0, 1, 1], [], []>} : vector<256x128xf32>, vector<128x128xf32>, vector<256x128xf32> -> vector<256x128xf32>
    %c0_5 = arith.constant 0 : index
    %c0_6 = arith.constant 0 : index
    %5 = vector.load %arg3[%c0_5, %c0_6] : memref<1x128xf32, #tpu.memory_space<vmem>>, vector<1x128xf32>
    %6 = vector.broadcast %5 : vector<1x128xf32> to vector<256x128xf32>
    %7 = arith.addf %4, %6 : vector<256x128xf32>
    %cst_7 = arith.constant 0.000000e+00 : f32
    %8 = vector.broadcast %cst_7 : f32 to vector<256x128xf32>
    %9 = arith.maximumf %7, %8 : vector<256x128xf32>
    %cst_8 = arith.constant 0.000000e+00 : f32
    %10 = vector.broadcast %cst_8 : f32 to vector<18x32x128xf32>
    %c0_9 = arith.constant 0 : index
    %c0_10 = arith.constant 0 : index
    %c0_11 = arith.constant 0 : index
    %11 = vector.load %arg13[%c0_9, %c0_10, %c0_11] : memref<18x32x128xf32, #tpu.memory_space<vmem>>, vector<18x32x128xf32>
    tpu.vector_store %arg13[%c0_9, %c0_10, %c0_11], %10 {strides = array<i32>} : memref<18x32x128xf32, #tpu.memory_space<vmem>>, vector<18x32x128xf32>,
    %12 = vector.shape_cast %9 : vector<256x128xf32> to vector<16x16x128xf32>
    %c1 = arith.constant 1 : index
    %c8 = arith.constant 8 : index
    %c0_12 = arith.constant 0 : index
    %13 = vector.load %arg13[%c1, %c8, %c0_12] : memref<18x32x128xf32, #tpu.memory_space<vmem>>, vector<16x16x128xf32>
    tpu.vector_store %arg13[%c1, %c8, %c0_12], %12 {strides = array<i32>} : memref<18x32x128xf32, #tpu.memory_space<vmem>>, vector<16x16x128xf32>,
    %c0_13 = arith.constant 0 : index
    %c7 = arith.constant 7 : index
    %c0_14 = arith.constant 0 : index
    %14 = vector.load %arg13[%c0_13, %c7, %c0_14] : memref<18x32x128xf32, #tpu.memory_space<vmem>>, vector<18x16x128xf32>
    %c0_15 = arith.constant 0 : index
    %c0_16 = arith.constant 0 : index
    %c0_17 = arith.constant 0 : index
    %15 = vector.load %arg14[%c0_15, %c0_16, %c0_17] : memref<18x16x384xf32, #tpu.memory_space<vmem>>, vector<18x16x128xf32>
    tpu.vector_store %arg14[%c0_15, %c0_16, %c0_17], %14 {strides = array<i32>} : memref<18x16x384xf32, #tpu.memory_space<vmem>>, vector<18x16x128xf32>,
    %c0_18 = arith.constant 0 : index
    %c8_19 = arith.constant 8 : index
    %c0_20 = arith.constant 0 : index
    %16 = vector.load %arg13[%c0_18, %c8_19, %c0_20] : memref<18x32x128xf32, #tpu.memory_space<vmem>>, vector<18x16x128xf32>
    %c0_21 = arith.constant 0 : index
    %c0_22 = arith.constant 0 : index
    %c128 = arith.constant 128 : index
    %17 = vector.load %arg14[%c0_21, %c0_22, %c128] : memref<18x16x384xf32, #tpu.memory_space<vmem>>, vector<18x16x128xf32>
    tpu.vector_store %arg14[%c0_21, %c0_22, %c128], %16 {strides = array<i32>} : memref<18x16x384xf32, #tpu.memory_space<vmem>>, vector<18x16x128xf32>,
    %c0_23 = arith.constant 0 : index
    %c9 = arith.constant 9 : index
    %c0_24 = arith.constant 0 : index
    %18 = vector.load %arg13[%c0_23, %c9, %c0_24] : memref<18x32x128xf32, #tpu.memory_space<vmem>>, vector<18x16x128xf32>
    %c0_25 = arith.constant 0 : index
    %c0_26 = arith.constant 0 : index
    %c256 = arith.constant 256 : index
    %19 = vector.load %arg14[%c0_25, %c0_26, %c256] : memref<18x16x384xf32, #tpu.memory_space<vmem>>, vector<18x16x128xf32>
    tpu.vector_store %arg14[%c0_25, %c0_26, %c256], %18 {strides = array<i32>} : memref<18x16x384xf32, #tpu.memory_space<vmem>>, vector<18x16x128xf32>,
    %cst_27 = arith.constant 0.000000e+00 : f32
    %20 = vector.broadcast %cst_27 : f32 to vector<256x128xf32>
    %c0_28 = arith.constant 0 : index
    %c0_29 = arith.constant 0 : index
    %c0_30 = arith.constant 0 : index
    %21 = vector.load %arg14[%c0_28, %c0_29, %c0_30] : memref<18x16x384xf32, #tpu.memory_space<vmem>>, vector<16x16x384xf32>
    %22 = vector.shape_cast %21 : vector<16x16x384xf32> to vector<256x384xf32>
    %c0_31 = arith.constant 0 : index
    %c0_32 = arith.constant 0 : index
    %c0_33 = arith.constant 0 : index
    %23 = vector.load %arg4[%c0_31, %c0_32, %c0_33] : memref<3x384x128xf32, #tpu.memory_space<vmem>>, vector<1x384x128xf32>
    %24 = vector.shape_cast %23 : vector<1x384x128xf32> to vector<384x128xf32>
    %cst_34 = arith.constant dense<0.000000e+00> : vector<256x128xf32>
    %25 = tpu.matmul %22, %24, %cst_34 {dimension_numbers = #tpu.dot_dimension_numbers<[1], [0], [0], [1], [0, 0, 1, 1], [], []>} : vector<256x384xf32>, vector<384x128xf32>, vector<256x128xf32> -> vector<256x128xf32>
    %26 = arith.addf %20, %25 : vector<256x128xf32>
    %c1_35 = arith.constant 1 : index
    %c0_36 = arith.constant 0 : index
    %c0_37 = arith.constant 0 : index
    %27 = vector.load %arg14[%c1_35, %c0_36, %c0_37] : memref<18x16x384xf32, #tpu.memory_space<vmem>>, vector<16x16x384xf32>
    %28 = vector.shape_cast %27 : vector<16x16x384xf32> to vector<256x384xf32>
    %c1_38 = arith.constant 1 : index
    %c0_39 = arith.constant 0 : index
    %c0_40 = arith.constant 0 : index
    %29 = vector.load %arg4[%c1_38, %c0_39, %c0_40] : memref<3x384x128xf32, #tpu.memory_space<vmem>>, vector<1x384x128xf32>
    %30 = vector.shape_cast %29 : vector<1x384x128xf32> to vector<384x128xf32>
    %cst_41 = arith.constant dense<0.000000e+00> : vector<256x128xf32>
    %31 = tpu.matmul %28, %30, %cst_41 {dimension_numbers = #tpu.dot_dimension_numbers<[1], [0], [0], [1], [0, 0, 1, 1], [], []>} : vector<256x384xf32>, vector<384x128xf32>, vector<256x128xf32> -> vector<256x128xf32>
    %32 = arith.addf %26, %31 : vector<256x128xf32>
    %c2 = arith.constant 2 : index
    %c0_42 = arith.constant 0 : index
    %c0_43 = arith.constant 0 : index
    %33 = vector.load %arg14[%c2, %c0_42, %c0_43] : memref<18x16x384xf32, #tpu.memory_space<vmem>>, vector<16x16x384xf32>
    %34 = vector.shape_cast %33 : vector<16x16x384xf32> to vector<256x384xf32>
    %c2_44 = arith.constant 2 : index
    %c0_45 = arith.constant 0 : index
    %c0_46 = arith.constant 0 : index
    %35 = vector.load %arg4[%c2_44, %c0_45, %c0_46] : memref<3x384x128xf32, #tpu.memory_space<vmem>>, vector<1x384x128xf32>
    %36 = vector.shape_cast %35 : vector<1x384x128xf32> to vector<384x128xf32>
    %cst_47 = arith.constant dense<0.000000e+00> : vector<256x128xf32>
    %37 = tpu.matmul %34, %36, %cst_47 {dimension_numbers = #tpu.dot_dimension_numbers<[1], [0], [0], [1], [0, 0, 1, 1], [], []>} : vector<256x384xf32>, vector<384x128xf32>, vector<256x128xf32> -> vector<256x128xf32>
    %38 = arith.addf %32, %37 : vector<256x128xf32>
    %c0_48 = arith.constant 0 : index
    %c0_49 = arith.constant 0 : index
    %39 = vector.load %arg5[%c0_48, %c0_49] : memref<1x128xf32, #tpu.memory_space<vmem>>, vector<1x128xf32>
    %40 = vector.broadcast %39 : vector<1x128xf32> to vector<256x128xf32>
    %41 = arith.addf %38, %40 : vector<256x128xf32>
    %cst_50 = arith.constant 0.000000e+00 : f32
    %42 = vector.broadcast %cst_50 : f32 to vector<256x128xf32>
    %43 = arith.maximumf %41, %42 : vector<256x128xf32>
    %c0_51 = arith.constant 0 : index
    %c0_52 = arith.constant 0 : index
    %44 = vector.load %arg6[%c0_51, %c0_52] : memref<128x128xf32, #tpu.memory_space<vmem>>, vector<128x128xf32>
    %cst_53 = arith.constant dense<0.000000e+00> : vector<256x128xf32>
    %45 = tpu.matmul %43, %44, %cst_53 {dimension_numbers = #tpu.dot_dimension_numbers<[1], [0], [0], [1], [0, 0, 1, 1], [], []>} : vector<256x128xf32>, vector<128x128xf32>, vector<256x128xf32> -> vector<256x128xf32>
    %c0_54 = arith.constant 0 : index
    %c0_55 = arith.constant 0 : index
    %46 = vector.load %arg7[%c0_54, %c0_55] : memref<1x128xf32, #tpu.memory_space<vmem>>, vector<1x128xf32>
    %47 = vector.broadcast %46 : vector<1x128xf32> to vector<256x128xf32>
    %48 = arith.addf %45, %47 : vector<256x128xf32>
    %cst_56 = arith.constant dense<0.000000e+00> : vector<128xf32>
    %49 = vector.multi_reduction <add>, %48, %cst_56 [0] : vector<256x128xf32> to vector<128xf32>
    %50 = vector.shape_cast %49 : vector<128xf32> to vector<1x128xf32>
    %cst_57 = arith.constant 2.560000e+02 : f32
    %51 = vector.broadcast %cst_57 : f32 to vector<1x128xf32>
    %52 = arith.divf %50, %51 : vector<1x128xf32>
    %c0_58 = arith.constant 0 : index
    %c0_59 = arith.constant 0 : index
    %53 = vector.load %arg8[%c0_58, %c0_59] : memref<128x128xf32, #tpu.memory_space<vmem>>, vector<128x128xf32>
    %cst_60 = arith.constant dense<0.000000e+00> : vector<1x128xf32>
    %54 = tpu.matmul %52, %53, %cst_60 {dimension_numbers = #tpu.dot_dimension_numbers<[1], [0], [0], [1], [0, 0, 1, 1], [], []>} : vector<1x128xf32>, vector<128x128xf32>, vector<1x128xf32> -> vector<1x128xf32>
    %cst_61 = arith.constant 0.000000e+00 : f32
    %55 = vector.broadcast %cst_61 : f32 to vector<1x128xf32>
    %56 = arith.maximumf %54, %55 : vector<1x128xf32>
    %c0_62 = arith.constant 0 : index
    %c0_63 = arith.constant 0 : index
    %57 = vector.load %arg9[%c0_62, %c0_63] : memref<128x128xf32, #tpu.memory_space<vmem>>, vector<128x128xf32>
    %cst_64 = arith.constant dense<0.000000e+00> : vector<1x128xf32>
    %58 = tpu.matmul %56, %57, %cst_64 {dimension_numbers = #tpu.dot_dimension_numbers<[1], [0], [0], [1], [0, 0, 1, 1], [], []>} : vector<1x128xf32>, vector<128x128xf32>, vector<1x128xf32> -> vector<1x128xf32>
    %59 = arith.negf %58 : vector<1x128xf32>
    %60 = math.exp %59 : vector<1x128xf32>
    %cst_65 = arith.constant 1.000000e+00 : f32
    %61 = vector.broadcast %cst_65 : f32 to vector<1x128xf32>
    %62 = arith.addf %61, %60 : vector<1x128xf32>
    %63 = arith.divf %61, %62 : vector<1x128xf32>
    %64 = vector.broadcast %63 : vector<1x128xf32> to vector<256x128xf32>
    %65 = arith.mulf %48, %64 : vector<256x128xf32>
    %c0_66 = arith.constant 0 : index
    %c0_67 = arith.constant 0 : index
    %66 = vector.load %arg10[%c0_66, %c0_67] : memref<128x128xf32, #tpu.memory_space<vmem>>, vector<128x128xf32>
    %cst_68 = arith.constant dense<0.000000e+00> : vector<256x128xf32>
    %67 = tpu.matmul %2, %66, %cst_68 {dimension_numbers = #tpu.dot_dimension_numbers<[1], [0], [0], [1], [0, 0, 1, 1], [], []>} : vector<256x128xf32>, vector<128x128xf32>, vector<256x128xf32> -> vector<256x128xf32>
    %c0_69 = arith.constant 0 : index
    %c0_70 = arith.constant 0 : index
    %68 = vector.load %arg11[%c0_69, %c0_70] : memref<1x128xf32, #tpu.memory_space<vmem>>, vector<1x128xf32>
    %69 = vector.broadcast %68 : vector<1x128xf32> to vector<256x128xf32>
    %70 = arith.addf %67, %69 : vector<256x128xf32>
    %71 = arith.addf %65, %70 : vector<256x128xf32>
    %cst_71 = arith.constant 0.000000e+00 : f32
    %72 = vector.broadcast %cst_71 : f32 to vector<256x128xf32>
    %73 = arith.maximumf %71, %72 : vector<256x128xf32>
    %74 = vector.shape_cast %73 : vector<256x128xf32> to vector<1x16x16x128xf32>
    %c0_72 = arith.constant 0 : index
    %c0_73 = arith.constant 0 : index
    %c0_74 = arith.constant 0 : index
    %c0_75 = arith.constant 0 : index
    %75 = vector.load %arg12[%c0_72, %c0_73, %c0_74, %c0_75] : memref<1x16x16x128xf32, #tpu.memory_space<vmem>>, vector<1x16x16x128xf32>
    tpu.vector_store %arg12[%c0_72, %c0_73, %c0_74, %c0_75], %74 {strides = array<i32>} : memref<1x16x16x128xf32, #tpu.memory_space<vmem>>, vector<1x16x16x128xf32>,
    return
  }
  func.func @transform_0(%arg0: i32) -> (i32, i32, i32, i32) {
    %c0_i32 = arith.constant 0 : i32
    %c0_i32_0 = arith.constant 0 : i32
    %c0_i32_1 = arith.constant 0 : i32
    %c0_i32_2 = arith.constant 0 : i32
    return %arg0, %c0_i32, %c0_i32_0, %c0_i32_1 : i32, i32, i32, i32
  }
  func.func @transform_1(%arg0: i32) -> (i32, i32) {
    %c0_i32 = arith.constant 0 : i32
    %c0_i32_0 = arith.constant 0 : i32
    %c0_i32_1 = arith.constant 0 : i32
    return %c0_i32, %c0_i32_0 : i32, i32
  }
  func.func @transform_2(%arg0: i32) -> (i32, i32) {
    %c0_i32 = arith.constant 0 : i32
    %c0_i32_0 = arith.constant 0 : i32
    %c0_i32_1 = arith.constant 0 : i32
    return %c0_i32, %c0_i32_0 : i32, i32
  }
  func.func @transform_3(%arg0: i32) -> (i32, i32, i32) {
    %c0_i32 = arith.constant 0 : i32
    %c0_i32_0 = arith.constant 0 : i32
    %c0_i32_1 = arith.constant 0 : i32
    %c0_i32_2 = arith.constant 0 : i32
    return %c0_i32, %c0_i32_0, %c0_i32_1 : i32, i32, i32
  }
  func.func @transform_4(%arg0: i32) -> (i32, i32) {
    %c0_i32 = arith.constant 0 : i32
    %c0_i32_0 = arith.constant 0 : i32
    %c0_i32_1 = arith.constant 0 : i32
    return %c0_i32, %c0_i32_0 : i32, i32
  }
  func.func @transform_5(%arg0: i32) -> (i32, i32) {
    %c0_i32 = arith.constant 0 : i32
    %c0_i32_0 = arith.constant 0 : i32
    %c0_i32_1 = arith.constant 0 : i32
    return %c0_i32, %c0_i32_0 : i32, i32
  }
  func.func @transform_6(%arg0: i32) -> (i32, i32) {
    %c0_i32 = arith.constant 0 : i32
    %c0_i32_0 = arith.constant 0 : i32
    %c0_i32_1 = arith.constant 0 : i32
    return %c0_i32, %c0_i32_0 : i32, i32
  }
  func.func @transform_7(%arg0: i32) -> (i32, i32) {
    %c0_i32 = arith.constant 0 : i32
    %c0_i32_0 = arith.constant 0 : i32
    %c0_i32_1 = arith.constant 0 : i32
    return %c0_i32, %c0_i32_0 : i32, i32
  }
  func.func @transform_8(%arg0: i32) -> (i32, i32) {
    %c0_i32 = arith.constant 0 : i32
    %c0_i32_0 = arith.constant 0 : i32
    %c0_i32_1 = arith.constant 0 : i32
    return %c0_i32, %c0_i32_0 : i32, i32
  }
  func.func @transform_9(%arg0: i32) -> (i32, i32) {
    %c0_i32 = arith.constant 0 : i32
    %c0_i32_0 = arith.constant 0 : i32
    %c0_i32_1 = arith.constant 0 : i32
    return %c0_i32, %c0_i32_0 : i32, i32
  }
  func.func @transform_10(%arg0: i32) -> (i32, i32) {
    %c0_i32 = arith.constant 0 : i32
    %c0_i32_0 = arith.constant 0 : i32
    %c0_i32_1 = arith.constant 0 : i32
    return %c0_i32, %c0_i32_0 : i32, i32
  }
  func.func @transform_11(%arg0: i32) -> (i32, i32, i32, i32) {
    %c0_i32 = arith.constant 0 : i32
    %c0_i32_0 = arith.constant 0 : i32
    %c0_i32_1 = arith.constant 0 : i32
    %c0_i32_2 = arith.constant 0 : i32
    return %arg0, %c0_i32, %c0_i32_0, %c0_i32_1 : i32, i32, i32, i32
  }
}

</mosaic_0001>

<llo_original>
// kernel: bottleneck_forward.1
$region0: #{bottleneck_forward.1}
  #allocation0 [shape = 'u32[]', space=smem, size = 0x4, offset = 0x4, fixed_abs, tag = 'smem constant byte address 0x4 - core index']
  #allocation1 [shape = 'u32[144,128]{1,0:T(1,128)}', space=vmem, size = 0x12000, scoped, tag = 'internal scratch']
  #allocation2 [shape = 'f32[18,32,128]{2,1,0:T(8,128)}', space=vmem, size = 0x48000, scoped, tag = 'scratch operand']
  #allocation3 [shape = 'f32[18,16,384]{2,1,0:T(8,128)}', space=vmem, size = 0x6c000, scoped, tag = 'scratch operand']
  %s0 = inlined_call_operand.vmem [shape: f32[2,16,16,128], index: 0, kind: input, shape index: {}]
  %s1 = inlined_call_operand.vmem [shape: f32[128,128], index: 1, kind: input, shape index: {}]
  %s2 = inlined_call_operand.vmem [shape: f32[1,128], index: 2, kind: input, shape index: {}]
  %s3 = inlined_call_operand.vmem [shape: f32[3,384,128], index: 3, kind: input, shape index: {}]
  %s4 = inlined_call_operand.vmem [shape: f32[1,128], index: 4, kind: input, shape index: {}]
  %s5 = inlined_call_operand.vmem [shape: f32[128,128], index: 5, kind: input, shape index: {}]
  %s6 = inlined_call_operand.vmem [shape: f32[1,128], index: 6, kind: input, shape index: {}]
  %s7 = inlined_call_operand.vmem [shape: f32[128,128], index: 7, kind: input, shape index: {}]
  %s8 = inlined_call_operand.vmem [shape: f32[128,128], index: 8, kind: input, shape index: {}]
  %s9 = inlined_call_operand.vmem [shape: f32[128,128], index: 9, kind: input, shape index: {}]
  %s10 = inlined_call_operand.vmem [shape: f32[1,128], index: 10, kind: input, shape index: {}]
  %s11 = inlined_call_operand.vmem [shape: f32[2,16,16,128], index: 11, kind: output, shape index: {}]
  %s12 = sld [smem:[#allocation0]]
  $region77: #{bottleneck_forward.1} parent=0
    _
  %s14 = ssub.s32 1, %s12
  %s15 = scalar_select 0, %s14, %s12
  loop: start=0, step=1, limit=4
  $region2: #{bottleneck_forward.1} parent=0 // loop_pre_header
    _
  $region3: #{bottleneck_forward.1} parent=0 // loop_header
    %s17 = sphi 0, %s21
    %p18 = scmp.ge.s32.totalorder %s17, 4
    %s27 = sphi 0, %s29
    %s30 = sphi 0, %s27
    %s31 = sphi 0, %s30
    %s47 = sphi 0, %s31
    %s51 = sphi 0, %s51
    %s53 = sphi 0, %s51
    %s54 = sphi 0, %s53
    %s68 = sphi 0, %s54
    %s72 = sphi 0, %s72
    %s74 = sphi 0, %s72
    %s75 = sphi 0, %s74
    %s89 = sphi 0, %s75
    %s93 = sphi 0, %s93
    %s95 = sphi 0, %s93
    %s96 = sphi 0, %s95
    %s110 = sphi 0, %s96
    %s114 = sphi 0, %s114
    %s116 = sphi 0, %s114
    %s117 = sphi 0, %s116
    %s131 = sphi 0, %s117
    %s135 = sphi 0, %s135
    %s137 = sphi 0, %s135
    %s138 = sphi 0, %s137
    %s152 = sphi 0, %s138
    %s156 = sphi 0, %s156
    %s158 = sphi 0, %s156
    %s159 = sphi 0, %s158
    %s173 = sphi 0, %s159
    %s177 = sphi 0, %s177
    %s179 = sphi 0, %s177
    %s180 = sphi 0, %s179
    %s194 = sphi 0, %s180
    %s198 = sphi 0, %s198
    %s200 = sphi 0, %s198
    %s201 = sphi 0, %s200
    %s215 = sphi 0, %s201
    %s219 = sphi 0, %s219
    %s221 = sphi 0, %s219
    %s222 = sphi 0, %s221
    %s236 = sphi 0, %s222
    %s240 = sphi 0, %s240
    %s242 = sphi 0, %s240
    %s243 = sphi 0, %s242
    %s257 = sphi 0, %s243
    %s263 = sphi 0, %s265
    %s266 = sphi 0, %s263
    %s267 = sphi 0, %s266
    %s283 = sphi 0, %s267
  $region4: #{bottleneck_forward.1} parent=0 // loop_header_branch
    %20 = sbr.rel (%p18) target = $region8
  $region5: #{bottleneck_forward.1} parent=0 // loop_body
    %s22 = ssub.s32 %s17, 1
    %s23 = ssub.s32 %s17, 2
    %s24 = sadd.s32 %s17, 1
    %s25 = ssub.s32 %s17, %s24
    %p26 = scmp.eq.s32.totalorder %s25, 0
    %s28 = sadd.s32 %s27, 1
    %s29 = scalar_select %p26, %s27, %s28
    %p32 = pneg %p26
    %p33 = scmp.eq.s32.totalorder %s17, 1
    %p34 = por %p32, %p33
    %p35 = scmp.ne.s32.totalorder %s27, %s30
    %p36 = scmp.eq.s32.totalorder %s17, 0
    %p37 = por %p35, %p36
    %p38 = scmp.ne.s32.totalorder %s27, %s30
    %p39 = scmp.eq.s32.totalorder %s22, 1
    %p40 = por %p38, %p39
    %p41 = scmp.ne.s32.totalorder %s30, %s31
    %p42 = scmp.eq.s32.totalorder %s22, 0
    %p43 = por %p41, %p42
    %p44 = scmp.ne.s32.totalorder %s30, %s31
    %p45 = scmp.eq.s32.totalorder %s23, 1
    %p46 = por %p44, %p45
    %p48 = scmp.ne.s32.totalorder %s31, %s47
    %p49 = scmp.eq.s32.totalorder %s23, 0
    %p50 = por %p48, %p49
    %s52 = sadd.s32 %s51, 1
    %p55 = scmp.eq.s32.totalorder %s17, 1
    %p56 = scmp.ne.s32.totalorder %s51, %s53
    %p57 = scmp.eq.s32.totalorder %s17, 0
    %p58 = por %p56, %p57
    %p59 = scmp.ne.s32.totalorder %s51, %s53
    %p60 = scmp.eq.s32.totalorder %s22, 1
    %p61 = por %p59, %p60
    %p62 = scmp.ne.s32.totalorder %s53, %s54
    %p63 = scmp.eq.s32.totalorder %s22, 0
    %p64 = por %p62, %p63
    %p65 = scmp.ne.s32.totalorder %s53, %s54
    %p66 = scmp.eq.s32.totalorder %s23, 1
    %p67 = por %p65, %p66
    %p69 = scmp.ne.s32.totalorder %s54, %s68
    %p70 = scmp.eq.s32.totalorder %s23, 0
    %p71 = por %p69, %p70
    %s73 = sadd.s32 %s72, 1
    %p76 = scmp.eq.s32.totalorder %s17, 1
    %p77 = scmp.ne.s32.totalorder %s72, %s74
    %p78 = scmp.eq.s32.totalorder %s17, 0
    %p79 = por %p77, %p78
    %p80 = scmp.ne.s32.totalorder %s72, %s74
    %p81 = scmp.eq.s32.totalorder %s22, 1
    %p82 = por %p80, %p81
    %p83 = scmp.ne.s32.totalorder %s74, %s75
    %p84 = scmp.eq.s32.totalorder %s22, 0
    %p85 = por %p83, %p84
    %p86 = scmp.ne.s32.totalorder %s74, %s75
    %p87 = scmp.eq.s32.totalorder %s23, 1
    %p88 = por %p86, %p87
    %p90 = scmp.ne.s32.totalorder %s75, %s89
    %p91 = scmp.eq.s32.totalorder %s23, 0
    %p92 = por %p90, %p91
    %s94 = sadd.s32 %s93, 1
    %p97 = scmp.eq.s32.totalorder %s17, 1
    %p98 = scmp.ne.s32.totalorder %s93, %s95
    %p99 = scmp.eq.s32.totalorder %s17, 0
    %p100 = por %p98, %p99
    %p101 = scmp.ne.s32.totalorder %s93, %s95
    %p102 = scmp.eq.s32.totalorder %s22, 1
    %p103 = por %p101, %p102
    %p104 = scmp.ne.s32.totalorder %s95, %s96
    %p105 = scmp.eq.s32.totalorder %s22, 0
    %p106 = por %p104, %p105
    %p107 = scmp.ne.s32.totalorder %s95, %s96
    %p108 = scmp.eq.s32.totalorder %s23, 1
    %p109 = por %p107, %p108
    %p111 = scmp.ne.s32.totalorder %s96, %s110
    %p112 = scmp.eq.s32.totalorder %s23, 0
    %p113 = por %p111, %p112
    %s115 = sadd.s32 %s114, 1
    %p118 = scmp.eq.s32.totalorder %s17, 1
    %p119 = scmp.ne.s32.totalorder %s114, %s116
    %p120 = scmp.eq.s32.totalorder %s17, 0
    %p121 = por %p119, %p120
    %p122 = scmp.ne.s32.totalorder %s114, %s116
    %p123 = scmp.eq.s32.totalorder %s22, 1
    %p124 = por %p122, %p123
    %p125 = scmp.ne.s32.totalorder %s116, %s117
    %p126 = scmp.eq.s32.totalorder %s22, 0
    %p127 = por %p125, %p126
    %p128 = scmp.ne.s32.totalorder %s116, %s117
    %p129 = scmp.eq.s32.totalorder %s23, 1
    %p130 = por %p128, %p129
    %p132 = scmp.ne.s32.totalorder %s117, %s131
    %p133 = scmp.eq.s32.totalorder %s23, 0
    %p134 = por %p132, %p133
    %s136 = sadd.s32 %s135, 1
    %p139 = scmp.eq.s32.totalorder %s17, 1
    %p140 = scmp.ne.s32.totalorder %s135, %s137
    %p141 = scmp.eq.s32.totalorder %s17, 0
    %p142 = por %p140, %p141
    %p143 = scmp.ne.s32.totalorder %s135, %s137
    %p144 = scmp.eq.s32.totalorder %s22, 1
    %p145 = por %p143, %p144
    %p146 = scmp.ne.s32.totalorder %s137, %s138
    %p147 = scmp.eq.s32.totalorder %s22, 0
    %p148 = por %p146, %p147
    %p149 = scmp.ne.s32.totalorder %s137, %s138
    %p150 = scmp.eq.s32.totalorder %s23, 1
    %p151 = por %p149, %p150
    %p153 = scmp.ne.s32.totalorder %s138, %s152
    %p154 = scmp.eq.s32.totalorder %s23, 0
    %p155 = por %p153, %p154
    %s157 = sadd.s32 %s156, 1
    %p160 = scmp.eq.s32.totalorder %s17, 1
    %p161 = scmp.ne.s32.totalorder %s156, %s158
    %p162 = scmp.eq.s32.totalorder %s17, 0
    %p163 = por %p161, %p162
    %p164 = scmp.ne.s32.totalorder %s156, %s158
    %p165 = scmp.eq.s32.totalorder %s22, 1
    %p166 = por %p164, %p165
    %p167 = scmp.ne.s32.totalorder %s158, %s159
    %p168 = scmp.eq.s32.totalorder %s22, 0
    %p169 = por %p167, %p168
    %p170 = scmp.ne.s32.totalorder %s158, %s159
    %p171 = scmp.eq.s32.totalorder %s23, 1
    %p172 = por %p170, %p171
    %p174 = scmp.ne.s32.totalorder %s159, %s173
    %p175 = scmp.eq.s32.totalorder %s23, 0
    %p176 = por %p174, %p175
    %s178 = sadd.s32 %s177, 1
    %p181 = scmp.eq.s32.totalorder %s17, 1
    %p182 = scmp.ne.s32.totalorder %s177, %s179
    %p183 = scmp.eq.s32.totalorder %s17, 0
    %p184 = por %p182, %p183
    %p185 = scmp.ne.s32.totalorder %s177, %s179
    %p186 = scmp.eq.s32.totalorder %s22, 1
    %p187 = por %p185, %p186
    %p188 = scmp.ne.s32.totalorder %s179, %s180
    %p189 = scmp.eq.s32.totalorder %s22, 0
    %p190 = por %p188, %p189
    %p191 = scmp.ne.s32.totalorder %s179, %s180
    %p192 = scmp.eq.s32.totalorder %s23, 1
    %p193 = por %p191, %p192
    %p195 = scmp.ne.s32.totalorder %s180, %s194
    %p196 = scmp.eq.s32.totalorder %s23, 0
    %p197 = por %p195, %p196
    %s199 = sadd.s32 %s198, 1
    %p202 = scmp.eq.s32.totalorder %s17, 1
    %p203 = scmp.ne.s32.totalorder %s198, %s200
    %p204 = scmp.eq.s32.totalorder %s17, 0
    %p205 = por %p203, %p204
    %p206 = scmp.ne.s32.totalorder %s198, %s200
    %p207 = scmp.eq.s32.totalorder %s22, 1
    %p208 = por %p206, %p207
    %p209 = scmp.ne.s32.totalorder %s200, %s201
    %p210 = scmp.eq.s32.totalorder %s22, 0
    %p211 = por %p209, %p210
    %p212 = scmp.ne.s32.totalorder %s200, %s201
    %p213 = scmp.eq.s32.totalorder %s23, 1
    %p214 = por %p212, %p213
    %p216 = scmp.ne.s32.totalorder %s201, %s215
    %p217 = scmp.eq.s32.totalorder %s23, 0
    %p218 = por %p216, %p217
    %s220 = sadd.s32 %s219, 1
    %p223 = scmp.eq.s32.totalorder %s17, 1
    %p224 = scmp.ne.s32.totalorder %s219, %s221
    %p225 = scmp.eq.s32.totalorder %s17, 0
    %p226 = por %p224, %p225
    %p227 = scmp.ne.s32.totalorder %s219, %s221
    %p228 = scmp.eq.s32.totalorder %s22, 1
    %p229 = por %p227, %p228
    %p230 = scmp.ne.s32.totalorder %s221, %s222
    %p231 = scmp.eq.s32.totalorder %s22, 0
    %p232 = por %p230, %p231
    %p233 = scmp.ne.s32.totalorder %s221, %s222
    %p234 = scmp.eq.s32.totalorder %s23, 1
    %p235 = por %p233, %p234
    %p237 = scmp.ne.s32.totalorder %s222, %s236
    %p238 = scmp.eq.s32.totalorder %s23, 0
    %p239 = por %p237, %p238
    %s241 = sadd.s32 %s240, 1
    %p244 = scmp.eq.s32.totalorder %s17, 1
    %p245 = scmp.ne.s32.totalorder %s240, %s242
    %p246 = scmp.eq.s32.totalorder %s17, 0
    %p247 = por %p245, %p246
    %p248 = scmp.ne.s32.totalorder %s240, %s242
    %p249 = scmp.eq.s32.totalorder %s22, 1
    %p250 = por %p248, %p249
    %p251 = scmp.ne.s32.totalorder %s242, %s243
    %p252 = scmp.eq.s32.totalorder %s22, 0
    %p253 = por %p251, %p252
    %p254 = scmp.ne.s32.totalorder %s242, %s243
    %p255 = scmp.eq.s32.totalorder %s23, 1
    %p256 = por %p254, %p255
    %p258 = scmp.ne.s32.totalorder %s243, %s257
    %p259 = scmp.eq.s32.totalorder %s23, 0
    %p260 = por %p258, %p259
    %s261 = ssub.s32 %s17, %s24
    %p262 = scmp.eq.s32.totalorder %s261, 0
    %s264 = sadd.s32 %s263, 1
    %s265 = scalar_select %p262, %s263, %s264
    %p268 = pneg %p262
    %p269 = scmp.eq.s32.totalorder %s17, 1
    %p270 = por %p268, %p269
    %p271 = scmp.ne.s32.totalorder %s263, %s266
    %p272 = scmp.eq.s32.totalorder %s17, 0
    %p273 = por %p271, %p272
    %p274 = scmp.ne.s32.totalorder %s263, %s266
    %p275 = scmp.eq.s32.totalorder %s22, 1
    %p276 = por %p274, %p275
    %p277 = scmp.ne.s32.totalorder %s266, %s267
    %p278 = scmp.eq.s32.totalorder %s22, 0
    %p279 = por %p277, %p278
    %p280 = scmp.ne.s32.totalorder %s266, %s267
    %p281 = scmp.eq.s32.totalorder %s23, 1
    %p282 = por %p280, %p281
    %p284 = scmp.ne.s32.totalorder %s267, %s283
    %p285 = scmp.eq.s32.totalorder %s23, 0
    %p286 = por %p284, %p285
    %p287 = scmp.le.s32.totalorder 1, %s17
    %p288 = scmp.lt.s32.totalorder %s17, 3
    %p289 = pnand %p287, %p288
    %p290 = pneg %p289
    // Predicated region
    $region9: #{bottleneck_forward.1} parent=5 // pred_check
      _
    $region10: #{bottleneck_forward.1} parent=5 // pred_check_branch
      %292 = sbr.rel (%p289) target = $region12
    $region11: #{bottleneck_forward.1} parent=5 // pred_region
      %s293 = ssub.s32 %s17, 1
      // Predicated region
      $region13: #{bottleneck_forward.1} parent=11 // pred_check
        %p294 = pneg %p64
      $region14: #{bottleneck_forward.1} parent=11 // pred_check_branch
        %296 = sbr.rel (%p294) target = $region16
      $region15: #{bottleneck_forward.1} parent=11 // pred_region
        _
      $region16: #{bottleneck_forward.1} parent=11 // pred_fallthru
        _
      // Predicated region
      $region17: #{bottleneck_forward.1} parent=11 // pred_check
        %p297 = pneg %p85
      $region18: #{bottleneck_forward.1} parent=11 // pred_check_branch
        %299 = sbr.rel (%p297) target = $region20
      $region19: #{bottleneck_forward.1} parent=11 // pred_region
        _
      $region20: #{bottleneck_forward.1} parent=11 // pred_fallthru
        _
      // Predicated region
      $region21: #{bottleneck_forward.1} parent=11 // pred_check
        %p300 = pneg %p106
      $region22: #{bottleneck_forward.1} parent=11 // pred_check_branch
        %302 = sbr.rel (%p300) target = $region24
      $region23: #{bottleneck_forward.1} parent=11 // pred_region
        _
      $region24: #{bottleneck_forward.1} parent=11 // pred_fallthru
        _
      // Predicated region
      $region25: #{bottleneck_forward.1} parent=11 // pred_check
        %p303 = pneg %p127
      $region26: #{bottleneck_forward.1} parent=11 // pred_check_branch
        %305 = sbr.rel (%p303) target = $region28
      $region27: #{bottleneck_forward.1} parent=11 // pred_region
        _
      $region28: #{bottleneck_forward.1} parent=11 // pred_fallthru
        _
      // Predicated region
      $region29: #{bottleneck_forward.1} parent=11 // pred_check
        %p306 = pneg %p148
      $region30: #{bottleneck_forward.1} parent=11 // pred_check_branch
        %308 = sbr.rel (%p306) target = $region32
      $region31: #{bottleneck_forward.1} parent=11 // pred_region
        _
      $region32: #{bottleneck_forward.1} parent=11 // pred_fallthru
        _
      // Predicated region
      $region33: #{bottleneck_forward.1} parent=11 // pred_check
        %p309 = pneg %p169
      $region34: #{bottleneck_forward.1} parent=11 // pred_check_branch
        %311 = sbr.rel (%p309) target = $region36
      $region35: #{bottleneck_forward.1} parent=11 // pred_region
        _
      $region36: #{bottleneck_forward.1} parent=11 // pred_fallthru
        _
      // Predicated region
      $region37: #{bottleneck_forward.1} parent=11 // pred_check
        %p312 = pneg %p190
      $region38: #{bottleneck_forward.1} parent=11 // pred_check_branch
        %314 = sbr.rel (%p312) target = $region40
      $region39: #{bottleneck_forward.1} parent=11 // pred_region
        _
      $region40: #{bottleneck_forward.1} parent=11 // pred_fallthru
        _
      // Predicated region
      $region41: #{bottleneck_forward.1} parent=11 // pred_check
        %p315 = pneg %p211
      $region42: #{bottleneck_forward.1} parent=11 // pred_check_branch
        %317 = sbr.rel (%p315) target = $region44
      $region43: #{bottleneck_forward.1} parent=11 // pred_region
        _
      $region44: #{bottleneck_forward.1} parent=11 // pred_fallthru
        _
      // Predicated region
      $region45: #{bottleneck_forward.1} parent=11 // pred_check
        %p318 = pneg %p232
      $region46: #{bottleneck_forward.1} parent=11 // pred_check_branch
        %320 = sbr.rel (%p318) target = $region48
      $region47: #{bottleneck_forward.1} parent=11 // pred_region
        _
      $region48: #{bottleneck_forward.1} parent=11 // pred_fallthru
        _
      // Predicated region
      $region49: #{bottleneck_forward.1} parent=11 // pred_check
        %p321 = pneg %p253
      $region50: #{bottleneck_forward.1} parent=11 // pred_check_branch
        %323 = sbr.rel (%p321) target = $region52
      $region51: #{bottleneck_forward.1} parent=11 // pred_region
        _
      $region52: #{bottleneck_forward.1} parent=11 // pred_fallthru
        _
    $region12: #{bottleneck_forward.1} parent=5 // pred_fallthru
      _
    %p324 = scmp.lt.s32.totalorder %s17, 2
    // Predicated region
    $region53: #{bottleneck_forward.1} parent=5 // pred_check
      %p325 = pneg %p324
    $region54: #{bottleneck_forward.1} parent=5 // pred_check_branch
      %327 = sbr.rel (%p325) target = $region56
    $region55: #{bottleneck_forward.1} parent=5 // pred_region
      // Predicated region
      $region57: #{bottleneck_forward.1} parent=55 // pred_check
        %p328 = pneg %p37
      $region58: #{bottleneck_forward.1} parent=55 // pred_check_branch
        %330 = sbr.rel (%p328) target = $region60
      $region59: #{bottleneck_forward.1} parent=55 // pred_region
        %p331 = scmp.lt.s32.totalorder %s17, 1
        %s332 = scalar_select %p331, %s17, 1
        %s333 = smul.addr %s332, 32
        %s334 = smul.addr %s333, 8
        %s335 = scalar_lea.vmem %s0, %s334
      $region60: #{bottleneck_forward.1} parent=55 // pred_fallthru
        _
    $region56: #{bottleneck_forward.1} parent=5 // pred_fallthru
      _
    %p336 = scmp.le.s32.totalorder 1, %s17
    %p337 = scmp.lt.s32.totalorder %s17, 3
    %p338 = pnand %p336, %p337
    %p339 = pneg %p338
    // Predicated region
    $region61: #{bottleneck_forward.1} parent=5 // pred_check
      _
    $region62: #{bottleneck_forward.1} parent=5 // pred_check_branch
      %341 = sbr.rel (%p338) target = $region64
    $region63: #{bottleneck_forward.1} parent=5 // pred_region
      %s342 = ssub.s32 %s17, 1
      %p343 = scmp.lt.s32.totalorder %s22, 1
      %s344 = scalar_select %p343, %s22, 1
      %s345 = smul.addr %s344, 32
      %s346 = smul.addr %s345, 8
      %s347 = scalar_lea.vmem %s0, %s346
      %p348 = pneg %p43
      %p349 = pneg %p40
      %p350 = pneg %p64
      %p351 = pneg %p61
      %p352 = pneg %p85
      %p353 = pneg %p82
      %p354 = pneg %p106
      %p355 = pneg %p103
      %p356 = pneg %p127
      %p357 = pneg %p124
      %p358 = pneg %p148
      %p359 = pneg %p145
      %p360 = pneg %p169
      %p361 = pneg %p166
      %p362 = pneg %p190
      %p363 = pneg %p187
      %p364 = pneg %p211
      %p365 = pneg %p208
      %p366 = pneg %p232
      %p367 = pneg %p229
      %p368 = pneg %p253
      %p369 = pneg %p250
      %p370 = pneg %p279
      %p371 = pneg %p276
      %p372 = scmp.lt.s32.totalorder %s22, 1
      %s373 = scalar_select %p372, %s22, 1
      %s374 = smul.addr %s373, 32
      %s375 = smul.addr %s374, 8
      %s376 = scalar_lea.vmem %s11, %s375
      %p377 = scmp.lt.s32.totalorder %s22, 1
      %s378 = scalar_select %p377, %s22, 1
      %s379 = smul.addr %s378, 32
      %s380 = smul.addr %s379, 8
      %s381 = scalar_lea.vmem %s0, %s380
      %p382 = scmp.lt.s32.totalorder %s22, 1
      %s383 = scalar_select %p382, %s22, 1
      %s384 = smul.addr %s383, 32
      %s385 = smul.addr %s384, 8
      %s386 = scalar_lea.vmem %s11, %s385
      %v387 = vld [vmem:[%s381] sm:$0xff]
      %v388 = vld [vmem:[%s381 + $0x8] sm:$0xff]
      %v389 = vld [vmem:[%s381 + $0x10] sm:$0xff]
      %v390 = vld [vmem:[%s381 + $0x18] sm:$0xff]
      %v391 = vld [vmem:[%s381 + $0x20] sm:$0xff]
      %v392 = vld [vmem:[%s381 + $0x28] sm:$0xff]
      %v393 = vld [vmem:[%s381 + $0x30] sm:$0xff]
      %v394 = vld [vmem:[%s381 + $0x38] sm:$0xff]
      %v395 = vld [vmem:[%s381 + $0x40] sm:$0xff]
      %v396 = vld [vmem:[%s381 + $0x48] sm:$0xff]
      %v397 = vld [vmem:[%s381 + $0x50] sm:$0xff]
      %v398 = vld [vmem:[%s381 + $0x58] sm:$0xff]
      %v399 = vld [vmem:[%s381 + $0x60] sm:$0xff]
      %v400 = vld [vmem:[%s381 + $0x68] sm:$0xff]
      %v401 = vld [vmem:[%s381 + $0x70] sm:$0xff]
      %v402 = vld [vmem:[%s381 + $0x78] sm:$0xff]
      %v403 = vld [vmem:[%s381 + $0x80] sm:$0xff]
      %v404 = vld [vmem:[%s381 + $0x88] sm:$0xff]
      %v405 = vld [vmem:[%s381 + $0x90] sm:$0xff]
      %v406 = vld [vmem:[%s381 + $0x98] sm:$0xff]
      %v407 = vld [vmem:[%s381 + $0xa0] sm:$0xff]
      %v408 = vld [vmem:[%s381 + $0xa8] sm:$0xff]
      %v409 = vld [vmem:[%s381 + $0xb0] sm:$0xff]
      %v410 = vld [vmem:[%s381 + $0xb8] sm:$0xff]
      %v411 = vld [vmem:[%s381 + $0xc0] sm:$0xff]
      %v412 = vld [vmem:[%s381 + $0xc8] sm:$0xff]
      %v413 = vld [vmem:[%s381 + $0xd0] sm:$0xff]
      %v414 = vld [vmem:[%s381 + $0xd8] sm:$0xff]
      %v415 = vld [vmem:[%s381 + $0xe0] sm:$0xff]
      %v416 = vld [vmem:[%s381 + $0xe8] sm:$0xff]
      %v417 = vld [vmem:[%s381 + $0xf0] sm:$0xff]
      %v418 = vld [vmem:[%s381 + $0xf8] sm:$0xff]
      %v419 = vld [vmem:[%s1] sm:$0xff]
      %v420 = vld [vmem:[%s1 + $0x8] sm:$0xff]
      %v421 = vld [vmem:[%s1 + $0x10] sm:$0xff]
      %v422 = vld [vmem:[%s1 + $0x18] sm:$0xff]
      %v423 = vld [vmem:[%s1 + $0x20] sm:$0xff]
      %v424 = vld [vmem:[%s1 + $0x28] sm:$0xff]
      %v425 = vld [vmem:[%s1 + $0x30] sm:$0xff]
      %v426 = vld [vmem:[%s1 + $0x38] sm:$0xff]
      %v427 = vld [vmem:[%s1 + $0x40] sm:$0xff]
      %v428 = vld [vmem:[%s1 + $0x48] sm:$0xff]
      %v429 = vld [vmem:[%s1 + $0x50] sm:$0xff]
      %v430 = vld [vmem:[%s1 + $0x58] sm:$0xff]
      %v431 = vld [vmem:[%s1 + $0x60] sm:$0xff]
      %v432 = vld [vmem:[%s1 + $0x68] sm:$0xff]
      %v433 = vld [vmem:[%s1 + $0x70] sm:$0xff]
      %v434 = vld [vmem:[%s1 + $0x78] sm:$0xff]
      %v435 = vld [vmem:[%s2] sm:$0x1]
      %v437 = vlaneseq
      %v438 = vshrl.u32 %v437, 7
      %v439 = vsub.s32 0, %v438
      %v440 = vrot.slane %v435, %v439
      %442 = vmatprep.subr.mxu0 0.0
      %443 = vmatpush1.msra.mxu0 %v419
      %444 = vmatprep.subr.mxu0 0.0
      %445 = vmatpush1.msra.mxu0 %v420
      %446 = vmatprep.subr.mxu0 0.0
      %447 = vmatpush1.msra.mxu0 %v421
      %448 = vmatprep.subr.mxu0 0.0
      %449 = vmatpush1.msra.mxu0 %v422
      %450 = vmatprep.subr.mxu0 0.0
      %451 = vmatpush1.msra.mxu0 %v423
      %452 = vmatprep.subr.mxu0 0.0
      %453 = vmatpush1.msra.mxu0 %v424
      %454 = vmatprep.subr.mxu0 0.0
      %455 = vmatpush1.msra.mxu0 %v425
      %456 = vmatprep.subr.mxu0 0.0
      %457 = vmatpush1.msra.mxu0 %v426
      %458 = vmatprep.subr.mxu0 0.0
      %459 = vmatpush1.msra.mxu0 %v427
      %460 = vmatprep.subr.mxu0 0.0
      %461 = vmatpush1.msra.mxu0 %v428
      %462 = vmatprep.subr.mxu0 0.0
      %463 = vmatpush1.msra.mxu0 %v429
      %464 = vmatprep.subr.mxu0 0.0
      %465 = vmatpush1.msra.mxu0 %v430
      %466 = vmatprep.subr.mxu0 0.0
      %467 = vmatpush1.msra.mxu0 %v431
      %468 = vmatprep.subr.mxu0 0.0
      %469 = vmatpush1.msra.mxu0 %v432
      %470 = vmatprep.subr.mxu0 0.0
      %471 = vmatpush1.msra.mxu0 %v433
      %472 = vmatprep.subr.mxu0 0.0
      %473 = vmatpush1.msra.mxu0 %v434
      %474 = vmatprep.subr.mxu0 0.0
      %475 = vmatpush1.msra.mxu0 0.0
      %476 = vmatprep.subr.mxu0 0.0
      %477 = vmatpush1.msra.mxu0 0.0
      %478 = vmatprep.subr.mxu0 0.0
      %479 = vmatpush1.msra.mxu0 0.0
      %480 = vmatprep.subr.mxu0 0.0
      %481 = vmatpush1.msra.mxu0 0.0
      %482 = vmatprep.subr.mxu0 0.0
      %483 = vmatpush1.msra.mxu0 0.0
      %484 = vmatprep.subr.mxu0 0.0
      %485 = vmatpush1.msra.mxu0 0.0
      %486 = vmatprep.subr.mxu0 0.0
      %487 = vmatpush1.msra.mxu0 0.0
      %488 = vmatprep.subr.mxu0 0.0
      %489 = vmatpush1.msra.mxu0 0.0
      %490 = vmatprep.subr.mxu0 0.0
      %491 = vmatpush1.msra.mxu0 0.0
      %492 = vmatprep.subr.mxu0 0.0
      %493 = vmatpush1.msra.mxu0 0.0
      %494 = vmatprep.subr.mxu0 0.0
      %495 = vmatpush1.msra.mxu0 0.0
      %496 = vmatprep.subr.mxu0 0.0
      %497 = vmatpush1.msra.mxu0 0.0
      %498 = vmatprep.subr.mxu0 0.0
      %499 = vmatpush1.msra.mxu0 0.0
      %500 = vmatprep.subr.mxu0 0.0
      %501 = vmatpush1.msra.mxu0 0.0
      %502 = vmatprep.subr.mxu0 0.0
      %503 = vmatpush1.msra.mxu0 0.0
      %504 = vmatprep.subr.mxu0 0.0
      %505 = vmatpush1.msra.mxu0 0.0
      %506 = vmatprep.mubr.f32.mxu0 0.0
      %507 = vmatmul.mubr.f32.gmra.mrb[0].mxu0 %v387
      %v508 = vpop.f32.mrb[0].mxu0
      %v509 = vadd.f32 %v440, %v508
      %v510 = vpop.f32.mrb[0].mxu0
      %511 = vmatprep.mubr.f32.mxu0 0.0
      %512 = vmatmul.mubr.f32.gmra.mrb[0].mxu0 %v388
      %v513 = vpop.f32.mrb[0].mxu0
      %v514 = vadd.f32 %v440, %v513
      %v515 = vpop.f32.mrb[0].mxu0
      %516 = vmatprep.mubr.f32.mxu0 0.0
      %517 = vmatmul.mubr.f32.gmra.mrb[0].mxu0 %v389
      %v518 = vpop.f32.mrb[0].mxu0
      %v519 = vadd.f32 %v440, %v518
      %v520 = vpop.f32.mrb[0].mxu0
      %521 = vmatprep.mubr.f32.mxu0 0.0
      %522 = vmatmul.mubr.f32.gmra.mrb[0].mxu0 %v390
      %v523 = vpop.f32.mrb[0].mxu0
      %v524 = vadd.f32 %v440, %v523
      %v525 = vpop.f32.mrb[0].mxu0
      %526 = vmatprep.mubr.f32.mxu0 0.0
      %527 = vmatmul.mubr.f32.gmra.mrb[0].mxu0 %v391
      %v528 = vpop.f32.mrb[0].mxu0
      %v529 = vadd.f32 %v440, %v528
      %v530 = vpop.f32.mrb[0].mxu0
      %531 = vmatprep.mubr.f32.mxu0 0.0
      %532 = vmatmul.mubr.f32.gmra.mrb[0].mxu0 %v392
      %v533 = vpop.f32.mrb[0].mxu0
      %v534 = vadd.f32 %v440, %v533
      %v535 = vpop.f32.mrb[0].mxu0
      %536 = vmatprep.mubr.f32.mxu0 0.0
      %537 = vmatmul.mubr.f32.gmra.mrb[0].mxu0 %v393
      %v538 = vpop.f32.mrb[0].mxu0
      %v539 = vadd.f32 %v440, %v538
      %v540 = vpop.f32.mrb[0].mxu0
      %541 = vmatprep.mubr.f32.mxu0 0.0
      %542 = vmatmul.mubr.f32.gmra.mrb[0].mxu0 %v394
      %v543 = vpop.f32.mrb[0].mxu0
      %v544 = vadd.f32 %v440, %v543
      %v545 = vpop.f32.mrb[0].mxu0
      %546 = vmatprep.mubr.f32.mxu0 0.0
      %547 = vmatmul.mubr.f32.gmra.mrb[0].mxu0 %v395
      %v548 = vpop.f32.mrb[0].mxu0
      %v549 = vadd.f32 %v440, %v548
      %v550 = vpop.f32.mrb[0].mxu0
      %551 = vmatprep.mubr.f32.mxu0 0.0
      %552 = vmatmul.mubr.f32.gmra.mrb[0].mxu0 %v396
      %v553 = vpop.f32.mrb[0].mxu0
      %v554 = vadd.f32 %v440, %v553
      %v555 = vpop.f32.mrb[0].mxu0
      %556 = vmatprep.mubr.f32.mxu0 0.0
      %557 = vmatmul.mubr.f32.gmra.mrb[0].mxu0 %v397
      %v558 = vpop.f32.mrb[0].mxu0
      %v559 = vadd.f32 %v440, %v558
      %v560 = vpop.f32.mrb[0].mxu0
      %561 = vmatprep.mubr.f32.mxu0 0.0
      %562 = vmatmul.mubr.f32.gmra.mrb[0].mxu0 %v398
      %v563 = vpop.f32.mrb[0].mxu0
      %v564 = vadd.f32 %v440, %v563
      %v565 = vpop.f32.mrb[0].mxu0
      %566 = vmatprep.mubr.f32.mxu0 0.0
      %567 = vmatmul.mubr.f32.gmra.mrb[0].mxu0 %v399
      %v568 = vpop.f32.mrb[0].mxu0
      %v569 = vadd.f32 %v440, %v568
      %v570 = vpop.f32.mrb[0].mxu0
      %571 = vmatprep.mubr.f32.mxu0 0.0
      %572 = vmatmul.mubr.f32.gmra.mrb[0].mxu0 %v400
      %v573 = vpop.f32.mrb[0].mxu0
      %v574 = vadd.f32 %v440, %v573
      %v575 = vpop.f32.mrb[0].mxu0
      %576 = vmatprep.mubr.f32.mxu0 0.0
      %577 = vmatmul.mubr.f32.gmra.mrb[0].mxu0 %v401
      %v578 = vpop.f32.mrb[0].mxu0
      %v579 = vadd.f32 %v440, %v578
      %v580 = vpop.f32.mrb[0].mxu0
      %581 = vmatprep.mubr.f32.mxu0 0.0
      %582 = vmatmul.mubr.f32.gmra.mrb[0].mxu0 %v402
      %v583 = vpop.f32.mrb[0].mxu0
      %v584 = vadd.f32 %v440, %v583
      %v585 = vpop.f32.mrb[0].mxu0
      %586 = vmatprep.mubr.f32.mxu0 0.0
      %587 = vmatmul.mubr.f32.gmra.mrb[0].mxu0 %v403
      %v588 = vpop.f32.mrb[0].mxu0
      %v589 = vadd.f32 %v440, %v588
      %v590 = vpop.f32.mrb[0].mxu0
      %591 = vmatprep.mubr.f32.mxu0 0.0
      %592 = vmatmul.mubr.f32.gmra.mrb[0].mxu0 %v404
      %v593 = vpop.f32.mrb[0].mxu0
      %v594 = vadd.f32 %v440, %v593
      %v595 = vpop.f32.mrb[0].mxu0
      %596 = vmatprep.mubr.f32.mxu0 0.0
      %597 = vmatmul.mubr.f32.gmra.mrb[0].mxu0 %v405
      %v598 = vpop.f32.mrb[0].mxu0
      %v599 = vadd.f32 %v440, %v598
      %v600 = vpop.f32.mrb[0].mxu0
      %601 = vmatprep.mubr.f32.mxu0 0.0
      %602 = vmatmul.mubr.f32.gmra.mrb[0].mxu0 %v406
      %v603 = vpop.f32.mrb[0].mxu0
      %v604 = vadd.f32 %v440, %v603
      %v605 = vpop.f32.mrb[0].mxu0
      %606 = vmatprep.mubr.f32.mxu0 0.0
      %607 = vmatmul.mubr.f32.gmra.mrb[0].mxu0 %v407
      %v608 = vpop.f32.mrb[0].mxu0
      %v609 = vadd.f32 %v440, %v608
      %v610 = vpop.f32.mrb[0].mxu0
      %611 = vmatprep.mubr.f32.mxu0 0.0
      %612 = vmatmul.mubr.f32.gmra.mrb[0].mxu0 %v408
      %v613 = vpop.f32.mrb[0].mxu0
      %v614 = vadd.f32 %v440, %v613
      %v615 = vpop.f32.mrb[0].mxu0
      %616 = vmatprep.mubr.f32.mxu0 0.0
      %617 = vmatmul.mubr.f32.gmra.mrb[0].mxu0 %v409
      %v618 = vpop.f32.mrb[0].mxu0
      %v619 = vadd.f32 %v440, %v618
      %v620 = vpop.f32.mrb[0].mxu0
      %621 = vmatprep.mubr.f32.mxu0 0.0
      %622 = vmatmul.mubr.f32.gmra.mrb[0].mxu0 %v410
      %v623 = vpop.f32.mrb[0].mxu0
      %v624 = vadd.f32 %v440, %v623
      %v625 = vpop.f32.mrb[0].mxu0
      %626 = vmatprep.mubr.f32.mxu0 0.0
      %627 = vmatmul.mubr.f32.gmra.mrb[0].mxu0 %v411
      %v628 = vpop.f32.mrb[0].mxu0
      %v629 = vadd.f32 %v440, %v628
      %v630 = vpop.f32.mrb[0].mxu0
      %631 = vmatprep.mubr.f32.mxu0 0.0
      %632 = vmatmul.mubr.f32.gmra.mrb[0].mxu0 %v412
      %v633 = vpop.f32.mrb[0].mxu0
      %v634 = vadd.f32 %v440, %v633
      %v635 = vpop.f32.mrb[0].mxu0
      %636 = vmatprep.mubr.f32.mxu0 0.0
      %637 = vmatmul.mubr.f32.gmra.mrb[0].mxu0 %v413
      %v638 = vpop.f32.mrb[0].mxu0
      %v639 = vadd.f32 %v440, %v638
      %v640 = vpop.f32.mrb[0].mxu0
      %641 = vmatprep.mubr.f32.mxu0 0.0
      %642 = vmatmul.mubr.f32.gmra.mrb[0].mxu0 %v414
      %v643 = vpop.f32.mrb[0].mxu0
      %v644 = vadd.f32 %v440, %v643
      %v645 = vpop.f32.mrb[0].mxu0
      %646 = vmatprep.mubr.f32.mxu0 0.0
      %647 = vmatmul.mubr.f32.gmra.mrb[0].mxu0 %v415
      %v648 = vpop.f32.mrb[0].mxu0
      %v649 = vadd.f32 %v440, %v648
      %v650 = vpop.f32.mrb[0].mxu0
      %651 = vmatprep.mubr.f32.mxu0 0.0
      %652 = vmatmul.mubr.f32.gmra.mrb[0].mxu0 %v416
      %v653 = vpop.f32.mrb[0].mxu0
      %v654 = vadd.f32 %v440, %v653
      %v655 = vpop.f32.mrb[0].mxu0
      %656 = vmatprep.mubr.f32.mxu0 0.0
      %657 = vmatmul.mubr.f32.gmra.mrb[0].mxu0 %v417
      %v658 = vpop.f32.mrb[0].mxu0
      %v659 = vadd.f32 %v440, %v658
      %v660 = vpop.f32.mrb[0].mxu0
      %661 = vmatprep.mubr.f32.mxu0 0.0
      %662 = vmatmul.mubr.f32.gmra.mrb[0].mxu0 %v418
      %v663 = vpop.f32.mrb[0].mxu0
      %v664 = vadd.f32 %v440, %v663
      %v665 = vpop.f32.mrb[0].mxu0
      %666 = vdwg.mxu0
      %v667 = vmax.f32 %v509, 0.0
      %v668 = vmax.f32 %v514, 0.0
      %v669 = vmax.f32 %v519, 0.0
      %v670 = vmax.f32 %v524, 0.0
      %v671 = vmax.f32 %v529, 0.0
      %v672 = vmax.f32 %v534, 0.0
      %v673 = vmax.f32 %v539, 0.0
      %v674 = vmax.f32 %v544, 0.0
      %v675 = vmax.f32 %v549, 0.0
      %v676 = vmax.f32 %v554, 0.0
      %v677 = vmax.f32 %v559, 0.0
      %v678 = vmax.f32 %v564, 0.0
      %v679 = vmax.f32 %v569, 0.0
      %v680 = vmax.f32 %v574, 0.0
      %v681 = vmax.f32 %v579, 0.0
      %v682 = vmax.f32 %v584, 0.0
      %v683 = vmax.f32 %v589, 0.0
      %v684 = vmax.f32 %v594, 0.0
      %v685 = vmax.f32 %v599, 0.0
      %v686 = vmax.f32 %v604, 0.0
      %v687 = vmax.f32 %v609, 0.0
      %v688 = vmax.f32 %v614, 0.0
      %v689 = vmax.f32 %v619, 0.0
      %v690 = vmax.f32 %v624, 0.0
      %v691 = vmax.f32 %v629, 0.0
      %v692 = vmax.f32 %v634, 0.0
      %v693 = vmax.f32 %v639, 0.0
      %v694 = vmax.f32 %v644, 0.0
      %v695 = vmax.f32 %v649, 0.0
      %v696 = vmax.f32 %v654, 0.0
      %v697 = vmax.f32 %v659, 0.0
      %v698 = vmax.f32 %v664, 0.0
      %699 = vst [vmem:[#allocation2] sm:$0xff] 0.0
      %700 = vst [vmem:[#allocation2 + $0x8] sm:$0xff] 0.0
      %701 = vst [vmem:[#allocation2 + $0x10] sm:$0xff] 0.0
      %702 = vst [vmem:[#allocation2 + $0x18] sm:$0xff] 0.0
      %703 = vst [vmem:[#allocation2 + $0x20] sm:$0xff] 0.0
      %704 = vst [vmem:[#allocation2 + $0x28] sm:$0xff] 0.0
      %705 = vst [vmem:[#allocation2 + $0x30] sm:$0xff] 0.0
      %706 = vst [vmem:[#allocation2 + $0x38] sm:$0xff] 0.0
      %707 = vst [vmem:[#allocation2 + $0x40] sm:$0xff] 0.0
      %708 = vst [vmem:[#allocation2 + $0x48] sm:$0xff] 0.0
      %709 = vst [vmem:[#allocation2 + $0x50] sm:$0xff] 0.0
      %710 = vst [vmem:[#allocation2 + $0x58] sm:$0xff] 0.0
      %711 = vst [vmem:[#allocation2 + $0x60] sm:$0xff] 0.0
      %712 = vst [vmem:[#allocation2 + $0x68] sm:$0xff] 0.0
      %713 = vst [vmem:[#allocation2 + $0x70] sm:$0xff] 0.0
      %714 = vst [vmem:[#allocation2 + $0x78] sm:$0xff] 0.0
      %715 = vst [vmem:[#allocation2 + $0x80] sm:$0xff] 0.0
      %716 = vst [vmem:[#allocation2 + $0x88] sm:$0xff] 0.0
      %717 = vst [vmem:[#allocation2 + $0x90] sm:$0xff] 0.0
      %718 = vst [vmem:[#allocation2 + $0x98] sm:$0xff] 0.0
      %719 = vst [vmem:[#allocation2 + $0xa0] sm:$0xff] 0.0
      %720 = vst [vmem:[#allocation2 + $0xa8] sm:$0xff] 0.0
      %721 = vst [vmem:[#allocation2 + $0xb0] sm:$0xff] 0.0
      %722 = vst [vmem:[#allocation2 + $0xb8] sm:$0xff] 0.0
      %723 = vst [vmem:[#allocation2 + $0xc0] sm:$0xff] 0.0
      %724 = vst [vmem:[#allocation2 + $0xc8] sm:$0xff] 0.0
      %725 = vst [vmem:[#allocation2 + $0xd0] sm:$0xff] 0.0
      %726 = vst [vmem:[#allocation2 + $0xd8] sm:$0xff] 0.0
      %727 = vst [vmem:[#allocation2 + $0xe0] sm:$0xff] 0.0
      %728 = vst [vmem:[#allocation2 + $0xe8] sm:$0xff] 0.0
      %729 = vst [vmem:[#allocation2 + $0xf0] sm:$0xff] 0.0
      %730 = vst [vmem:[#allocation2 + $0xf8] sm:$0xff] 0.0
      %731 = vst [vmem:[#allocation2 + $0x100] sm:$0xff] 0.0
      %732 = vst [vmem:[#allocation2 + $0x108] sm:$0xff] 0.0
      %733 = vst [vmem:[#allocation2 + $0x110] sm:$0xff] 0.0
      %734 = vst [vmem:[#allocation2 + $0x118] sm:$0xff] 0.0
      %735 = vst [vmem:[#allocation2 + $0x120] sm:$0xff] 0.0
      %736 = vst [vmem:[#allocation2 + $0x128] sm:$0xff] 0.0
      %737 = vst [vmem:[#allocation2 + $0x130] sm:$0xff] 0.0
      %738 = vst [vmem:[#allocation2 + $0x138] sm:$0xff] 0.0
      %739 = vst [vmem:[#allocation2 + $0x140] sm:$0xff] 0.0
      %740 = vst [vmem:[#allocation2 + $0x148] sm:$0xff] 0.0
      %741 = vst [vmem:[#allocation2 + $0x150] sm:$0xff] 0.0
      %742 = vst [vmem:[#allocation2 + $0x158] sm:$0xff] 0.0
      %743 = vst [vmem:[#allocation2 + $0x160] sm:$0xff] 0.0
      %744 = vst [vmem:[#allocation2 + $0x168] sm:$0xff] 0.0
      %745 = vst [vmem:[#allocation2 + $0x170] sm:$0xff] 0.0
      %746 = vst [vmem:[#allocation2 + $0x178] sm:$0xff] 0.0
      %747 = vst [vmem:[#allocation2 + $0x180] sm:$0xff] 0.0
      %748 = vst [vmem:[#allocation2 + $0x188] sm:$0xff] 0.0
      %749 = vst [vmem:[#allocation2 + $0x190] sm:$0xff] 0.0
      %750 = vst [vmem:[#allocation2 + $0x198] sm:$0xff] 0.0
      %751 = vst [vmem:[#allocation2 + $0x1a0] sm:$0xff] 0.0
      %752 = vst [vmem:[#allocation2 + $0x1a8] sm:$0xff] 0.0
      %753 = vst [vmem:[#allocation2 + $0x1b0] sm:$0xff] 0.0
      %754 = vst [vmem:[#allocation2 + $0x1b8] sm:$0xff] 0.0
      %755 = vst [vmem:[#allocation2 + $0x1c0] sm:$0xff] 0.0
      %756 = vst [vmem:[#allocation2 + $0x1c8] sm:$0xff] 0.0
      %757 = vst [vmem:[#allocation2 + $0x1d0] sm:$0xff] 0.0
      %758 = vst [vmem:[#allocation2 + $0x1d8] sm:$0xff] 0.0
      %759 = vst [vmem:[#allocation2 + $0x1e0] sm:$0xff] 0.0
      %760 = vst [vmem:[#allocation2 + $0x1e8] sm:$0xff] 0.0
      %761 = vst [vmem:[#allocation2 + $0x1f0] sm:$0xff] 0.0
      %762 = vst [vmem:[#allocation2 + $0x1f8] sm:$0xff] 0.0
      %763 = vst [vmem:[#allocation2 + $0x200] sm:$0xff] 0.0
      %764 = vst [vmem:[#allocation2 + $0x208] sm:$0xff] 0.0
      %765 = vst [vmem:[#allocation2 + $0x210] sm:$0xff] 0.0
      %766 = vst [vmem:[#allocation2 + $0x218] sm:$0xff] 0.0
      %767 = vst [vmem:[#allocation2 + $0x220] sm:$0xff] 0.0
      %768 = vst [vmem:[#allocation2 + $0x228] sm:$0xff] 0.0
      %769 = vst [vmem:[#allocation2 + $0x230] sm:$0xff] 0.0
      %770 = vst [vmem:[#allocation2 + $0x238] sm:$0xff] 0.0
      %s771 = scalar_lea.vmem [#allocation2], 32
      %772 = vst [vmem:[%s771 + $0x8] sm:$0xff] %v667
      %773 = vst [vmem:[%s771 + $0x10] sm:$0xff] %v668
      %774 = vst [vmem:[%s771 + $0x28] sm:$0xff] %v669
      %775 = vst [vmem:[%s771 + $0x30] sm:$0xff] %v670
      %776 = vst [vmem:[%s771 + $0x48] sm:$0xff] %v671
      %777 = vst [vmem:[%s771 + $0x50] sm:$0xff] %v672
      %778 = vst [vmem:[%s771 + $0x68] sm:$0xff] %v673
      %779 = vst [vmem:[%s771 + $0x70] sm:$0xff] %v674
      %780 = vst [vmem:[%s771 + $0x88] sm:$0xff] %v675
      %781 = vst [vmem:[%s771 + $0x90] sm:$0xff] %v676
      %782 = vst [vmem:[%s771 + $0xa8] sm:$0xff] %v677
      %783 = vst [vmem:[%s771 + $0xb0] sm:$0xff] %v678
      %784 = vst [vmem:[%s771 + $0xc8] sm:$0xff] %v679
      %785 = vst [vmem:[%s771 + $0xd0] sm:$0xff] %v680
      %786 = vst [vmem:[%s771 + $0xe8] sm:$0xff] %v681
      %787 = vst [vmem:[%s771 + $0xf0] sm:$0xff] %v682
      %788 = vst [vmem:[%s771 + $0x108] sm:$0xff] %v683
      %789 = vst [vmem:[%s771 + $0x110] sm:$0xff] %v684
      %790 = vst [vmem:[%s771 + $0x128] sm:$0xff] %v685
      %791 = vst [vmem:[%s771 + $0x130] sm:$0xff] %v686
      %792 = vst [vmem:[%s771 + $0x148] sm:$0xff] %v687
      %793 = vst [vmem:[%s771 + $0x150] sm:$0xff] %v688
      %794 = vst [vmem:[%s771 + $0x168] sm:$0xff] %v689
      %795 = vst [vmem:[%s771 + $0x170] sm:$0xff] %v690
      %796 = vst [vmem:[%s771 + $0x188] sm:$0xff] %v691
      %797 = vst [vmem:[%s771 + $0x190] sm:$0xff] %v692
      %798 = vst [vmem:[%s771 + $0x1a8] sm:$0xff] %v693
      %799 = vst [vmem:[%s771 + $0x1b0] sm:$0xff] %v694
      %800 = vst [vmem:[%s771 + $0x1c8] sm:$0xff] %v695
      %801 = vst [vmem:[%s771 + $0x1d0] sm:$0xff] %v696
      %802 = vst [vmem:[%s771 + $0x1e8] sm:$0xff] %v697
      %803 = vst [vmem:[%s771 + $0x1f0] sm:$0xff] %v698
      %v804 = vld [vmem:[#allocation2 + $0x7] sm:$0xff]
      %v805 = vld [vmem:[#allocation2 + $0xf] sm:$0xff]
      %v806 = vld [vmem:[#allocation2 + $0x27] sm:$0xff]
      %v807 = vld [vmem:[#allocation2 + $0x2f] sm:$0xff]
      %v808 = vld [vmem:[#allocation2 + $0x47] sm:$0xff]
      %v809 = vld [vmem:[#allocation2 + $0x4f] sm:$0xff]
      %v810 = vld [vmem:[#allocation2 + $0x67] sm:$0xff]
      %v811 = vld [vmem:[#allocation2 + $0x6f] sm:$0xff]
      %v812 = vld [vmem:[#allocation2 + $0x87] sm:$0xff]
      %v813 = vld [vmem:[#allocation2 + $0x8f] sm:$0xff]
      %v814 = vld [vmem:[#allocation2 + $0xa7] sm:$0xff]
      %v815 = vld [vmem:[#allocation2 + $0xaf] sm:$0xff]
      %v816 = vld [vmem:[#allocation2 + $0xc7] sm:$0xff]
      %v817 = vld [vmem:[#allocation2 + $0xcf] sm:$0xff]
      %v818 = vld [vmem:[#allocation2 + $0xe7] sm:$0xff]
      %v819 = vld [vmem:[#allocation2 + $0xef] sm:$0xff]
      %v820 = vld [vmem:[#allocation2 + $0x107] sm:$0xff]
      %v821 = vld [vmem:[#allocation2 + $0x10f] sm:$0xff]
      %v822 = vld [vmem:[#allocation2 + $0x127] sm:$0xff]
      %v823 = vld [vmem:[#allocation2 + $0x12f] sm:$0xff]
      %v824 = vld [vmem:[#allocation2 + $0x147] sm:$0xff]
      %v825 = vld [vmem:[#allocation2 + $0x14f] sm:$0xff]
      %v826 = vld [vmem:[#allocation2 + $0x167] sm:$0xff]
      %v827 = vld [vmem:[#allocation2 + $0x16f] sm:$0xff]
      %v828 = vld [vmem:[#allocation2 + $0x187] sm:$0xff]
      %v829 = vld [vmem:[#allocation2 + $0x18f] sm:$0xff]
      %v830 = vld [vmem:[#allocation2 + $0x1a7] sm:$0xff]
      %v831 = vld [vmem:[#allocation2 + $0x1af] sm:$0xff]
      %v832 = vld [vmem:[#allocation2 + $0x1c7] sm:$0xff]
      %v833 = vld [vmem:[#allocation2 + $0x1cf] sm:$0xff]
      %v834 = vld [vmem:[#allocation2 + $0x1e7] sm:$0xff]
      %v835 = vld [vmem:[#allocation2 + $0x1ef] sm:$0xff]
      %v836 = vld [vmem:[#allocation2 + $0x207] sm:$0xff]
      %v837 = vld [vmem:[#allocation2 + $0x20f] sm:$0xff]
      %v838 = vld [vmem:[#allocation2 + $0x227] sm:$0xff]
      %v839 = vld [vmem:[#allocation2 + $0x22f] sm:$0xff]
      %840 = vst [vmem:[#allocation3] sm:$0xff] %v804
      %841 = vst [vmem:[#allocation3 + $0x18] sm:$0xff] %v805
      %842 = vst [vmem:[#allocation3 + $0x30] sm:$0xff] %v806
      %843 = vst [vmem:[#allocation3 + $0x48] sm:$0xff] %v807
      %844 = vst [vmem:[#allocation3 + $0x60] sm:$0xff] %v808
      %845 = vst [vmem:[#allocation3 + $0x78] sm:$0xff] %v809
      %846 = vst [vmem:[#allocation3 + $0x90] sm:$0xff] %v810
      %847 = vst [vmem:[#allocation3 + $0xa8] sm:$0xff] %v811
      %848 = vst [vmem:[#allocation3 + $0xc0] sm:$0xff] %v812
      %849 = vst [vmem:[#allocation3 + $0xd8] sm:$0xff] %v813
      %850 = vst [vmem:[#allocation3 + $0xf0] sm:$0xff] %v814
      %851 = vst [vmem:[#allocation3 + $0x108] sm:$0xff] %v815
      %852 = vst [vmem:[#allocation3 + $0x120] sm:$0xff] %v816
      %853 = vst [vmem:[#allocation3 + $0x138] sm:$0xff] %v817
      %854 = vst [vmem:[#allocation3 + $0x150] sm:$0xff] %v818
      %855 = vst [vmem:[#allocation3 + $0x168] sm:$0xff] %v819
      %856 = vst [vmem:[#allocation3 + $0x180] sm:$0xff] %v820
      %857 = vst [vmem:[#allocation3 + $0x198] sm:$0xff] %v821
      %858 = vst [vmem:[#allocation3 + $0x1b0] sm:$0xff] %v822
      %859 = vst [vmem:[#allocation3 + $0x1c8] sm:$0xff] %v823
      %860 = vst [vmem:[#allocation3 + $0x1e0] sm:$0xff] %v824
      %861 = vst [vmem:[#allocation3 + $0x1f8] sm:$0xff] %v825
      %862 = vst [vmem:[#allocation3 + $0x210] sm:$0xff] %v826
      %863 = vst [vmem:[#allocation3 + $0x228] sm:$0xff] %v827
      %864 = vst [vmem:[#allocation3 + $0x240] sm:$0xff] %v828
      %865 = vst [vmem:[#allocation3 + $0x258] sm:$0xff] %v829
      %866 = vst [vmem:[#allocation3 + $0x270] sm:$0xff] %v830
      %867 = vst [vmem:[#allocation3 + $0x288] sm:$0xff] %v831
      %868 = vst [vmem:[#allocation3 + $0x2a0] sm:$0xff] %v832
      %869 = vst [vmem:[#allocation3 + $0x2b8] sm:$0xff] %v833
      %870 = vst [vmem:[#allocation3 + $0x2d0] sm:$0xff] %v834
      %871 = vst [vmem:[#allocation3 + $0x2e8] sm:$0xff] %v835
      %872 = vst [vmem:[#allocation3 + $0x300] sm:$0xff] %v836
      %873 = vst [vmem:[#allocation3 + $0x318] sm:$0xff] %v837
      %874 = vst [vmem:[#allocation3 + $0x330] sm:$0xff] %v838
      %875 = vst [vmem:[#allocation3 + $0x348] sm:$0xff] %v839
      %v876 = vld [vmem:[#allocation2 + $0x8] sm:$0xff]
      %v877 = vld [vmem:[#allocation2 + $0x10] sm:$0xff]
      %v878 = vld [vmem:[#allocation2 + $0x28] sm:$0xff]
      %v879 = vld [vmem:[#allocation2 + $0x30] sm:$0xff]
      %v880 = vld [vmem:[#allocation2 + $0x48] sm:$0xff]
      %v881 = vld [vmem:[#allocation2 + $0x50] sm:$0xff]
      %v882 = vld [vmem:[#allocation2 + $0x68] sm:$0xff]
      %v883 = vld [vmem:[#allocation2 + $0x70] sm:$0xff]
      %v884 = vld [vmem:[#allocation2 + $0x88] sm:$0xff]
      %v885 = vld [vmem:[#allocation2 + $0x90] sm:$0xff]
      %v886 = vld [vmem:[#allocation2 + $0xa8] sm:$0xff]
      %v887 = vld [vmem:[#allocation2 + $0xb0] sm:$0xff]
      %v888 = vld [vmem:[#allocation2 + $0xc8] sm:$0xff]
      %v889 = vld [vmem:[#allocation2 + $0xd0] sm:$0xff]
      %v890 = vld [vmem:[#allocation2 + $0xe8] sm:$0xff]
      %v891 = vld [vmem:[#allocation2 + $0xf0] sm:$0xff]
      %v892 = vld [vmem:[#allocation2 + $0x108] sm:$0xff]
      %v893 = vld [vmem:[#allocation2 + $0x110] sm:$0xff]
      %v894 = vld [vmem:[#allocation2 + $0x128] sm:$0xff]
      %v895 = vld [vmem:[#allocation2 + $0x130] sm:$0xff]
      %v896 = vld [vmem:[#allocation2 + $0x148] sm:$0xff]
      %v897 = vld [vmem:[#allocation2 + $0x150] sm:$0xff]
      %v898 = vld [vmem:[#allocation2 + $0x168] sm:$0xff]
      %v899 = vld [vmem:[#allocation2 + $0x170] sm:$0xff]
      %v900 = vld [vmem:[#allocation2 + $0x188] sm:$0xff]
      %v901 = vld [vmem:[#allocation2 + $0x190] sm:$0xff]
      %v902 = vld [vmem:[#allocation2 + $0x1a8] sm:$0xff]
      %v903 = vld [vmem:[#allocation2 + $0x1b0] sm:$0xff]
      %v904 = vld [vmem:[#allocation2 + $0x1c8] sm:$0xff]
      %v905 = vld [vmem:[#allocation2 + $0x1d0] sm:$0xff]
      %v906 = vld [vmem:[#allocation2 + $0x1e8] sm:$0xff]
      %v907 = vld [vmem:[#allocation2 + $0x1f0] sm:$0xff]
      %v908 = vld [vmem:[#allocation2 + $0x208] sm:$0xff]
      %v909 = vld [vmem:[#allocation2 + $0x210] sm:$0xff]
      %v910 = vld [vmem:[#allocation2 + $0x228] sm:$0xff]
      %v911 = vld [vmem:[#allocation2 + $0x230] sm:$0xff]
      %912 = vst [vmem:[#allocation3 + $0x8] sm:$0xff] %v876
      %913 = vst [vmem:[#allocation3 + $0x20] sm:$0xff] %v877
      %914 = vst [vmem:[#allocation3 + $0x38] sm:$0xff] %v878
      %915 = vst [vmem:[#allocation3 + $0x50] sm:$0xff] %v879
      %916 = vst [vmem:[#allocation3 + $0x68] sm:$0xff] %v880
      %917 = vst [vmem:[#allocation3 + $0x80] sm:$0xff] %v881
      %918 = vst [vmem:[#allocation3 + $0x98] sm:$0xff] %v882
      %919 = vst [vmem:[#allocation3 + $0xb0] sm:$0xff] %v883
      %920 = vst [vmem:[#allocation3 + $0xc8] sm:$0xff] %v884
      %921 = vst [vmem:[#allocation3 + $0xe0] sm:$0xff] %v885
      %922 = vst [vmem:[#allocation3 + $0xf8] sm:$0xff] %v886
      %923 = vst [vmem:[#allocation3 + $0x110] sm:$0xff] %v887
      %924 = vst [vmem:[#allocation3 + $0x128] sm:$0xff] %v888
      %925 = vst [vmem:[#allocation3 + $0x140] sm:$0xff] %v889
      %926 = vst [vmem:[#allocation3 + $0x158] sm:$0xff] %v890
      %927 = vst [vmem:[#allocation3 + $0x170] sm:$0xff] %v891
      %928 = vst [vmem:[#allocation3 + $0x188] sm:$0xff] %v892
      %929 = vst [vmem:[#allocation3 + $0x1a0] sm:$0xff] %v893
      %930 = vst [vmem:[#allocation3 + $0x1b8] sm:$0xff] %v894
      %931 = vst [vmem:[#allocation3 + $0x1d0] sm:$0xff] %v895
      %932 = vst [vmem:[#allocation3 + $0x1e8] sm:$0xff] %v896
      %933 = vst [vmem:[#allocation3 + $0x200] sm:$0xff] %v897
      %934 = vst [vmem:[#allocation3 + $0x218] sm:$0xff] %v898
      %935 = vst [vmem:[#allocation3 + $0x230] sm:$0xff] %v899
      %936 = vst [vmem:[#allocation3 + $0x248] sm:$0xff] %v900
      %937 = vst [vmem:[#allocation3 + $0x260] sm:$0xff] %v901
      %938 = vst [vmem:[#allocation3 + $0x278] sm:$0xff] %v902
      %939 = vst [vmem:[#allocation3 + $0x290] sm:$0xff] %v903
      %940 = vst [vmem:[#allocation3 + $0x2a8] sm:$0xff] %v904
      %941 = vst [vmem:[#allocation3 + $0x2c0] sm:$0xff] %v905
      %942 = vst [vmem:[#allocation3 + $0x2d8] sm:$0xff] %v906
      %943 = vst [vmem:[#allocation3 + $0x2f0] sm:$0xff] %v907
      %944 = vst [vmem:[#allocation3 + $0x308] sm:$0xff] %v908
      %945 = vst [vmem:[#allocation3 + $0x320] sm:$0xff] %v909
      %946 = vst [vmem:[#allocation3 + $0x338] sm:$0xff] %v910
      %947 = vst [vmem:[#allocation3 + $0x350] sm:$0xff] %v911
      %v948 = vld [vmem:[#allocation2 + $0x9] sm:$0xff]
      %v949 = vld [vmem:[#allocation2 + $0x11] sm:$0xff]
      %v950 = vld [vmem:[#allocation2 + $0x29] sm:$0xff]
      %v951 = vld [vmem:[#allocation2 + $0x31] sm:$0xff]
      %v952 = vld [vmem:[#allocation2 + $0x49] sm:$0xff]
      %v953 = vld [vmem:[#allocation2 + $0x51] sm:$0xff]
      %v954 = vld [vmem:[#allocation2 + $0x69] sm:$0xff]
      %v955 = vld [vmem:[#allocation2 + $0x71] sm:$0xff]
      %v956 = vld [vmem:[#allocation2 + $0x89] sm:$0xff]
      %v957 = vld [vmem:[#allocation2 + $0x91] sm:$0xff]
      %v958 = vld [vmem:[#allocation2 + $0xa9] sm:$0xff]
      %v959 = vld [vmem:[#allocation2 + $0xb1] sm:$0xff]
      %v960 = vld [vmem:[#allocation2 + $0xc9] sm:$0xff]
      %v961 = vld [vmem:[#allocation2 + $0xd1] sm:$0xff]
      %v962 = vld [vmem:[#allocation2 + $0xe9] sm:$0xff]
      %v963 = vld [vmem:[#allocation2 + $0xf1] sm:$0xff]
      %v964 = vld [vmem:[#allocation2 + $0x109] sm:$0xff]
      %v965 = vld [vmem:[#allocation2 + $0x111] sm:$0xff]
      %v966 = vld [vmem:[#allocation2 + $0x129] sm:$0xff]
      %v967 = vld [vmem:[#allocation2 + $0x131] sm:$0xff]
      %v968 = vld [vmem:[#allocation2 + $0x149] sm:$0xff]
      %v969 = vld [vmem:[#allocation2 + $0x151] sm:$0xff]
      %v970 = vld [vmem:[#allocation2 + $0x169] sm:$0xff]
      %v971 = vld [vmem:[#allocation2 + $0x171] sm:$0xff]
      %v972 = vld [vmem:[#allocation2 + $0x189] sm:$0xff]
      %v973 = vld [vmem:[#allocation2 + $0x191] sm:$0xff]
      %v974 = vld [vmem:[#allocation2 + $0x1a9] sm:$0xff]
      %v975 = vld [vmem:[#allocation2 + $0x1b1] sm:$0xff]
      %v976 = vld [vmem:[#allocation2 + $0x1c9] sm:$0xff]
      %v977 = vld [vmem:[#allocation2 + $0x1d1] sm:$0xff]
      %v978 = vld [vmem:[#allocation2 + $0x1e9] sm:$0xff]
      %v979 = vld [vmem:[#allocation2 + $0x1f1] sm:$0xff]
      %v980 = vld [vmem:[#allocation2 + $0x209] sm:$0xff]
      %v981 = vld [vmem:[#allocation2 + $0x211] sm:$0xff]
      %v982 = vld [vmem:[#allocation2 + $0x229] sm:$0xff]
      %v983 = vld [vmem:[#allocation2 + $0x231] sm:$0xff]
      %984 = vst [vmem:[#allocation3 + $0x10] sm:$0xff] %v948
      %985 = vst [vmem:[#allocation3 + $0x28] sm:$0xff] %v949
      %986 = vst [vmem:[#allocation3 + $0x40] sm:$0xff] %v950
      %987 = vst [vmem:[#allocation3 + $0x58] sm:$0xff] %v951
      %988 = vst [vmem:[#allocation3 + $0x70] sm:$0xff] %v952
      %989 = vst [vmem:[#allocation3 + $0x88] sm:$0xff] %v953
      %990 = vst [vmem:[#allocation3 + $0xa0] sm:$0xff] %v954
      %991 = vst [vmem:[#allocation3 + $0xb8] sm:$0xff] %v955
      %992 = vst [vmem:[#allocation3 + $0xd0] sm:$0xff] %v956
      %993 = vst [vmem:[#allocation3 + $0xe8] sm:$0xff] %v957
      %994 = vst [vmem:[#allocation3 + $0x100] sm:$0xff] %v958
      %995 = vst [vmem:[#allocation3 + $0x118] sm:$0xff] %v959
      %996 = vst [vmem:[#allocation3 + $0x130] sm:$0xff] %v960
      %997 = vst [vmem:[#allocation3 + $0x148] sm:$0xff] %v961
      %998 = vst [vmem:[#allocation3 + $0x160] sm:$0xff] %v962
      %999 = vst [vmem:[#allocation3 + $0x178] sm:$0xff] %v963
      %1000 = vst [vmem:[#allocation3 + $0x190] sm:$0xff] %v964
      %1001 = vst [vmem:[#allocation3 + $0x1a8] sm:$0xff] %v965
      %1002 = vst [vmem:[#allocation3 + $0x1c0] sm:$0xff] %v966
      %1003 = vst [vmem:[#allocation3 + $0x1d8] sm:$0xff] %v967
      %1004 = vst [vmem:[#allocation3 + $0x1f0] sm:$0xff] %v968
      %1005 = vst [vmem:[#allocation3 + $0x208] sm:$0xff] %v969
      %1006 = vst [vmem:[#allocation3 + $0x220] sm:$0xff] %v970
      %1007 = vst [vmem:[#allocation3 + $0x238] sm:$0xff] %v971
      %1008 = vst [vmem:[#allocation3 + $0x250] sm:$0xff] %v972
      %1009 = vst [vmem:[#allocation3 + $0x268] sm:$0xff] %v973
      %1010 = vst [vmem:[#allocation3 + $0x280] sm:$0xff] %v974
      %1011 = vst [vmem:[#allocation3 + $0x298] sm:$0xff] %v975
      %1012 = vst [vmem:[#allocation3 + $0x2b0] sm:$0xff] %v976
      %1013 = vst [vmem:[#allocation3 + $0x2c8] sm:$0xff] %v977
      %1014 = vst [vmem:[#allocation3 + $0x2e0] sm:$0xff] %v978
      %1015 = vst [vmem:[#allocation3 + $0x2f8] sm:$0xff] %v979
      %1016 = vst [vmem:[#allocation3 + $0x310] sm:$0xff] %v980
      %1017 = vst [vmem:[#allocation3 + $0x328] sm:$0xff] %v981
      %1018 = vst [vmem:[#allocation3 + $0x340] sm:$0xff] %v982
      %1019 = vst [vmem:[#allocation3 + $0x358] sm:$0xff] %v983
      %v1020 = vld [vmem:[#allocation3] sm:$0xff]
      %v1021 = vld [vmem:[#allocation3 + $0x8] sm:$0xff]
      %v1022 = vld [vmem:[#allocation3 + $0x10] sm:$0xff]
      %v1023 = vld [vmem:[#allocation3 + $0x18] sm:$0xff]
      %v1024 = vld [vmem:[#allocation3 + $0x20] sm:$0xff]
      %v1025 = vld [vmem:[#allocation3 + $0x28] sm:$0xff]
      %v1026 = vld [vmem:[#allocation3 + $0x30] sm:$0xff]
      %v1027 = vld [vmem:[#allocation3 + $0x38] sm:$0xff]
      %v1028 = vld [vmem:[#allocation3 + $0x40] sm:$0xff]
      %v1029 = vld [vmem:[#allocation3 + $0x48] sm:$0xff]
      %v1030 = vld [vmem:[#allocation3 + $0x50] sm:$0xff]
      %v1031 = vld [vmem:[#allocation3 + $0x58] sm:$0xff]
      %v1032 = vld [vmem:[#allocation3 + $0x60] sm:$0xff]
      %v1033 = vld [vmem:[#allocation3 + $0x68] sm:$0xff]
      %v1034 = vld [vmem:[#allocation3 + $0x70] sm:$0xff]
      %v1035 = vld [vmem:[#allocation3 + $0x78] sm:$0xff]
      %v1036 = vld [vmem:[#allocation3 + $0x80] sm:$0xff]
      %v1037 = vld [vmem:[#allocation3 + $0x88] sm:$0xff]
      %v1038 = vld [vmem:[#allocation3 + $0x90] sm:$0xff]
      %v1039 = vld [vmem:[#allocation3 + $0x98] sm:$0xff]
      %v1040 = vld [vmem:[#allocation3 + $0xa0] sm:$0xff]
      %v1041 = vld [vmem:[#allocation3 + $0xa8] sm:$0xff]
      %v1042 = vld [vmem:[#allocation3 + $0xb0] sm:$0xff]
      %v1043 = vld [vmem:[#allocation3 + $0xb8] sm:$0xff]
      %v1044 = vld [vmem:[#allocation3 + $0xc0] sm:$0xff]
      %v1045 = vld [vmem:[#allocation3 + $0xc8] sm:$0xff]
      %v1046 = vld [vmem:[#allocation3 + $0xd0] sm:$0xff]
      %v1047 = vld [vmem:[#allocation3 + $0xd8] sm:$0xff]
      %v1048 = vld [vmem:[#allocation3 + $0xe0] sm:$0xff]
      %v1049 = vld [vmem:[#allocation3 + $0xe8] sm:$0xff]
      %v1050 = vld [vmem:[#allocation3 + $0xf0] sm:$0xff]
      %v1051 = vld [vmem:[#allocation3 + $0xf8] sm:$0xff]
      %v1052 = vld [vmem:[#allocation3 + $0x100] sm:$0xff]
      %v1053 = vld [vmem:[#allocation3 + $0x108] sm:$0xff]
      %v1054 = vld [vmem:[#allocation3 + $0x110] sm:$0xff]
      %v1055 = vld [vmem:[#allocation3 + $0x118] sm:$0xff]
      %v1056 = vld [vmem:[#allocation3 + $0x120] sm:$0xff]
      %v1057 = vld [vmem:[#allocation3 + $0x128] sm:$0xff]
      %v1058 = vld [vmem:[#allocation3 + $0x130] sm:$0xff]
      %v1059 = vld [vmem:[#allocation3 + $0x138] sm:$0xff]
      %v1060 = vld [vmem:[#allocation3 + $0x140] sm:$0xff]
      %v1061 = vld [vmem:[#allocation3 + $0x148] sm:$0xff]
      %v1062 = vld [vmem:[#allocation3 + $0x150] sm:$0xff]
      %v1063 = vld [vmem:[#allocation3 + $0x158] sm:$0xff]
      %v1064 = vld [vmem:[#allocation3 + $0x160] sm:$0xff]
      %v1065 = vld [vmem:[#allocation3 + $0x168] sm:$0xff]
      %v1066 = vld [vmem:[#allocation3 + $0x170] sm:$0xff]
      %v1067 = vld [vmem:[#allocation3 + $0x178] sm:$0xff]
      %v1068 = vld [vmem:[#allocation3 + $0x180] sm:$0xff]
      %v1069 = vld [vmem:[#allocation3 + $0x188] sm:$0xff]
      %v1070 = vld [vmem:[#allocation3 + $0x190] sm:$0xff]
      %v1071 = vld [vmem:[#allocation3 + $0x198] sm:$0xff]
      %v1072 = vld [vmem:[#allocation3 + $0x1a0] sm:$0xff]
      %v1073 = vld [vmem:[#allocation3 + $0x1a8] sm:$0xff]
      %v1074 = vld [vmem:[#allocation3 + $0x1b0] sm:$0xff]
      %v1075 = vld [vmem:[#allocation3 + $0x1b8] sm:$0xff]
      %v1076 = vld [vmem:[#allocation3 + $0x1c0] sm:$0xff]
      %v1077 = vld [vmem:[#allocation3 + $0x1c8] sm:$0xff]
      %v1078 = vld [vmem:[#allocation3 + $0x1d0] sm:$0xff]
      %v1079 = vld [vmem:[#allocation3 + $0x1d8] sm:$0xff]
      %v1080 = vld [vmem:[#allocation3 + $0x1e0] sm:$0xff]
      %v1081 = vld [vmem:[#allocation3 + $0x1e8] sm:$0xff]
      %v1082 = vld [vmem:[#allocation3 + $0x1f0] sm:$0xff]
      %v1083 = vld [vmem:[#allocation3 + $0x1f8] sm:$0xff]
      %v1084 = vld [vmem:[#allocation3 + $0x200] sm:$0xff]
      %v1085 = vld [vmem:[#allocation3 + $0x208] sm:$0xff]
      %v1086 = vld [vmem:[#allocation3 + $0x210] sm:$0xff]
      %v1087 = vld [vmem:[#allocation3 + $0x218] sm:$0xff]
      %v1088 = vld [vmem:[#allocation3 + $0x220] sm:$0xff]
      %v1089 = vld [vmem:[#allocation3 + $0x228] sm:$0xff]
      %v1090 = vld [vmem:[#allocation3 + $0x230] sm:$0xff]
      %v1091 = vld [vmem:[#allocation3 + $0x238] sm:$0xff]
      %v1092 = vld [vmem:[#allocation3 + $0x240] sm:$0xff]
      %v1093 = vld [vmem:[#allocation3 + $0x248] sm:$0xff]
      %v1094 = vld [vmem:[#allocation3 + $0x250] sm:$0xff]
      %v1095 = vld [vmem:[#allocation3 + $0x258] sm:$0xff]
      %v1096 = vld [vmem:[#allocation3 + $0x260] sm:$0xff]
      %v1097 = vld [vmem:[#allocation3 + $0x268] sm:$0xff]
      %v1098 = vld [vmem:[#allocation3 + $0x270] sm:$0xff]
      %v1099 = vld [vmem:[#allocation3 + $0x278] sm:$0xff]
      %v1100 = vld [vmem:[#allocation3 + $0x280] sm:$0xff]
      %v1101 = vld [vmem:[#allocation3 + $0x288] sm:$0xff]
      %v1102 = vld [vmem:[#allocation3 + $0x290] sm:$0xff]
      %v1103 = vld [vmem:[#allocation3 + $0x298] sm:$0xff]
      %v1104 = vld [vmem:[#allocation3 + $0x2a0] sm:$0xff]
      %v1105 = vld [vmem:[#allocation3 + $0x2a8] sm:$0xff]
      %v1106 = vld [vmem:[#allocation3 + $0x2b0] sm:$0xff]
      %v1107 = vld [vmem:[#allocation3 + $0x2b8] sm:$0xff]
      %v1108 = vld [vmem:[#allocation3 + $0x2c0] sm:$0xff]
      %v1109 = vld [vmem:[#allocation3 + $0x2c8] sm:$0xff]
      %v1110 = vld [vmem:[#allocation3 + $0x2d0] sm:$0xff]
      %v1111 = vld [vmem:[#allocation3 + $0x2d8] sm:$0xff]
      %v1112 = vld [vmem:[#allocation3 + $0x2e0] sm:$0xff]
      %v1113 = vld [vmem:[#allocation3 + $0x2e8] sm:$0xff]
      %v1114 = vld [vmem:[#allocation3 + $0x2f0] sm:$0xff]
      %v1115 = vld [vmem:[#allocation3 + $0x2f8] sm:$0xff]
      %v1116 = vld [vmem:[%s3] sm:$0xff]
      %v1117 = vld [vmem:[%s3 + $0x8] sm:$0xff]
      %v1118 = vld [vmem:[%s3 + $0x10] sm:$0xff]
      %v1119 = vld [vmem:[%s3 + $0x18] sm:$0xff]
      %v1120 = vld [vmem:[%s3 + $0x20] sm:$0xff]
      %v1121 = vld [vmem:[%s3 + $0x28] sm:$0xff]
      %v1122 = vld [vmem:[%s3 + $0x30] sm:$0xff]
      %v1123 = vld [vmem:[%s3 + $0x38] sm:$0xff]
      %v1124 = vld [vmem:[%s3 + $0x40] sm:$0xff]
      %v1125 = vld [vmem:[%s3 + $0x48] sm:$0xff]
      %v1126 = vld [vmem:[%s3 + $0x50] sm:$0xff]
      %v1127 = vld [vmem:[%s3 + $0x58] sm:$0xff]
      %v1128 = vld [vmem:[%s3 + $0x60] sm:$0xff]
      %v1129 = vld [vmem:[%s3 + $0x68] sm:$0xff]
      %v1130 = vld [vmem:[%s3 + $0x70] sm:$0xff]
      %v1131 = vld [vmem:[%s3 + $0x78] sm:$0xff]
      %v1132 = vld [vmem:[%s3 + $0x80] sm:$0xff]
      %v1133 = vld [vmem:[%s3 + $0x88] sm:$0xff]
      %v1134 = vld [vmem:[%s3 + $0x90] sm:$0xff]
      %v1135 = vld [vmem:[%s3 + $0x98] sm:$0xff]
      %v1136 = vld [vmem:[%s3 + $0xa0] sm:$0xff]
      %v1137 = vld [vmem:[%s3 + $0xa8] sm:$0xff]
      %v1138 = vld [vmem:[%s3 + $0xb0] sm:$0xff]
      %v1139 = vld [vmem:[%s3 + $0xb8] sm:$0xff]
      %v1140 = vld [vmem:[%s3 + $0xc0] sm:$0xff]
      %v1141 = vld [vmem:[%s3 + $0xc8] sm:$0xff]
      %v1142 = vld [vmem:[%s3 + $0xd0] sm:$0xff]
      %v1143 = vld [vmem:[%s3 + $0xd8] sm:$0xff]
      %v1144 = vld [vmem:[%s3 + $0xe0] sm:$0xff]
      %v1145 = vld [vmem:[%s3 + $0xe8] sm:$0xff]
      %v1146 = vld [vmem:[%s3 + $0xf0] sm:$0xff]
      %v1147 = vld [vmem:[%s3 + $0xf8] sm:$0xff]
      %v1148 = vld [vmem:[%s3 + $0x100] sm:$0xff]
      %v1149 = vld [vmem:[%s3 + $0x108] sm:$0xff]
      %v1150 = vld [vmem:[%s3 + $0x110] sm:$0xff]
      %v1151 = vld [vmem:[%s3 + $0x118] sm:$0xff]
      %v1152 = vld [vmem:[%s3 + $0x120] sm:$0xff]
      %v1153 = vld [vmem:[%s3 + $0x128] sm:$0xff]
      %v1154 = vld [vmem:[%s3 + $0x130] sm:$0xff]
      %v1155 = vld [vmem:[%s3 + $0x138] sm:$0xff]
      %v1156 = vld [vmem:[%s3 + $0x140] sm:$0xff]
      %v1157 = vld [vmem:[%s3 + $0x148] sm:$0xff]
      %v1158 = vld [vmem:[%s3 + $0x150] sm:$0xff]
      %v1159 = vld [vmem:[%s3 + $0x158] sm:$0xff]
      %v1160 = vld [vmem:[%s3 + $0x160] sm:$0xff]
      %v1161 = vld [vmem:[%s3 + $0x168] sm:$0xff]
      %v1162 = vld [vmem:[%s3 + $0x170] sm:$0xff]
      %v1163 = vld [vmem:[%s3 + $0x178] sm:$0xff]
      %s1164 = scalar_lea.vmem [#allocation3], 48
      %v1165 = vld [vmem:[%s1164] sm:$0xff]
      %v1166 = vld [vmem:[%s1164 + $0x8] sm:$0xff]
      %v1167 = vld [vmem:[%s1164 + $0x10] sm:$0xff]
      %v1168 = vld [vmem:[%s1164 + $0x18] sm:$0xff]
      %v1169 = vld [vmem:[%s1164 + $0x20] sm:$0xff]
      %v1170 = vld [vmem:[%s1164 + $0x28] sm:$0xff]
      %v1171 = vld [vmem:[%s1164 + $0x30] sm:$0xff]
      %v1172 = vld [vmem:[%s1164 + $0x38] sm:$0xff]
      %v1173 = vld [vmem:[%s1164 + $0x40] sm:$0xff]
      %v1174 = vld [vmem:[%s1164 + $0x48] sm:$0xff]
      %v1175 = vld [vmem:[%s1164 + $0x50] sm:$0xff]
      %v1176 = vld [vmem:[%s1164 + $0x58] sm:$0xff]
      %v1177 = vld [vmem:[%s1164 + $0x60] sm:$0xff]
      %v1178 = vld [vmem:[%s1164 + $0x68] sm:$0xff]
      %v1179 = vld [vmem:[%s1164 + $0x70] sm:$0xff]
      %v1180 = vld [vmem:[%s1164 + $0x78] sm:$0xff]
      %v1181 = vld [vmem:[%s1164 + $0x80] sm:$0xff]
      %v1182 = vld [vmem:[%s1164 + $0x88] sm:$0xff]
      %v1183 = vld [vmem:[%s1164 + $0x90] sm:$0xff]
      %v1184 = vld [vmem:[%s1164 + $0x98] sm:$0xff]
      %v1185 = vld [vmem:[%s1164 + $0xa0] sm:$0xff]
      %v1186 = vld [vmem:[%s1164 + $0xa8] sm:$0xff]
      %v1187 = vld [vmem:[%s1164 + $0xb0] sm:$0xff]
      %v1188 = vld [vmem:[%s1164 + $0xb8] sm:$0xff]
      %v1189 = vld [vmem:[%s1164 + $0xc0] sm:$0xff]
      %v1190 = vld [vmem:[%s1164 + $0xc8] sm:$0xff]
      %v1191 = vld [vmem:[%s1164 + $0xd0] sm:$0xff]
      %v1192 = vld [vmem:[%s1164 + $0xd8] sm:$0xff]
      %v1193 = vld [vmem:[%s1164 + $0xe0] sm:$0xff]
      %v1194 = vld [vmem:[%s1164 + $0xe8] sm:$0xff]
      %v1195 = vld [vmem:[%s1164 + $0xf0] sm:$0xff]
      %v1196 = vld [vmem:[%s1164 + $0xf8] sm:$0xff]
      %v1197 = vld [vmem:[%s1164 + $0x100] sm:$0xff]
      %v1198 = vld [vmem:[%s1164 + $0x108] sm:$0xff]
      %v1199 = vld [vmem:[%s1164 + $0x110] sm:$0xff]
      %v1200 = vld [vmem:[%s1164 + $0x118] sm:$0xff]
      %v1201 = vld [vmem:[%s1164 + $0x120] sm:$0xff]
      %v1202 = vld [vmem:[%s1164 + $0x128] sm:$0xff]
      %v1203 = vld [vmem:[%s1164 + $0x130] sm:$0xff]
      %v1204 = vld [vmem:[%s1164 + $0x138] sm:$0xff]
      %v1205 = vld [vmem:[%s1164 + $0x140] sm:$0xff]
      %v1206 = vld [vmem:[%s1164 + $0x148] sm:$0xff]
      %v1207 = vld [vmem:[%s1164 + $0x150] sm:$0xff]
      %v1208 = vld [vmem:[%s1164 + $0x158] sm:$0xff]
      %v1209 = vld [vmem:[%s1164 + $0x160] sm:$0xff]
      %v1210 = vld [vmem:[%s1164 + $0x168] sm:$0xff]
      %v1211 = vld [vmem:[%s1164 + $0x170] sm:$0xff]
      %v1212 = vld [vmem:[%s1164 + $0x178] sm:$0xff]
      %v1213 = vld [vmem:[%s1164 + $0x180] sm:$0xff]
      %v1214 = vld [vmem:[%s1164 + $0x188] sm:$0xff]
      %v1215 = vld [vmem:[%s1164 + $0x190] sm:$0xff]
      %v1216 = vld [vmem:[%s1164 + $0x198] sm:$0xff]
      %v1217 = vld [vmem:[%s1164 + $0x1a0] sm:$0xff]
      %v1218 = vld [vmem:[%s1164 + $0x1a8] sm:$0xff]
      %v1219 = vld [vmem:[%s1164 + $0x1b0] sm:$0xff]
      %v1220 = vld [vmem:[%s1164 + $0x1b8] sm:$0xff]
      %v1221 = vld [vmem:[%s1164 + $0x1c0] sm:$0xff]
      %v1222 = vld [vmem:[%s1164 + $0x1c8] sm:$0xff]
      %v1223 = vld [vmem:[%s1164 + $0x1d0] sm:$0xff]
      %v1224 = vld [vmem:[%s1164 + $0x1d8] sm:$0xff]
      %v1225 = vld [vmem:[%s1164 + $0x1e0] sm:$0xff]
      %v1226 = vld [vmem:[%s1164 + $0x1e8] sm:$0xff]
      %v1227 = vld [vmem:[%s1164 + $0x1f0] sm:$0xff]
      %v1228 = vld [vmem:[%s1164 + $0x1f8] sm:$0xff]
      %v1229 = vld [vmem:[%s1164 + $0x200] sm:$0xff]
      %v1230 = vld [vmem:[%s1164 + $0x208] sm:$0xff]
      %v1231 = vld [vmem:[%s1164 + $0x210] sm:$0xff]
      %v1232 = vld [vmem:[%s1164 + $0x218] sm:$0xff]
      %v1233 = vld [vmem:[%s1164 + $0x220] sm:$0xff]
      %v1234 = vld [vmem:[%s1164 + $0x228] sm:$0xff]
      %v1235 = vld [vmem:[%s1164 + $0x230] sm:$0xff]
      %v1236 = vld [vmem:[%s1164 + $0x238] sm:$0xff]
      %v1237 = vld [vmem:[%s1164 + $0x240] sm:$0xff]
      %v1238 = vld [vmem:[%s1164 + $0x248] sm:$0xff]
      %v1239 = vld [vmem:[%s1164 + $0x250] sm:$0xff]
      %v1240 = vld [vmem:[%s1164 + $0x258] sm:$0xff]
      %v1241 = vld [vmem:[%s1164 + $0x260] sm:$0xff]
      %v1242 = vld [vmem:[%s1164 + $0x268] sm:$0xff]
      %v1243 = vld [vmem:[%s1164 + $0x270] sm:$0xff]
      %v1244 = vld [vmem:[%s1164 + $0x278] sm:$0xff]
      %v1245 = vld [vmem:[%s1164 + $0x280] sm:$0xff]
      %v1246 = vld [vmem:[%s1164 + $0x288] sm:$0xff]
      %v1247 = vld [vmem:[%s1164 + $0x290] sm:$0xff]
      %v1248 = vld [vmem:[%s1164 + $0x298] sm:$0xff]
      %v1249 = vld [vmem:[%s1164 + $0x2a0] sm:$0xff]
      %v1250 = vld [vmem:[%s1164 + $0x2a8] sm:$0xff]
      %v1251 = vld [vmem:[%s1164 + $0x2b0] sm:$0xff]
      %v1252 = vld [vmem:[%s1164 + $0x2b8] sm:$0xff]
      %v1253 = vld [vmem:[%s1164 + $0x2c0] sm:$0xff]
      %v1254 = vld [vmem:[%s1164 + $0x2c8] sm:$0xff]
      %v1255 = vld [vmem:[%s1164 + $0x2d0] sm:$0xff]
      %v1256 = vld [vmem:[%s1164 + $0x2d8] sm:$0xff]
      %v1257 = vld [vmem:[%s1164 + $0x2e0] sm:$0xff]
      %v1258 = vld [vmem:[%s1164 + $0x2e8] sm:$0xff]
      %v1259 = vld [vmem:[%s1164 + $0x2f0] sm:$0xff]
      %v1260 = vld [vmem:[%s1164 + $0x2f8] sm:$0xff]
      %s1261 = scalar_lea.vmem %s3, 384
      %v1262 = vld [vmem:[%s1261] sm:$0xff]
      %v1263 = vld [vmem:[%s1261 + $0x8] sm:$0xff]
      %v1264 = vld [vmem:[%s1261 + $0x10] sm:$0xff]
      %v1265 = vld [vmem:[%s1261 + $0x18] sm:$0xff]
      %v1266 = vld [vmem:[%s1261 + $0x20] sm:$0xff]
      %v1267 = vld [vmem:[%s1261 + $0x28] sm:$0xff]
      %v1268 = vld [vmem:[%s1261 + $0x30] sm:$0xff]
      %v1269 = vld [vmem:[%s1261 + $0x38] sm:$0xff]
      %v1270 = vld [vmem:[%s1261 + $0x40] sm:$0xff]
      %v1271 = vld [vmem:[%s1261 + $0x48] sm:$0xff]
      %v1272 = vld [vmem:[%s1261 + $0x50] sm:$0xff]
      %v1273 = vld [vmem:[%s1261 + $0x58] sm:$0xff]
      %v1274 = vld [vmem:[%s1261 + $0x60] sm:$0xff]
      %v1275 = vld [vmem:[%s1261 + $0x68] sm:$0xff]
      %v1276 = vld [vmem:[%s1261 + $0x70] sm:$0xff]
      %v1277 = vld [vmem:[%s1261 + $0x78] sm:$0xff]
      %v1278 = vld [vmem:[%s1261 + $0x80] sm:$0xff]
      %v1279 = vld [vmem:[%s1261 + $0x88] sm:$0xff]
      %v1280 = vld [vmem:[%s1261 + $0x90] sm:$0xff]
      %v1281 = vld [vmem:[%s1261 + $0x98] sm:$0xff]
      %v1282 = vld [vmem:[%s1261 + $0xa0] sm:$0xff]
      %v1283 = vld [vmem:[%s1261 + $0xa8] sm:$0xff]
      %v1284 = vld [vmem:[%s1261 + $0xb0] sm:$0xff]
      %v1285 = vld [vmem:[%s1261 + $0xb8] sm:$0xff]
      %v1286 = vld [vmem:[%s1261 + $0xc0] sm:$0xff]
      %v1287 = vld [vmem:[%s1261 + $0xc8] sm:$0xff]
      %v1288 = vld [vmem:[%s1261 + $0xd0] sm:$0xff]
      %v1289 = vld [vmem:[%s1261 + $0xd8] sm:$0xff]
      %v1290 = vld [vmem:[%s1261 + $0xe0] sm:$0xff]
      %v1291 = vld [vmem:[%s1261 + $0xe8] sm:$0xff]
      %v1292 = vld [vmem:[%s1261 + $0xf0] sm:$0xff]
      %v1293 = vld [vmem:[%s1261 + $0xf8] sm:$0xff]
      %v1294 = vld [vmem:[%s1261 + $0x100] sm:$0xff]
      %v1295 = vld [vmem:[%s1261 + $0x108] sm:$0xff]
      %v1296 = vld [vmem:[%s1261 + $0x110] sm:$0xff]
      %v1297 = vld [vmem:[%s1261 + $0x118] sm:$0xff]
      %v1298 = vld [vmem:[%s1261 + $0x120] sm:$0xff]
      %v1299 = vld [vmem:[%s1261 + $0x128] sm:$0xff]
      %v1300 = vld [vmem:[%s1261 + $0x130] sm:$0xff]
      %v1301 = vld [vmem:[%s1261 + $0x138] sm:$0xff]
      %v1302 = vld [vmem:[%s1261 + $0x140] sm:$0xff]
      %v1303 = vld [vmem:[%s1261 + $0x148] sm:$0xff]
      %v1304 = vld [vmem:[%s1261 + $0x150] sm:$0xff]
      %v1305 = vld [vmem:[%s1261 + $0x158] sm:$0xff]
      %v1306 = vld [vmem:[%s1261 + $0x160] sm:$0xff]
      %v1307 = vld [vmem:[%s1261 + $0x168] sm:$0xff]
      %v1308 = vld [vmem:[%s1261 + $0x170] sm:$0xff]
      %v1309 = vld [vmem:[%s1261 + $0x178] sm:$0xff]
      %1310 = vmatprep.subr.mxu0 0.0
      %1311 = vmatpush1.msra.mxu0 %v1262
      %1312 = vmatprep.subr.mxu0 0.0
      %1313 = vmatpush1.msra.mxu0 %v1263
      %1314 = vmatprep.subr.mxu0 0.0
      %1315 = vmatpush1.msra.mxu0 %v1264
      %1316 = vmatprep.subr.mxu0 0.0
      %1317 = vmatpush1.msra.mxu0 %v1265
      %1318 = vmatprep.subr.mxu0 0.0
      %1319 = vmatpush1.msra.mxu0 %v1266
      %1320 = vmatprep.subr.mxu0 0.0
      %1321 = vmatpush1.msra.mxu0 %v1267
      %1322 = vmatprep.subr.mxu0 0.0
      %1323 = vmatpush1.msra.mxu0 %v1268
      %1324 = vmatprep.subr.mxu0 0.0
      %1325 = vmatpush1.msra.mxu0 %v1269
      %1326 = vmatprep.subr.mxu0 0.0
      %1327 = vmatpush1.msra.mxu0 %v1270
      %1328 = vmatprep.subr.mxu0 0.0
      %1329 = vmatpush1.msra.mxu0 %v1271
      %1330 = vmatprep.subr.mxu0 0.0
      %1331 = vmatpush1.msra.mxu0 %v1272
      %1332 = vmatprep.subr.mxu0 0.0
      %1333 = vmatpush1.msra.mxu0 %v1273
      %1334 = vmatprep.subr.mxu0 0.0
      %1335 = vmatpush1.msra.mxu0 %v1274
      %1336 = vmatprep.subr.mxu0 0.0
      %1337 = vmatpush1.msra.mxu0 %v1275
      %1338 = vmatprep.subr.mxu0 0.0
      %1339 = vmatpush1.msra.mxu0 %v1276
      %1340 = vmatprep.subr.mxu0 0.0
      %1341 = vmatpush1.msra.mxu0 %v1277
      %1342 = vmatprep.subr.mxu0 0.0
      %1343 = vmatpush1.msra.mxu0 %v1278
      %1344 = vmatprep.subr.mxu0 0.0
      %1345 = vmatpush1.msra.mxu0 %v1279
      %1346 = vmatprep.subr.mxu0 0.0
      %1347 = vmatpush1.msra.mxu0 %v1280
      %1348 = vmatprep.subr.mxu0 0.0
      %1349 = vmatpush1.msra.mxu0 %v1281
      %1350 = vmatprep.subr.mxu0 0.0
      %1351 = vmatpush1.msra.mxu0 %v1282
      %1352 = vmatprep.subr.mxu0 0.0
      %1353 = vmatpush1.msra.mxu0 %v1283
      %1354 = vmatprep.subr.mxu0 0.0
      %1355 = vmatpush1.msra.mxu0 %v1284
      %1356 = vmatprep.subr.mxu0 0.0
      %1357 = vmatpush1.msra.mxu0 %v1285
      %1358 = vmatprep.subr.mxu0 0.0
      %1359 = vmatpush1.msra.mxu0 %v1286
      %1360 = vmatprep.subr.mxu0 0.0
      %1361 = vmatpush1.msra.mxu0 %v1287
      %1362 = vmatprep.subr.mxu0 0.0
      %1363 = vmatpush1.msra.mxu0 %v1288
      %1364 = vmatprep.subr.mxu0 0.0
      %1365 = vmatpush1.msra.mxu0 %v1289
      %1366 = vmatprep.subr.mxu0 0.0
      %1367 = vmatpush1.msra.mxu0 %v1290
      %1368 = vmatprep.subr.mxu0 0.0
      %1369 = vmatpush1.msra.mxu0 %v1291
      %1370 = vmatprep.subr.mxu0 0.0
      %1371 = vmatpush1.msra.mxu0 %v1292
      %1372 = vmatprep.subr.mxu0 0.0
      %1373 = vmatpush1.msra.mxu0 %v1293
      %1374 = vmatprep.mubr.f32.mxu0 %v1166
      %1375 = vmatmul.mubr.f32.gmra.mrb[0].mxu0 %v1165
      %v1376 = vpop.f32.mrb[0].mxu0
      %v1377 = vadd.f32 0.0, %v1376
      %v1378 = vpop.f32.mrb[0].mxu0
      %1379 = vmatprep.mubr.f32.mxu0 %v1169
      %1380 = vmatmul.mubr.f32.gmra.mrb[0].mxu0 %v1168
      %v1381 = vpop.f32.mrb[0].mxu0
      %v1382 = vadd.f32 0.0, %v1381
      %v1383 = vpop.f32.mrb[0].mxu0
      %1384 = vmatprep.mubr.f32.mxu0 %v1172
      %1385 = vmatmul.mubr.f32.gmra.mrb[0].mxu0 %v1171
      %v1386 = vpop.f32.mrb[0].mxu0
      %v1387 = vadd.f32 0.0, %v1386
      %v1388 = vpop.f32.mrb[0].mxu0
      %1389 = vmatprep.mubr.f32.mxu0 %v1175
      %1390 = vmatmul.mubr.f32.gmra.mrb[0].mxu0 %v1174
      %v1391 = vpop.f32.mrb[0].mxu0
      %v1392 = vadd.f32 0.0, %v1391
      %v1393 = vpop.f32.mrb[0].mxu0
      %1394 = vmatprep.mubr.f32.mxu0 %v1178
      %1395 = vmatmul.mubr.f32.gmra.mrb[0].mxu0 %v1177
      %v1396 = vpop.f32.mrb[0].mxu0
      %v1397 = vadd.f32 0.0, %v1396
      %v1398 = vpop.f32.mrb[0].mxu0
      %1399 = vmatprep.mubr.f32.mxu0 %v1181
      %1400 = vmatmul.mubr.f32.gmra.mrb[0].mxu0 %v1180
      %v1401 = vpop.f32.mrb[0].mxu0
      %v1402 = vadd.f32 0.0, %v1401
      %v1403 = vpop.f32.mrb[0].mxu0
      %1404 = vmatprep.mubr.f32.mxu0 %v1184
      %1405 = vmatmul.mubr.f32.gmra.mrb[0].mxu0 %v1183
      %v1406 = vpop.f32.mrb[0].mxu0
      %v1407 = vadd.f32 0.0, %v1406
      %v1408 = vpop.f32.mrb[0].mxu0
      %1409 = vmatprep.mubr.f32.mxu0 %v1187
      %1410 = vmatmul.mubr.f32.gmra.mrb[0].mxu0 %v1186
      %v1411 = vpop.f32.mrb[0].mxu0
      %v1412 = vadd.f32 0.0, %v1411
      %v1413 = vpop.f32.mrb[0].mxu0
      %1414 = vmatprep.mubr.f32.mxu0 %v1190
      %1415 = vmatmul.mubr.f32.gmra.mrb[0].mxu0 %v1189
      %v1416 = vpop.f32.mrb[0].mxu0
      %v1417 = vadd.f32 0.0, %v1416
      %v1418 = vpop.f32.mrb[0].mxu0
      %1419 = vmatprep.mubr.f32.mxu0 %v1193
      %1420 = vmatmul.mubr.f32.gmra.mrb[0].mxu0 %v1192
      %v1421 = vpop.f32.mrb[0].mxu0
      %v1422 = vadd.f32 0.0, %v1421
      %v1423 = vpop.f32.mrb[0].mxu0
      %1424 = vmatprep.mubr.f32.mxu0 %v1196
      %1425 = vmatmul.mubr.f32.gmra.mrb[0].mxu0 %v1195
      %v1426 = vpop.f32.mrb[0].mxu0
      %v1427 = vadd.f32 0.0, %v1426
      %v1428 = vpop.f32.mrb[0].mxu0
      %1429 = vmatprep.mubr.f32.mxu0 %v1199
      %1430 = vmatmul.mubr.f32.gmra.mrb[0].mxu0 %v1198
      %v1431 = vpop.f32.mrb[0].mxu0
      %v1432 = vadd.f32 0.0, %v1431
      %v1433 = vpop.f32.mrb[0].mxu0
      %1434 = vmatprep.mubr.f32.mxu0 %v1202
      %1435 = vmatmul.mubr.f32.gmra.mrb[0].mxu0 %v1201
      %v1436 = vpop.f32.mrb[0].mxu0
      %v1437 = vadd.f32 0.0, %v1436
      %v1438 = vpop.f32.mrb[0].mxu0
      %1439 = vmatprep.mubr.f32.mxu0 %v1205
      %1440 = vmatmul.mubr.f32.gmra.mrb[0].mxu0 %v1204
      %v1441 = vpop.f32.mrb[0].mxu0
      %v1442 = vadd.f32 0.0, %v1441
      %v1443 = vpop.f32.mrb[0].mxu0
      %1444 = vmatprep.mubr.f32.mxu0 %v1208
      %1445 = vmatmul.mubr.f32.gmra.mrb[0].mxu0 %v1207
      %v1446 = vpop.f32.mrb[0].mxu0
      %v1447 = vadd.f32 0.0, %v1446
      %v1448 = vpop.f32.mrb[0].mxu0
      %1449 = vmatprep.mubr.f32.mxu0 %v1211
      %1450 = vmatmul.mubr.f32.gmra.mrb[0].mxu0 %v1210
      %v1451 = vpop.f32.mrb[0].mxu0
      %v1452 = vadd.f32 0.0, %v1451
      %v1453 = vpop.f32.mrb[0].mxu0
      %1454 = vmatprep.mubr.f32.mxu0 %v1214
      %1455 = vmatmul.mubr.f32.gmra.mrb[0].mxu0 %v1213
      %v1456 = vpop.f32.mrb[0].mxu0
      %v1457 = vadd.f32 0.0, %v1456
      %v1458 = vpop.f32.mrb[0].mxu0
      %1459 = vmatprep.mubr.f32.mxu0 %v1217
      %1460 = vmatmul.mubr.f32.gmra.mrb[0].mxu0 %v1216
      %v1461 = vpop.f32.mrb[0].mxu0
      %v1462 = vadd.f32 0.0, %v1461
      %v1463 = vpop.f32.mrb[0].mxu0
      %1464 = vmatprep.mubr.f32.mxu0 %v1220
      %1465 = vmatmul.mubr.f32.gmra.mrb[0].mxu0 %v1219
      %v1466 = vpop.f32.mrb[0].mxu0
      %v1467 = vadd.f32 0.0, %v1466
      %v1468 = vpop.f32.mrb[0].mxu0
      %1469 = vmatprep.mubr.f32.mxu0 %v1223
      %1470 = vmatmul.mubr.f32.gmra.mrb[0].mxu0 %v1222
      %v1471 = vpop.f32.mrb[0].mxu0
      %v1472 = vadd.f32 0.0, %v1471
      %v1473 = vpop.f32.mrb[0].mxu0
      %1474 = vmatprep.mubr.f32.mxu0 %v1226
      %1475 = vmatmul.mubr.f32.gmra.mrb[0].mxu0 %v1225
      %v1476 = vpop.f32.mrb[0].mxu0
      %v1477 = vadd.f32 0.0, %v1476
      %v1478 = vpop.f32.mrb[0].mxu0
      %1479 = vmatprep.mubr.f32.mxu0 %v1229
      %1480 = vmatmul.mubr.f32.gmra.mrb[0].mxu0 %v1228
      %v1481 = vpop.f32.mrb[0].mxu0
      %v1482 = vadd.f32 0.0, %v1481
      %v1483 = vpop.f32.mrb[0].mxu0
      %1484 = vmatprep.mubr.f32.mxu0 %v1232
      %1485 = vmatmul.mubr.f32.gmra.mrb[0].mxu0 %v1231
      %v1486 = vpop.f32.mrb[0].mxu0
      %v1487 = vadd.f32 0.0, %v1486
      %v1488 = vpop.f32.mrb[0].mxu0
      %1489 = vmatprep.mubr.f32.mxu0 %v1235
      %1490 = vmatmul.mubr.f32.gmra.mrb[0].mxu0 %v1234
      %v1491 = vpop.f32.mrb[0].mxu0
      %v1492 = vadd.f32 0.0, %v1491
      %v1493 = vpop.f32.mrb[0].mxu0
      %1494 = vmatprep.mubr.f32.mxu0 %v1238
      %1495 = vmatmul.mubr.f32.gmra.mrb[0].mxu0 %v1237
      %v1496 = vpop.f32.mrb[0].mxu0
      %v1497 = vadd.f32 0.0, %v1496
      %v1498 = vpop.f32.mrb[0].mxu0
      %1499 = vmatprep.mubr.f32.mxu0 %v1241
      %1500 = vmatmul.mubr.f32.gmra.mrb[0].mxu0 %v1240
      %v1501 = vpop.f32.mrb[0].mxu0
      %v1502 = vadd.f32 0.0, %v1501
      %v1503 = vpop.f32.mrb[0].mxu0
      %1504 = vmatprep.mubr.f32.mxu0 %v1244
      %1505 = vmatmul.mubr.f32.gmra.mrb[0].mxu0 %v1243
      %v1506 = vpop.f32.mrb[0].mxu0
      %v1507 = vadd.f32 0.0, %v1506
      %v1508 = vpop.f32.mrb[0].mxu0
      %1509 = vmatprep.mubr.f32.mxu0 %v1247
      %1510 = vmatmul.mubr.f32.gmra.mrb[0].mxu0 %v1246
      %v1511 = vpop.f32.mrb[0].mxu0
      %v1512 = vadd.f32 0.0, %v1511
      %v1513 = vpop.f32.mrb[0].mxu0
      %1514 = vmatprep.mubr.f32.mxu0 %v1250
      %1515 = vmatmul.mubr.f32.gmra.mrb[0].mxu0 %v1249
      %v1516 = vpop.f32.mrb[0].mxu0
      %v1517 = vadd.f32 0.0, %v1516
      %v1518 = vpop.f32.mrb[0].mxu0
      %1519 = vmatprep.mubr.f32.mxu0 %v1253
      %1520 = vmatmul.mubr.f32.gmra.mrb[0].mxu0 %v1252
      %v1521 = vpop.f32.mrb[0].mxu0
      %v1522 = vadd.f32 0.0, %v1521
      %v1523 = vpop.f32.mrb[0].mxu0
      %1524 = vmatprep.mubr.f32.mxu0 %v1256
      %1525 = vmatmul.mubr.f32.gmra.mrb[0].mxu0 %v1255
      %v1526 = vpop.f32.mrb[0].mxu0
      %v1527 = vadd.f32 0.0, %v1526
      %v1528 = vpop.f32.mrb[0].mxu0
      %1529 = vmatprep.mubr.f32.mxu0 %v1259
      %1530 = vmatmul.mubr.f32.gmra.mrb[0].mxu0 %v1258
      %v1531 = vpop.f32.mrb[0].mxu0
      %v1532 = vadd.f32 0.0, %v1531
      %v1533 = vpop.f32.mrb[0].mxu0
      %1534 = vdwg.mxu0
      %1535 = vmatprep.subr.mxu0 0.0
      %1536 = vmatpush1.msra.mxu0 %v1294
      %1537 = vmatprep.subr.mxu0 0.0
      %1538 = vmatpush1.msra.mxu0 %v1295
      %1539 = vmatprep.subr.mxu0 0.0
      %1540 = vmatpush1.msra.mxu0 %v1296
      %1541 = vmatprep.subr.mxu0 0.0
      %1542 = vmatpush1.msra.mxu0 %v1297
      %1543 = vmatprep.subr.mxu0 0.0
      %1544 = vmatpush1.msra.mxu0 %v1298
      %1545 = vmatprep.subr.mxu0 0.0
      %1546 = vmatpush1.msra.mxu0 %v1299
      %1547 = vmatprep.subr.mxu0 0.0
      %1548 = vmatpush1.msra.mxu0 %v1300
      %1549 = vmatprep.subr.mxu0 0.0
      %1550 = vmatpush1.msra.mxu0 %v1301
      %1551 = vmatprep.subr.mxu0 0.0
      %1552 = vmatpush1.msra.mxu0 %v1302
      %1553 = vmatprep.subr.mxu0 0.0
      %1554 = vmatpush1.msra.mxu0 %v1303
      %1555 = vmatprep.subr.mxu0 0.0
      %1556 = vmatpush1.msra.mxu0 %v1304
      %1557 = vmatprep.subr.mxu0 0.0
      %1558 = vmatpush1.msra.mxu0 %v1305
      %1559 = vmatprep.subr.mxu0 0.0
      %1560 = vmatpush1.msra.mxu0 %v1306
      %1561 = vmatprep.subr.mxu0 0.0
      %1562 = vmatpush1.msra.mxu0 %v1307
      %1563 = vmatprep.subr.mxu0 0.0
      %1564 = vmatpush1.msra.mxu0 %v1308
      %1565 = vmatprep.subr.mxu0 0.0
      %1566 = vmatpush1.msra.mxu0 %v1309
      %1567 = vmatprep.subr.mxu0 0.0
      %1568 = vmatpush1.msra.mxu0 0.0
      %1569 = vmatprep.subr.mxu0 0.0
      %1570 = vmatpush1.msra.mxu0 0.0
      %1571 = vmatprep.subr.mxu0 0.0
      %1572 = vmatpush1.msra.mxu0 0.0
      %1573 = vmatprep.subr.mxu0 0.0
      %1574 = vmatpush1.msra.mxu0 0.0
      %1575 = vmatprep.subr.mxu0 0.0
      %1576 = vmatpush1.msra.mxu0 0.0
      %1577 = vmatprep.subr.mxu0 0.0
      %1578 = vmatpush1.msra.mxu0 0.0
      %1579 = vmatprep.subr.mxu0 0.0
      %1580 = vmatpush1.msra.mxu0 0.0
      %1581 = vmatprep.subr.mxu0 0.0
      %1582 = vmatpush1.msra.mxu0 0.0
      %1583 = vmatprep.subr.mxu0 0.0
      %1584 = vmatpush1.msra.mxu0 0.0
      %1585 = vmatprep.subr.mxu0 0.0
      %1586 = vmatpush1.msra.mxu0 0.0
      %1587 = vmatprep.subr.mxu0 0.0
      %1588 = vmatpush1.msra.mxu0 0.0
      %1589 = vmatprep.subr.mxu0 0.0
      %1590 = vmatpush1.msra.mxu0 0.0
      %1591 = vmatprep.subr.mxu0 0.0
      %1592 = vmatpush1.msra.mxu0 0.0
      %1593 = vmatprep.subr.mxu0 0.0
      %1594 = vmatpush1.msra.mxu0 0.0
      %1595 = vmatprep.subr.mxu0 0.0
      %1596 = vmatpush1.msra.mxu0 0.0
      %1597 = vmatprep.subr.mxu0 0.0
      %1598 = vmatpush1.msra.mxu0 0.0
      %1599 = vmatprep.mubr.f32.mxu0 0.0
      %1600 = vmatmul.mubr.f32.gmra.mrb[0].mxu0 %v1167
      %v1601 = vpop.f32.mrb[0].mxu0
      %v1602 = vadd.f32 %v1377, %v1601
      %v1603 = vpop.f32.mrb[0].mxu0
      %1604 = vmatprep.mubr.f32.mxu0 0.0
      %1605 = vmatmul.mubr.f32.gmra.mrb[0].mxu0 %v1170
      %v1606 = vpop.f32.mrb[0].mxu0
      %v1607 = vadd.f32 %v1382, %v1606
      %v1608 = vpop.f32.mrb[0].mxu0
      %1609 = vmatprep.mubr.f32.mxu0 0.0
      %1610 = vmatmul.mubr.f32.gmra.mrb[0].mxu0 %v1173
      %v1611 = vpop.f32.mrb[0].mxu0
      %v1612 = vadd.f32 %v1387, %v1611
      %v1613 = vpop.f32.mrb[0].mxu0
      %1614 = vmatprep.mubr.f32.mxu0 0.0
      %1615 = vmatmul.mubr.f32.gmra.mrb[0].mxu0 %v1176
      %v1616 = vpop.f32.mrb[0].mxu0
      %v1617 = vadd.f32 %v1392, %v1616
      %v1618 = vpop.f32.mrb[0].mxu0
      %1619 = vmatprep.mubr.f32.mxu0 0.0
      %1620 = vmatmul.mubr.f32.gmra.mrb[0].mxu0 %v1179
      %v1621 = vpop.f32.mrb[0].mxu0
      %v1622 = vadd.f32 %v1397, %v1621
      %v1623 = vpop.f32.mrb[0].mxu0
      %1624 = vmatprep.mubr.f32.mxu0 0.0
      %1625 = vmatmul.mubr.f32.gmra.mrb[0].mxu0 %v1182
      %v1626 = vpop.f32.mrb[0].mxu0
      %v1627 = vadd.f32 %v1402, %v1626
      %v1628 = vpop.f32.mrb[0].mxu0
      %1629 = vmatprep.mubr.f32.mxu0 0.0
      %1630 = vmatmul.mubr.f32.gmra.mrb[0].mxu0 %v1185
      %v1631 = vpop.f32.mrb[0].mxu0
      %v1632 = vadd.f32 %v1407, %v1631
      %v1633 = vpop.f32.mrb[0].mxu0
      %1634 = vmatprep.mubr.f32.mxu0 0.0
      %1635 = vmatmul.mubr.f32.gmra.mrb[0].mxu0 %v1188
      %v1636 = vpop.f32.mrb[0].mxu0
      %v1637 = vadd.f32 %v1412, %v1636
      %v1638 = vpop.f32.mrb[0].mxu0
      %1639 = vmatprep.mubr.f32.mxu0 0.0
      %1640 = vmatmul.mubr.f32.gmra.mrb[0].mxu0 %v1191
      %v1641 = vpop.f32.mrb[0].mxu0
      %v1642 = vadd.f32 %v1417, %v1641
      %v1643 = vpop.f32.mrb[0].mxu0
      %1644 = vmatprep.mubr.f32.mxu0 0.0
      %1645 = vmatmul.mubr.f32.gmra.mrb[0].mxu0 %v1194
      %v1646 = vpop.f32.mrb[0].mxu0
      %v1647 = vadd.f32 %v1422, %v1646
      %v1648 = vpop.f32.mrb[0].mxu0
      %1649 = vmatprep.mubr.f32.mxu0 0.0
      %1650 = vmatmul.mubr.f32.gmra.mrb[0].mxu0 %v1197
      %v1651 = vpop.f32.mrb[0].mxu0
      %v1652 = vadd.f32 %v1427, %v1651
      %v1653 = vpop.f32.mrb[0].mxu0
      %1654 = vmatprep.mubr.f32.mxu0 0.0
      %1655 = vmatmul.mubr.f32.gmra.mrb[0].mxu0 %v1200
      %v1656 = vpop.f32.mrb[0].mxu0
      %v1657 = vadd.f32 %v1432, %v1656
      %v1658 = vpop.f32.mrb[0].mxu0
      %1659 = vmatprep.mubr.f32.mxu0 0.0
      %1660 = vmatmul.mubr.f32.gmra.mrb[0].mxu0 %v1203
      %v1661 = vpop.f32.mrb[0].mxu0
      %v1662 = vadd.f32 %v1437, %v1661
      %v1663 = vpop.f32.mrb[0].mxu0
      %1664 = vmatprep.mubr.f32.mxu0 0.0
      %1665 = vmatmul.mubr.f32.gmra.mrb[0].mxu0 %v1206
      %v1666 = vpop.f32.mrb[0].mxu0
      %v1667 = vadd.f32 %v1442, %v1666
      %v1668 = vpop.f32.mrb[0].mxu0
      %1669 = vmatprep.mubr.f32.mxu0 0.0
      %1670 = vmatmul.mubr.f32.gmra.mrb[0].mxu0 %v1209
      %v1671 = vpop.f32.mrb[0].mxu0
      %v1672 = vadd.f32 %v1447, %v1671
      %v1673 = vpop.f32.mrb[0].mxu0
      %1674 = vmatprep.mubr.f32.mxu0 0.0
      %1675 = vmatmul.mubr.f32.gmra.mrb[0].mxu0 %v1212
      %v1676 = vpop.f32.mrb[0].mxu0
      %v1677 = vadd.f32 %v1452, %v1676
      %v1678 = vpop.f32.mrb[0].mxu0
      %1679 = vmatprep.mubr.f32.mxu0 0.0
      %1680 = vmatmul.mubr.f32.gmra.mrb[0].mxu0 %v1215
      %v1681 = vpop.f32.mrb[0].mxu0
      %v1682 = vadd.f32 %v1457, %v1681
      %v1683 = vpop.f32.mrb[0].mxu0
      %1684 = vmatprep.mubr.f32.mxu0 0.0
      %1685 = vmatmul.mubr.f32.gmra.mrb[0].mxu0 %v1218
      %v1686 = vpop.f32.mrb[0].mxu0
      %v1687 = vadd.f32 %v1462, %v1686
      %v1688 = vpop.f32.mrb[0].mxu0
      %1689 = vmatprep.mubr.f32.mxu0 0.0
      %1690 = vmatmul.mubr.f32.gmra.mrb[0].mxu0 %v1221
      %v1691 = vpop.f32.mrb[0].mxu0
      %v1692 = vadd.f32 %v1467, %v1691
      %v1693 = vpop.f32.mrb[0].mxu0
      %1694 = vmatprep.mubr.f32.mxu0 0.0
      %1695 = vmatmul.mubr.f32.gmra.mrb[0].mxu0 %v1224
      %v1696 = vpop.f32.mrb[0].mxu0
      %v1697 = vadd.f32 %v1472, %v1696
      %v1698 = vpop.f32.mrb[0].mxu0
      %1699 = vmatprep.mubr.f32.mxu0 0.0
      %1700 = vmatmul.mubr.f32.gmra.mrb[0].mxu0 %v1227
      %v1701 = vpop.f32.mrb[0].mxu0
      %v1702 = vadd.f32 %v1477, %v1701
      %v1703 = vpop.f32.mrb[0].mxu0
      %1704 = vmatprep.mubr.f32.mxu0 0.0
      %1705 = vmatmul.mubr.f32.gmra.mrb[0].mxu0 %v1230
      %v1706 = vpop.f32.mrb[0].mxu0
      %v1707 = vadd.f32 %v1482, %v1706
      %v1708 = vpop.f32.mrb[0].mxu0
      %1709 = vmatprep.mubr.f32.mxu0 0.0
      %1710 = vmatmul.mubr.f32.gmra.mrb[0].mxu0 %v1233
      %v1711 = vpop.f32.mrb[0].mxu0
      %v1712 = vadd.f32 %v1487, %v1711
      %v1713 = vpop.f32.mrb[0].mxu0
      %1714 = vmatprep.mubr.f32.mxu0 0.0
      %1715 = vmatmul.mubr.f32.gmra.mrb[0].mxu0 %v1236
      %v1716 = vpop.f32.mrb[0].mxu0
      %v1717 = vadd.f32 %v1492, %v1716
      %v1718 = vpop.f32.mrb[0].mxu0
      %1719 = vmatprep.mubr.f32.mxu0 0.0
      %1720 = vmatmul.mubr.f32.gmra.mrb[0].mxu0 %v1239
      %v1721 = vpop.f32.mrb[0].mxu0
      %v1722 = vadd.f32 %v1497, %v1721
      %v1723 = vpop.f32.mrb[0].mxu0
      %1724 = vmatprep.mubr.f32.mxu0 0.0
      %1725 = vmatmul.mubr.f32.gmra.mrb[0].mxu0 %v1242
      %v1726 = vpop.f32.mrb[0].mxu0
      %v1727 = vadd.f32 %v1502, %v1726
      %v1728 = vpop.f32.mrb[0].mxu0
      %1729 = vmatprep.mubr.f32.mxu0 0.0
      %1730 = vmatmul.mubr.f32.gmra.mrb[0].mxu0 %v1245
      %v1731 = vpop.f32.mrb[0].mxu0
      %v1732 = vadd.f32 %v1507, %v1731
      %v1733 = vpop.f32.mrb[0].mxu0
      %1734 = vmatprep.mubr.f32.mxu0 0.0
      %1735 = vmatmul.mubr.f32.gmra.mrb[0].mxu0 %v1248
      %v1736 = vpop.f32.mrb[0].mxu0
      %v1737 = vadd.f32 %v1512, %v1736
      %v1738 = vpop.f32.mrb[0].mxu0
      %1739 = vmatprep.mubr.f32.mxu0 0.0
      %1740 = vmatmul.mubr.f32.gmra.mrb[0].mxu0 %v1251
      %v1741 = vpop.f32.mrb[0].mxu0
      %v1742 = vadd.f32 %v1517, %v1741
      %v1743 = vpop.f32.mrb[0].mxu0
      %1744 = vmatprep.mubr.f32.mxu0 0.0
      %1745 = vmatmul.mubr.f32.gmra.mrb[0].mxu0 %v1254
      %v1746 = vpop.f32.mrb[0].mxu0
      %v1747 = vadd.f32 %v1522, %v1746
      %v1748 = vpop.f32.mrb[0].mxu0
      %1749 = vmatprep.mubr.f32.mxu0 0.0
      %1750 = vmatmul.mubr.f32.gmra.mrb[0].mxu0 %v1257
      %v1751 = vpop.f32.mrb[0].mxu0
      %v1752 = vadd.f32 %v1527, %v1751
      %v1753 = vpop.f32.mrb[0].mxu0
      %1754 = vmatprep.mubr.f32.mxu0 0.0
      %1755 = vmatmul.mubr.f32.gmra.mrb[0].mxu0 %v1260
      %v1756 = vpop.f32.mrb[0].mxu0
      %v1757 = vadd.f32 %v1532, %v1756
      %v1758 = vpop.f32.mrb[0].mxu0
      %1759 = vdwg.mxu0
      %1760 = vmatprep.subr.mxu0 0.0
      %1761 = vmatpush1.msra.mxu0 %v1116
      %1762 = vmatprep.subr.mxu0 0.0
      %1763 = vmatpush1.msra.mxu0 %v1117
      %1764 = vmatprep.subr.mxu0 0.0
      %1765 = vmatpush1.msra.mxu0 %v1118
      %1766 = vmatprep.subr.mxu0 0.0
      %1767 = vmatpush1.msra.mxu0 %v1119
      %1768 = vmatprep.subr.mxu0 0.0
      %1769 = vmatpush1.msra.mxu0 %v1120
      %1770 = vmatprep.subr.mxu0 0.0
      %1771 = vmatpush1.msra.mxu0 %v1121
      %1772 = vmatprep.subr.mxu0 0.0
      %1773 = vmatpush1.msra.mxu0 %v1122
      %1774 = vmatprep.subr.mxu0 0.0
      %1775 = vmatpush1.msra.mxu0 %v1123
      %1776 = vmatprep.subr.mxu0 0.0
      %1777 = vmatpush1.msra.mxu0 %v1124
      %1778 = vmatprep.subr.mxu0 0.0
      %1779 = vmatpush1.msra.mxu0 %v1125
      %1780 = vmatprep.subr.mxu0 0.0
      %1781 = vmatpush1.msra.mxu0 %v1126
      %1782 = vmatprep.subr.mxu0 0.0
      %1783 = vmatpush1.msra.mxu0 %v1127
      %1784 = vmatprep.subr.mxu0 0.0
      %1785 = vmatpush1.msra.mxu0 %v1128
      %1786 = vmatprep.subr.mxu0 0.0
      %1787 = vmatpush1.msra.mxu0 %v1129
      %1788 = vmatprep.subr.mxu0 0.0
      %1789 = vmatpush1.msra.mxu0 %v1130
      %1790 = vmatprep.subr.mxu0 0.0
      %1791 = vmatpush1.msra.mxu0 %v1131
      %1792 = vmatprep.subr.mxu0 0.0
      %1793 = vmatpush1.msra.mxu0 %v1132
      %1794 = vmatprep.subr.mxu0 0.0
      %1795 = vmatpush1.msra.mxu0 %v1133
      %1796 = vmatprep.subr.mxu0 0.0
      %1797 = vmatpush1.msra.mxu0 %v1134
      %1798 = vmatprep.subr.mxu0 0.0
      %1799 = vmatpush1.msra.mxu0 %v1135
      %1800 = vmatprep.subr.mxu0 0.0
      %1801 = vmatpush1.msra.mxu0 %v1136
      %1802 = vmatprep.subr.mxu0 0.0
      %1803 = vmatpush1.msra.mxu0 %v1137
      %1804 = vmatprep.subr.mxu0 0.0
      %1805 = vmatpush1.msra.mxu0 %v1138
      %1806 = vmatprep.subr.mxu0 0.0
      %1807 = vmatpush1.msra.mxu0 %v1139
      %1808 = vmatprep.subr.mxu0 0.0
      %1809 = vmatpush1.msra.mxu0 %v1140
      %1810 = vmatprep.subr.mxu0 0.0
      %1811 = vmatpush1.msra.mxu0 %v1141
      %1812 = vmatprep.subr.mxu0 0.0
      %1813 = vmatpush1.msra.mxu0 %v1142
      %1814 = vmatprep.subr.mxu0 0.0
      %1815 = vmatpush1.msra.mxu0 %v1143
      %1816 = vmatprep.subr.mxu0 0.0
      %1817 = vmatpush1.msra.mxu0 %v1144
      %1818 = vmatprep.subr.mxu0 0.0
      %1819 = vmatpush1.msra.mxu0 %v1145
      %1820 = vmatprep.subr.mxu0 0.0
      %1821 = vmatpush1.msra.mxu0 %v1146
      %1822 = vmatprep.subr.mxu0 0.0
      %1823 = vmatpush1.msra.mxu0 %v1147
      %1824 = vmatprep.mubr.f32.mxu0 %v1021
      %1825 = vmatmul.mubr.f32.gmra.mrb[0].mxu0 %v1020
      %v1826 = vpop.f32.mrb[0].mxu0
      %v1827 = vadd.f32 %v1602, %v1826
      %v1828 = vpop.f32.mrb[0].mxu0
      %1829 = vmatprep.mubr.f32.mxu0 %v1024
      %1830 = vmatmul.mubr.f32.gmra.mrb[0].mxu0 %v1023
      %v1831 = vpop.f32.mrb[0].mxu0
      %v1832 = vadd.f32 %v1607, %v1831
      %v1833 = vpop.f32.mrb[0].mxu0
      %1834 = vmatprep.mubr.f32.mxu0 %v1027
      %1835 = vmatmul.mubr.f32.gmra.mrb[0].mxu0 %v1026
      %v1836 = vpop.f32.mrb[0].mxu0
      %v1837 = vadd.f32 %v1612, %v1836
      %v1838 = vpop.f32.mrb[0].mxu0
      %1839 = vmatprep.mubr.f32.mxu0 %v1030
      %1840 = vmatmul.mubr.f32.gmra.mrb[0].mxu0 %v1029
      %v1841 = vpop.f32.mrb[0].mxu0
      %v1842 = vadd.f32 %v1617, %v1841
      %v1843 = vpop.f32.mrb[0].mxu0
      %1844 = vmatprep.mubr.f32.mxu0 %v1033
      %1845 = vmatmul.mubr.f32.gmra.mrb[0].mxu0 %v1032
      %v1846 = vpop.f32.mrb[0].mxu0
      %v1847 = vadd.f32 %v1622, %v1846
      %v1848 = vpop.f32.mrb[0].mxu0
      %1849 = vmatprep.mubr.f32.mxu0 %v1036
      %1850 = vmatmul.mubr.f32.gmra.mrb[0].mxu0 %v1035
      %v1851 = vpop.f32.mrb[0].mxu0
      %v1852 = vadd.f32 %v1627, %v1851
      %v1853 = vpop.f32.mrb[0].mxu0
      %1854 = vmatprep.mubr.f32.mxu0 %v1039
      %1855 = vmatmul.mubr.f32.gmra.mrb[0].mxu0 %v1038
      %v1856 = vpop.f32.mrb[0].mxu0
      %v1857 = vadd.f32 %v1632, %v1856
      %v1858 = vpop.f32.mrb[0].mxu0
      %1859 = vmatprep.mubr.f32.mxu0 %v1042
      %1860 = vmatmul.mubr.f32.gmra.mrb[0].mxu0 %v1041
      %v1861 = vpop.f32.mrb[0].mxu0
      %v1862 = vadd.f32 %v1637, %v1861
      %v1863 = vpop.f32.mrb[0].mxu0
      %1864 = vmatprep.mubr.f32.mxu0 %v1045
      %1865 = vmatmul.mubr.f32.gmra.mrb[0].mxu0 %v1044
      %v1866 = vpop.f32.mrb[0].mxu0
      %v1867 = vadd.f32 %v1642, %v1866
      %v1868 = vpop.f32.mrb[0].mxu0
      %1869 = vmatprep.mubr.f32.mxu0 %v1048
      %1870 = vmatmul.mubr.f32.gmra.mrb[0].mxu0 %v1047
      %v1871 = vpop.f32.mrb[0].mxu0
      %v1872 = vadd.f32 %v1647, %v1871
      %v1873 = vpop.f32.mrb[0].mxu0
      %1874 = vmatprep.mubr.f32.mxu0 %v1051
      %1875 = vmatmul.mubr.f32.gmra.mrb[0].mxu0 %v1050
      %v1876 = vpop.f32.mrb[0].mxu0
      %v1877 = vadd.f32 %v1652, %v1876
      %v1878 = vpop.f32.mrb[0].mxu0
      %1879 = vmatprep.mubr.f32.mxu0 %v1054
      %1880 = vmatmul.mubr.f32.gmra.mrb[0].mxu0 %v1053
      %v1881 = vpop.f32.mrb[0].mxu0
      %v1882 = vadd.f32 %v1657, %v1881
      %v1883 = vpop.f32.mrb[0].mxu0
      %1884 = vmatprep.mubr.f32.mxu0 %v1057
      %1885 = vmatmul.mubr.f32.gmra.mrb[0].mxu0 %v1056
      %v1886 = vpop.f32.mrb[0].mxu0
      %v1887 = vadd.f32 %v1662, %v1886
      %v1888 = vpop.f32.mrb[0].mxu0
      %1889 = vmatprep.mubr.f32.mxu0 %v1060
      %1890 = vmatmul.mubr.f32.gmra.mrb[0].mxu0 %v1059
      %v1891 = vpop.f32.mrb[0].mxu0
      %v1892 = vadd.f32 %v1667, %v1891
      %v1893 = vpop.f32.mrb[0].mxu0
      %1894 = vmatprep.mubr.f32.mxu0 %v1063
      %1895 = vmatmul.mubr.f32.gmra.mrb[0].mxu0 %v1062
      %v1896 = vpop.f32.mrb[0].mxu0
      %v1897 = vadd.f32 %v1672, %v1896
      %v1898 = vpop.f32.mrb[0].mxu0
      %1899 = vmatprep.mubr.f32.mxu0 %v1066
      %1900 = vmatmul.mubr.f32.gmra.mrb[0].mxu0 %v1065
      %v1901 = vpop.f32.mrb[0].mxu0
      %v1902 = vadd.f32 %v1677, %v1901
      %v1903 = vpop.f32.mrb[0].mxu0
      %1904 = vmatprep.mubr.f32.mxu0 %v1069
      %1905 = vmatmul.mubr.f32.gmra.mrb[0].mxu0 %v1068
      %v1906 = vpop.f32.mrb[0].mxu0
      %v1907 = vadd.f32 %v1682, %v1906
      %v1908 = vpop.f32.mrb[0].mxu0
      %1909 = vmatprep.mubr.f32.mxu0 %v1072
      %1910 = vmatmul.mubr.f32.gmra.mrb[0].mxu0 %v1071
      %v1911 = vpop.f32.mrb[0].mxu0
      %v1912 = vadd.f32 %v1687, %v1911
      %v1913 = vpop.f32.mrb[0].mxu0
      %1914 = vmatprep.mubr.f32.mxu0 %v1075
      %1915 = vmatmul.mubr.f32.gmra.mrb[0].mxu0 %v1074
      %v1916 = vpop.f32.mrb[0].mxu0
      %v1917 = vadd.f32 %v1692, %v1916
      %v1918 = vpop.f32.mrb[0].mxu0
      %1919 = vmatprep.mubr.f32.mxu0 %v1078
      %1920 = vmatmul.mubr.f32.gmra.mrb[0].mxu0 %v1077
      %v1921 = vpop.f32.mrb[0].mxu0
      %v1922 = vadd.f32 %v1697, %v1921
      %v1923 = vpop.f32.mrb[0].mxu0
      %1924 = vmatprep.mubr.f32.mxu0 %v1081
      %1925 = vmatmul.mubr.f32.gmra.mrb[0].mxu0 %v1080
      %v1926 = vpop.f32.mrb[0].mxu0
      %v1927 = vadd.f32 %v1702, %v1926
      %v1928 = vpop.f32.mrb[0].mxu0
      %1929 = vmatprep.mubr.f32.mxu0 %v1084
      %1930 = vmatmul.mubr.f32.gmra.mrb[0].mxu0 %v1083
      %v1931 = vpop.f32.mrb[0].mxu0
      %v1932 = vadd.f32 %v1707, %v1931
      %v1933 = vpop.f32.mrb[0].mxu0
      %1934 = vmatprep.mubr.f32.mxu0 %v1087
      %1935 = vmatmul.mubr.f32.gmra.mrb[0].mxu0 %v1086
      %v1936 = vpop.f32.mrb[0].mxu0
      %v1937 = vadd.f32 %v1712, %v1936
      %v1938 = vpop.f32.mrb[0].mxu0
      %1939 = vmatprep.mubr.f32.mxu0 %v1090
      %1940 = vmatmul.mubr.f32.gmra.mrb[0].mxu0 %v1089
      %v1941 = vpop.f32.mrb[0].mxu0
      %v1942 = vadd.f32 %v1717, %v1941
      %v1943 = vpop.f32.mrb[0].mxu0
      %1944 = vmatprep.mubr.f32.mxu0 %v1093
      %1945 = vmatmul.mubr.f32.gmra.mrb[0].mxu0 %v1092
      %v1946 = vpop.f32.mrb[0].mxu0
      %v1947 = vadd.f32 %v1722, %v1946
      %v1948 = vpop.f32.mrb[0].mxu0
      %1949 = vmatprep.mubr.f32.mxu0 %v1096
      %1950 = vmatmul.mubr.f32.gmra.mrb[0].mxu0 %v1095
      %v1951 = vpop.f32.mrb[0].mxu0
      %v1952 = vadd.f32 %v1727, %v1951
      %v1953 = vpop.f32.mrb[0].mxu0
      %1954 = vmatprep.mubr.f32.mxu0 %v1099
      %1955 = vmatmul.mubr.f32.gmra.mrb[0].mxu0 %v1098
      %v1956 = vpop.f32.mrb[0].mxu0
      %v1957 = vadd.f32 %v1732, %v1956
      %v1958 = vpop.f32.mrb[0].mxu0
      %1959 = vmatprep.mubr.f32.mxu0 %v1102
      %1960 = vmatmul.mubr.f32.gmra.mrb[0].mxu0 %v1101
      %v1961 = vpop.f32.mrb[0].mxu0
      %v1962 = vadd.f32 %v1737, %v1961
      %v1963 = vpop.f32.mrb[0].mxu0
      %1964 = vmatprep.mubr.f32.mxu0 %v1105
      %1965 = vmatmul.mubr.f32.gmra.mrb[0].mxu0 %v1104
      %v1966 = vpop.f32.mrb[0].mxu0
      %v1967 = vadd.f32 %v1742, %v1966
      %v1968 = vpop.f32.mrb[0].mxu0
      %1969 = vmatprep.mubr.f32.mxu0 %v1108
      %1970 = vmatmul.mubr.f32.gmra.mrb[0].mxu0 %v1107
      %v1971 = vpop.f32.mrb[0].mxu0
      %v1972 = vadd.f32 %v1747, %v1971
      %v1973 = vpop.f32.mrb[0].mxu0
      %1974 = vmatprep.mubr.f32.mxu0 %v1111
      %1975 = vmatmul.mubr.f32.gmra.mrb[0].mxu0 %v1110
      %v1976 = vpop.f32.mrb[0].mxu0
      %v1977 = vadd.f32 %v1752, %v1976
      %v1978 = vpop.f32.mrb[0].mxu0
      %1979 = vmatprep.mubr.f32.mxu0 %v1114
      %1980 = vmatmul.mubr.f32.gmra.mrb[0].mxu0 %v1113
      %v1981 = vpop.f32.mrb[0].mxu0
      %v1982 = vadd.f32 %v1757, %v1981
      %v1983 = vpop.f32.mrb[0].mxu0
      %1984 = vdwg.mxu0
      %1985 = vmatprep.subr.mxu0 0.0
      %1986 = vmatpush1.msra.mxu0 %v1148
      %1987 = vmatprep.subr.mxu0 0.0
      %1988 = vmatpush1.msra.mxu0 %v1149
      %1989 = vmatprep.subr.mxu0 0.0
      %1990 = vmatpush1.msra.mxu0 %v1150
      %1991 = vmatprep.subr.mxu0 0.0
      %1992 = vmatpush1.msra.mxu0 %v1151
      %1993 = vmatprep.subr.mxu0 0.0
      %1994 = vmatpush1.msra.mxu0 %v1152
      %1995 = vmatprep.subr.mxu0 0.0
      %1996 = vmatpush1.msra.mxu0 %v1153
      %1997 = vmatprep.subr.mxu0 0.0
      %1998 = vmatpush1.msra.mxu0 %v1154
      %1999 = vmatprep.subr.mxu0 0.0
      %2000 = vmatpush1.msra.mxu0 %v1155
      %2001 = vmatprep.subr.mxu0 0.0
      %2002 = vmatpush1.msra.mxu0 %v1156
      %2003 = vmatprep.subr.mxu0 0.0
      %2004 = vmatpush1.msra.mxu0 %v1157
      %2005 = vmatprep.subr.mxu0 0.0
      %2006 = vmatpush1.msra.mxu0 %v1158
      %2007 = vmatprep.subr.mxu0 0.0
      %2008 = vmatpush1.msra.mxu0 %v1159
      %2009 = vmatprep.subr.mxu0 0.0
      %2010 = vmatpush1.msra.mxu0 %v1160
      %2011 = vmatprep.subr.mxu0 0.0
      %2012 = vmatpush1.msra.mxu0 %v1161
      %2013 = vmatprep.subr.mxu0 0.0
      %2014 = vmatpush1.msra.mxu0 %v1162
      %2015 = vmatprep.subr.mxu0 0.0
      %2016 = vmatpush1.msra.mxu0 %v1163
      %2017 = vmatprep.subr.mxu0 0.0
      %2018 = vmatpush1.msra.mxu0 0.0
      %2019 = vmatprep.subr.mxu0 0.0
      %2020 = vmatpush1.msra.mxu0 0.0
      %2021 = vmatprep.subr.mxu0 0.0
      %2022 = vmatpush1.msra.mxu0 0.0
      %2023 = vmatprep.subr.mxu0 0.0
      %2024 = vmatpush1.msra.mxu0 0.0
      %2025 = vmatprep.subr.mxu0 0.0
      %2026 = vmatpush1.msra.mxu0 0.0
      %2027 = vmatprep.subr.mxu0 0.0
      %2028 = vmatpush1.msra.mxu0 0.0
      %2029 = vmatprep.subr.mxu0 0.0
      %2030 = vmatpush1.msra.mxu0 0.0
      %2031 = vmatprep.subr.mxu0 0.0
      %2032 = vmatpush1.msra.mxu0 0.0
      %2033 = vmatprep.subr.mxu0 0.0
      %2034 = vmatpush1.msra.mxu0 0.0
      %2035 = vmatprep.subr.mxu0 0.0
      %2036 = vmatpush1.msra.mxu0 0.0
      %2037 = vmatprep.subr.mxu0 0.0
      %2038 = vmatpush1.msra.mxu0 0.0
      %2039 = vmatprep.subr.mxu0 0.0
      %2040 = vmatpush1.msra.mxu0 0.0
      %2041 = vmatprep.subr.mxu0 0.0
      %2042 = vmatpush1.msra.mxu0 0.0
      %2043 = vmatprep.subr.mxu0 0.0
      %2044 = vmatpush1.msra.mxu0 0.0
      %2045 = vmatprep.subr.mxu0 0.0
      %2046 = vmatpush1.msra.mxu0 0.0
      %2047 = vmatprep.subr.mxu0 0.0
      %2048 = vmatpush1.msra.mxu0 0.0
      %2049 = vmatprep.mubr.f32.mxu0 0.0
      %2050 = vmatmul.mubr.f32.gmra.mrb[0].mxu0 %v1022
      %v2051 = vpop.f32.mrb[0].mxu0
      %v2052 = vadd.f32 %v1827, %v2051
      %v2053 = vpop.f32.mrb[0].mxu0
      %2054 = vmatprep.mubr.f32.mxu0 0.0
      %2055 = vmatmul.mubr.f32.gmra.mrb[0].mxu0 %v1025
      %v2056 = vpop.f32.mrb[0].mxu0
      %v2057 = vadd.f32 %v1832, %v2056
      %v2058 = vpop.f32.mrb[0].mxu0
      %2059 = vmatprep.mubr.f32.mxu0 0.0
      %2060 = vmatmul.mubr.f32.gmra.mrb[0].mxu0 %v1028
      %v2061 = vpop.f32.mrb[0].mxu0
      %v2062 = vadd.f32 %v1837, %v2061
      %v2063 = vpop.f32.mrb[0].mxu0
      %2064 = vmatprep.mubr.f32.mxu0 0.0
      %2065 = vmatmul.mubr.f32.gmra.mrb[0].mxu0 %v1031
      %v2066 = vpop.f32.mrb[0].mxu0
      %v2067 = vadd.f32 %v1842, %v2066
      %v2068 = vpop.f32.mrb[0].mxu0
      %2069 = vmatprep.mubr.f32.mxu0 0.0
      %2070 = vmatmul.mubr.f32.gmra.mrb[0].mxu0 %v1034
      %v2071 = vpop.f32.mrb[0].mxu0
      %v2072 = vadd.f32 %v1847, %v2071
      %v2073 = vpop.f32.mrb[0].mxu0
      %2074 = vmatprep.mubr.f32.mxu0 0.0
      %2075 = vmatmul.mubr.f32.gmra.mrb[0].mxu0 %v1037
      %v2076 = vpop.f32.mrb[0].mxu0
      %v2077 = vadd.f32 %v1852, %v2076
      %v2078 = vpop.f32.mrb[0].mxu0
      %2079 = vmatprep.mubr.f32.mxu0 0.0
      %2080 = vmatmul.mubr.f32.gmra.mrb[0].mxu0 %v1040
      %v2081 = vpop.f32.mrb[0].mxu0
      %v2082 = vadd.f32 %v1857, %v2081
      %v2083 = vpop.f32.mrb[0].mxu0
      %2084 = vmatprep.mubr.f32.mxu0 0.0
      %2085 = vmatmul.mubr.f32.gmra.mrb[0].mxu0 %v1043
      %v2086 = vpop.f32.mrb[0].mxu0
      %v2087 = vadd.f32 %v1862, %v2086
      %v2088 = vpop.f32.mrb[0].mxu0
      %2089 = vmatprep.mubr.f32.mxu0 0.0
      %2090 = vmatmul.mubr.f32.gmra.mrb[0].mxu0 %v1046
      %v2091 = vpop.f32.mrb[0].mxu0
      %v2092 = vadd.f32 %v1867, %v2091
      %v2093 = vpop.f32.mrb[0].mxu0
      %2094 = vmatprep.mubr.f32.mxu0 0.0
      %2095 = vmatmul.mubr.f32.gmra.mrb[0].mxu0 %v1049
      %v2096 = vpop.f32.mrb[0].mxu0
      %v2097 = vadd.f32 %v1872, %v2096
      %v2098 = vpop.f32.mrb[0].mxu0
      %2099 = vmatprep.mubr.f32.mxu0 0.0
      %2100 = vmatmul.mubr.f32.gmra.mrb[0].mxu0 %v1052
      %v2101 = vpop.f32.mrb[0].mxu0
      %v2102 = vadd.f32 %v1877, %v2101
      %v2103 = vpop.f32.mrb[0].mxu0
      %2104 = vmatprep.mubr.f32.mxu0 0.0
      %2105 = vmatmul.mubr.f32.gmra.mrb[0].mxu0 %v1055
      %v2106 = vpop.f32.mrb[0].mxu0
      %v2107 = vadd.f32 %v1882, %v2106
      %v2108 = vpop.f32.mrb[0].mxu0
      %2109 = vmatprep.mubr.f32.mxu0 0.0
      %2110 = vmatmul.mubr.f32.gmra.mrb[0].mxu0 %v1058
      %v2111 = vpop.f32.mrb[0].mxu0
      %v2112 = vadd.f32 %v1887, %v2111
      %v2113 = vpop.f32.mrb[0].mxu0
      %2114 = vmatprep.mubr.f32.mxu0 0.0
      %2115 = vmatmul.mubr.f32.gmra.mrb[0].mxu0 %v1061
      %v2116 = vpop.f32.mrb[0].mxu0
      %v2117 = vadd.f32 %v1892, %v2116
      %v2118 = vpop.f32.mrb[0].mxu0
      %2119 = vmatprep.mubr.f32.mxu0 0.0
      %2120 = vmatmul.mubr.f32.gmra.mrb[0].mxu0 %v1064
      %v2121 = vpop.f32.mrb[0].mxu0
      %v2122 = vadd.f32 %v1897, %v2121
      %v2123 = vpop.f32.mrb[0].mxu0
      %2124 = vmatprep.mubr.f32.mxu0 0.0
      %2125 = vmatmul.mubr.f32.gmra.mrb[0].mxu0 %v1067
      %v2126 = vpop.f32.mrb[0].mxu0
      %v2127 = vadd.f32 %v1902, %v2126
      %v2128 = vpop.f32.mrb[0].mxu0
      %2129 = vmatprep.mubr.f32.mxu0 0.0
      %2130 = vmatmul.mubr.f32.gmra.mrb[0].mxu0 %v1070
      %v2131 = vpop.f32.mrb[0].mxu0
      %v2132 = vadd.f32 %v1907, %v2131
      %v2133 = vpop.f32.mrb[0].mxu0
      %2134 = vmatprep.mubr.f32.mxu0 0.0
      %2135 = vmatmul.mubr.f32.gmra.mrb[0].mxu0 %v1073
      %v2136 = vpop.f32.mrb[0].mxu0
      %v2137 = vadd.f32 %v1912, %v2136
      %v2138 = vpop.f32.mrb[0].mxu0
      %2139 = vmatprep.mubr.f32.mxu0 0.0
      %2140 = vmatmul.mubr.f32.gmra.mrb[0].mxu0 %v1076
      %v2141 = vpop.f32.mrb[0].mxu0
      %v2142 = vadd.f32 %v1917, %v2141
      %v2143 = vpop.f32.mrb[0].mxu0
      %2144 = vmatprep.mubr.f32.mxu0 0.0
      %2145 = vmatmul.mubr.f32.gmra.mrb[0].mxu0 %v1079
      %v2146 = vpop.f32.mrb[0].mxu0
      %v2147 = vadd.f32 %v1922, %v2146
      %v2148 = vpop.f32.mrb[0].mxu0
      %2149 = vmatprep.mubr.f32.mxu0 0.0
      %2150 = vmatmul.mubr.f32.gmra.mrb[0].mxu0 %v1082
      %v2151 = vpop.f32.mrb[0].mxu0
      %v2152 = vadd.f32 %v1927, %v2151
      %v2153 = vpop.f32.mrb[0].mxu0
      %2154 = vmatprep.mubr.f32.mxu0 0.0
      %2155 = vmatmul.mubr.f32.gmra.mrb[0].mxu0 %v1085
      %v2156 = vpop.f32.mrb[0].mxu0
      %v2157 = vadd.f32 %v1932, %v2156
      %v2158 = vpop.f32.mrb[0].mxu0
      %2159 = vmatprep.mubr.f32.mxu0 0.0
      %2160 = vmatmul.mubr.f32.gmra.mrb[0].mxu0 %v1088
      %v2161 = vpop.f32.mrb[0].mxu0
      %v2162 = vadd.f32 %v1937, %v2161
      %v2163 = vpop.f32.mrb[0].mxu0
      %2164 = vmatprep.mubr.f32.mxu0 0.0
      %2165 = vmatmul.mubr.f32.gmra.mrb[0].mxu0 %v1091
      %v2166 = vpop.f32.mrb[0].mxu0
      %v2167 = vadd.f32 %v1942, %v2166
      %v2168 = vpop.f32.mrb[0].mxu0
      %2169 = vmatprep.mubr.f32.mxu0 0.0
      %2170 = vmatmul.mubr.f32.gmra.mrb[0].mxu0 %v1094
      %v2171 = vpop.f32.mrb[0].mxu0
      %v2172 = vadd.f32 %v1947, %v2171
      %v2173 = vpop.f32.mrb[0].mxu0
      %2174 = vmatprep.mubr.f32.mxu0 0.0
      %2175 = vmatmul.mubr.f32.gmra.mrb[0].mxu0 %v1097
      %v2176 = vpop.f32.mrb[0].mxu0
      %v2177 = vadd.f32 %v1952, %v2176
      %v2178 = vpop.f32.mrb[0].mxu0
      %2179 = vmatprep.mubr.f32.mxu0 0.0
      %2180 = vmatmul.mubr.f32.gmra.mrb[0].mxu0 %v1100
      %v2181 = vpop.f32.mrb[0].mxu0
      %v2182 = vadd.f32 %v1957, %v2181
      %v2183 = vpop.f32.mrb[0].mxu0
      %2184 = vmatprep.mubr.f32.mxu0 0.0
      %2185 = vmatmul.mubr.f32.gmra.mrb[0].mxu0 %v1103
      %v2186 = vpop.f32.mrb[0].mxu0
      %v2187 = vadd.f32 %v1962, %v2186
      %v2188 = vpop.f32.mrb[0].mxu0
      %2189 = vmatprep.mubr.f32.mxu0 0.0
      %2190 = vmatmul.mubr.f32.gmra.mrb[0].mxu0 %v1106
      %v2191 = vpop.f32.mrb[0].mxu0
      %v2192 = vadd.f32 %v1967, %v2191
      %v2193 = vpop.f32.mrb[0].mxu0
      %2194 = vmatprep.mubr.f32.mxu0 0.0
      %2195 = vmatmul.mubr.f32.gmra.mrb[0].mxu0 %v1109
      %v2196 = vpop.f32.mrb[0].mxu0
      %v2197 = vadd.f32 %v1972, %v2196
      %v2198 = vpop.f32.mrb[0].mxu0
      %2199 = vmatprep.mubr.f32.mxu0 0.0
      %2200 = vmatmul.mubr.f32.gmra.mrb[0].mxu0 %v1112
      %v2201 = vpop.f32.mrb[0].mxu0
      %v2202 = vadd.f32 %v1977, %v2201
      %v2203 = vpop.f32.mrb[0].mxu0
      %2204 = vmatprep.mubr.f32.mxu0 0.0
      %2205 = vmatmul.mubr.f32.gmra.mrb[0].mxu0 %v1115
      %v2206 = vpop.f32.mrb[0].mxu0
      %v2207 = vadd.f32 %v1982, %v2206
      %v2208 = vpop.f32.mrb[0].mxu0
      %2209 = vdwg.mxu0
      %s2210 = scalar_lea.vmem [#allocation3], 96
      %v2211 = vld [vmem:[%s2210] sm:$0xff]
      %v2212 = vld [vmem:[%s2210 + $0x8] sm:$0xff]
      %v2213 = vld [vmem:[%s2210 + $0x10] sm:$0xff]
      %v2214 = vld [vmem:[%s2210 + $0x18] sm:$0xff]
      %v2215 = vld [vmem:[%s2210 + $0x20] sm:$0xff]
      %v2216 = vld [vmem:[%s2210 + $0x28] sm:$0xff]
      %v2217 = vld [vmem:[%s2210 + $0x30] sm:$0xff]
      %v2218 = vld [vmem:[%s2210 + $0x38] sm:$0xff]
      %v2219 = vld [vmem:[%s2210 + $0x40] sm:$0xff]
      %v2220 = vld [vmem:[%s2210 + $0x48] sm:$0xff]
      %v2221 = vld [vmem:[%s2210 + $0x50] sm:$0xff]
      %v2222 = vld [vmem:[%s2210 + $0x58] sm:$0xff]
      %v2223 = vld [vmem:[%s2210 + $0x60] sm:$0xff]
      %v2224 = vld [vmem:[%s2210 + $0x68] sm:$0xff]
      %v2225 = vld [vmem:[%s2210 + $0x70] sm:$0xff]
      %v2226 = vld [vmem:[%s2210 + $0x78] sm:$0xff]
      %v2227 = vld [vmem:[%s2210 + $0x80] sm:$0xff]
      %v2228 = vld [vmem:[%s2210 + $0x88] sm:$0xff]
      %v2229 = vld [vmem:[%s2210 + $0x90] sm:$0xff]
      %v2230 = vld [vmem:[%s2210 + $0x98] sm:$0xff]
      %v2231 = vld [vmem:[%s2210 + $0xa0] sm:$0xff]
      %v2232 = vld [vmem:[%s2210 + $0xa8] sm:$0xff]
      %v2233 = vld [vmem:[%s2210 + $0xb0] sm:$0xff]
      %v2234 = vld [vmem:[%s2210 + $0xb8] sm:$0xff]
      %v2235 = vld [vmem:[%s2210 + $0xc0] sm:$0xff]
      %v2236 = vld [vmem:[%s2210 + $0xc8] sm:$0xff]
      %v2237 = vld [vmem:[%s2210 + $0xd0] sm:$0xff]
      %v2238 = vld [vmem:[%s2210 + $0xd8] sm:$0xff]
      %v2239 = vld [vmem:[%s2210 + $0xe0] sm:$0xff]
      %v2240 = vld [vmem:[%s2210 + $0xe8] sm:$0xff]
      %v2241 = vld [vmem:[%s2210 + $0xf0] sm:$0xff]
      %v2242 = vld [vmem:[%s2210 + $0xf8] sm:$0xff]
      %v2243 = vld [vmem:[%s2210 + $0x100] sm:$0xff]
      %v2244 = vld [vmem:[%s2210 + $0x108] sm:$0xff]
      %v2245 = vld [vmem:[%s2210 + $0x110] sm:$0xff]
      %v2246 = vld [vmem:[%s2210 + $0x118] sm:$0xff]
      %v2247 = vld [vmem:[%s2210 + $0x120] sm:$0xff]
      %v2248 = vld [vmem:[%s2210 + $0x128] sm:$0xff]
      %v2249 = vld [vmem:[%s2210 + $0x130] sm:$0xff]
      %v2250 = vld [vmem:[%s2210 + $0x138] sm:$0xff]
      %v2251 = vld [vmem:[%s2210 + $0x140] sm:$0xff]
      %v2252 = vld [vmem:[%s2210 + $0x148] sm:$0xff]
      %v2253 = vld [vmem:[%s2210 + $0x150] sm:$0xff]
      %v2254 = vld [vmem:[%s2210 + $0x158] sm:$0xff]
      %v2255 = vld [vmem:[%s2210 + $0x160] sm:$0xff]
      %v2256 = vld [vmem:[%s2210 + $0x168] sm:$0xff]
      %v2257 = vld [vmem:[%s2210 + $0x170] sm:$0xff]
      %v2258 = vld [vmem:[%s2210 + $0x178] sm:$0xff]
      %v2259 = vld [vmem:[%s2210 + $0x180] sm:$0xff]
      %v2260 = vld [vmem:[%s2210 + $0x188] sm:$0xff]
      %v2261 = vld [vmem:[%s2210 + $0x190] sm:$0xff]
      %v2262 = vld [vmem:[%s2210 + $0x198] sm:$0xff]
      %v2263 = vld [vmem:[%s2210 + $0x1a0] sm:$0xff]
      %v2264 = vld [vmem:[%s2210 + $0x1a8] sm:$0xff]
      %v2265 = vld [vmem:[%s2210 + $0x1b0] sm:$0xff]
      %v2266 = vld [vmem:[%s2210 + $0x1b8] sm:$0xff]
      %v2267 = vld [vmem:[%s2210 + $0x1c0] sm:$0xff]
      %v2268 = vld [vmem:[%s2210 + $0x1c8] sm:$0xff]
      %v2269 = vld [vmem:[%s2210 + $0x1d0] sm:$0xff]
      %v2270 = vld [vmem:[%s2210 + $0x1d8] sm:$0xff]
      %v2271 = vld [vmem:[%s2210 + $0x1e0] sm:$0xff]
      %v2272 = vld [vmem:[%s2210 + $0x1e8] sm:$0xff]
      %v2273 = vld [vmem:[%s2210 + $0x1f0] sm:$0xff]
      %v2274 = vld [vmem:[%s2210 + $0x1f8] sm:$0xff]
      %v2275 = vld [vmem:[%s2210 + $0x200] sm:$0xff]
      %v2276 = vld [vmem:[%s2210 + $0x208] sm:$0xff]
      %v2277 = vld [vmem:[%s2210 + $0x210] sm:$0xff]
      %v2278 = vld [vmem:[%s2210 + $0x218] sm:$0xff]
      %v2279 = vld [vmem:[%s2210 + $0x220] sm:$0xff]
      %v2280 = vld [vmem:[%s2210 + $0x228] sm:$0xff]
      %v2281 = vld [vmem:[%s2210 + $0x230] sm:$0xff]
      %v2282 = vld [vmem:[%s2210 + $0x238] sm:$0xff]
      %v2283 = vld [vmem:[%s2210 + $0x240] sm:$0xff]
      %v2284 = vld [vmem:[%s2210 + $0x248] sm:$0xff]
      %v2285 = vld [vmem:[%s2210 + $0x250] sm:$0xff]
      %v2286 = vld [vmem:[%s2210 + $0x258] sm:$0xff]
      %v2287 = vld [vmem:[%s2210 + $0x260] sm:$0xff]
      %v2288 = vld [vmem:[%s2210 + $0x268] sm:$0xff]
      %v2289 = vld [vmem:[%s2210 + $0x270] sm:$0xff]
      %v2290 = vld [vmem:[%s2210 + $0x278] sm:$0xff]
      %v2291 = vld [vmem:[%s2210 + $0x280] sm:$0xff]
      %v2292 = vld [vmem:[%s2210 + $0x288] sm:$0xff]
      %v2293 = vld [vmem:[%s2210 + $0x290] sm:$0xff]
      %v2294 = vld [vmem:[%s2210 + $0x298] sm:$0xff]
      %v2295 = vld [vmem:[%s2210 + $0x2a0] sm:$0xff]
      %v2296 = vld [vmem:[%s2210 + $0x2a8] sm:$0xff]
      %v2297 = vld [vmem:[%s2210 + $0x2b0] sm:$0xff]
      %v2298 = vld [vmem:[%s2210 + $0x2b8] sm:$0xff]
      %v2299 = vld [vmem:[%s2210 + $0x2c0] sm:$0xff]
      %v2300 = vld [vmem:[%s2210 + $0x2c8] sm:$0xff]
      %v2301 = vld [vmem:[%s2210 + $0x2d0] sm:$0xff]
      %v2302 = vld [vmem:[%s2210 + $0x2d8] sm:$0xff]
      %v2303 = vld [vmem:[%s2210 + $0x2e0] sm:$0xff]
      %v2304 = vld [vmem:[%s2210 + $0x2e8] sm:$0xff]
      %v2305 = vld [vmem:[%s2210 + $0x2f0] sm:$0xff]
      %v2306 = vld [vmem:[%s2210 + $0x2f8] sm:$0xff]
      %s2307 = scalar_lea.vmem %s3, 768
      %v2308 = vld [vmem:[%s2307] sm:$0xff]
      %v2309 = vld [vmem:[%s2307 + $0x8] sm:$0xff]
      %v2310 = vld [vmem:[%s2307 + $0x10] sm:$0xff]
      %v2311 = vld [vmem:[%s2307 + $0x18] sm:$0xff]
      %v2312 = vld [vmem:[%s2307 + $0x20] sm:$0xff]
      %v2313 = vld [vmem:[%s2307 + $0x28] sm:$0xff]
      %v2314 = vld [vmem:[%s2307 + $0x30] sm:$0xff]
      %v2315 = vld [vmem:[%s2307 + $0x38] sm:$0xff]
      %v2316 = vld [vmem:[%s2307 + $0x40] sm:$0xff]
      %v2317 = vld [vmem:[%s2307 + $0x48] sm:$0xff]
      %v2318 = vld [vmem:[%s2307 + $0x50] sm:$0xff]
      %v2319 = vld [vmem:[%s2307 + $0x58] sm:$0xff]
      %v2320 = vld [vmem:[%s2307 + $0x60] sm:$0xff]
      %v2321 = vld [vmem:[%s2307 + $0x68] sm:$0xff]
      %v2322 = vld [vmem:[%s2307 + $0x70] sm:$0xff]
      %v2323 = vld [vmem:[%s2307 + $0x78] sm:$0xff]
      %v2324 = vld [vmem:[%s2307 + $0x80] sm:$0xff]
      %v2325 = vld [vmem:[%s2307 + $0x88] sm:$0xff]
      %v2326 = vld [vmem:[%s2307 + $0x90] sm:$0xff]
      %v2327 = vld [vmem:[%s2307 + $0x98] sm:$0xff]
      %v2328 = vld [vmem:[%s2307 + $0xa0] sm:$0xff]
      %v2329 = vld [vmem:[%s2307 + $0xa8] sm:$0xff]
      %v2330 = vld [vmem:[%s2307 + $0xb0] sm:$0xff]
      %v2331 = vld [vmem:[%s2307 + $0xb8] sm:$0xff]
      %v2332 = vld [vmem:[%s2307 + $0xc0] sm:$0xff]
      %v2333 = vld [vmem:[%s2307 + $0xc8] sm:$0xff]
      %v2334 = vld [vmem:[%s2307 + $0xd0] sm:$0xff]
      %v2335 = vld [vmem:[%s2307 + $0xd8] sm:$0xff]
      %v2336 = vld [vmem:[%s2307 + $0xe0] sm:$0xff]
      %v2337 = vld [vmem:[%s2307 + $0xe8] sm:$0xff]
      %v2338 = vld [vmem:[%s2307 + $0xf0] sm:$0xff]
      %v2339 = vld [vmem:[%s2307 + $0xf8] sm:$0xff]
      %v2340 = vld [vmem:[%s2307 + $0x100] sm:$0xff]
      %v2341 = vld [vmem:[%s2307 + $0x108] sm:$0xff]
      %v2342 = vld [vmem:[%s2307 + $0x110] sm:$0xff]
      %v2343 = vld [vmem:[%s2307 + $0x118] sm:$0xff]
      %v2344 = vld [vmem:[%s2307 + $0x120] sm:$0xff]
      %v2345 = vld [vmem:[%s2307 + $0x128] sm:$0xff]
      %v2346 = vld [vmem:[%s2307 + $0x130] sm:$0xff]
      %v2347 = vld [vmem:[%s2307 + $0x138] sm:$0xff]
      %v2348 = vld [vmem:[%s2307 + $0x140] sm:$0xff]
      %v2349 = vld [vmem:[%s2307 + $0x148] sm:$0xff]
      %v2350 = vld [vmem:[%s2307 + $0x150] sm:$0xff]
      %v2351 = vld [vmem:[%s2307 + $0x158] sm:$0xff]
      %v2352 = vld [vmem:[%s2307 + $0x160] sm:$0xff]
      %v2353 = vld [vmem:[%s2307 + $0x168] sm:$0xff]
      %v2354 = vld [vmem:[%s2307 + $0x170] sm:$0xff]
      %v2355 = vld [vmem:[%s2307 + $0x178] sm:$0xff]
      %2356 = vmatprep.subr.mxu0 0.0
      %2357 = vmatpush1.msra.mxu0 %v2308
      %2358 = vmatprep.subr.mxu0 0.0
      %2359 = vmatpush1.msra.mxu0 %v2309
      %2360 = vmatprep.subr.mxu0 0.0
      %2361 = vmatpush1.msra.mxu0 %v2310
      %2362 = vmatprep.subr.mxu0 0.0
      %2363 = vmatpush1.msra.mxu0 %v2311
      %2364 = vmatprep.subr.mxu0 0.0
      %2365 = vmatpush1.msra.mxu0 %v2312
      %2366 = vmatprep.subr.mxu0 0.0
      %2367 = vmatpush1.msra.mxu0 %v2313
      %2368 = vmatprep.subr.mxu0 0.0
      %2369 = vmatpush1.msra.mxu0 %v2314
      %2370 = vmatprep.subr.mxu0 0.0
      %2371 = vmatpush1.msra.mxu0 %v2315
      %2372 = vmatprep.subr.mxu0 0.0
      %2373 = vmatpush1.msra.mxu0 %v2316
      %2374 = vmatprep.subr.mxu0 0.0
      %2375 = vmatpush1.msra.mxu0 %v2317
      %2376 = vmatprep.subr.mxu0 0.0
      %2377 = vmatpush1.msra.mxu0 %v2318
      %2378 = vmatprep.subr.mxu0 0.0
      %2379 = vmatpush1.msra.mxu0 %v2319
      %2380 = vmatprep.subr.mxu0 0.0
      %2381 = vmatpush1.msra.mxu0 %v2320
      %2382 = vmatprep.subr.mxu0 0.0
      %2383 = vmatpush1.msra.mxu0 %v2321
      %2384 = vmatprep.subr.mxu0 0.0
      %2385 = vmatpush1.msra.mxu0 %v2322
      %2386 = vmatprep.subr.mxu0 0.0
      %2387 = vmatpush1.msra.mxu0 %v2323
      %2388 = vmatprep.subr.mxu0 0.0
      %2389 = vmatpush1.msra.mxu0 %v2324
      %2390 = vmatprep.subr.mxu0 0.0
      %2391 = vmatpush1.msra.mxu0 %v2325
      %2392 = vmatprep.subr.mxu0 0.0
      %2393 = vmatpush1.msra.mxu0 %v2326
      %2394 = vmatprep.subr.mxu0 0.0
      %2395 = vmatpush1.msra.mxu0 %v2327
      %2396 = vmatprep.subr.mxu0 0.0
      %2397 = vmatpush1.msra.mxu0 %v2328
      %2398 = vmatprep.subr.mxu0 0.0
      %2399 = vmatpush1.msra.mxu0 %v2329
      %2400 = vmatprep.subr.mxu0 0.0
      %2401 = vmatpush1.msra.mxu0 %v2330
      %2402 = vmatprep.subr.mxu0 0.0
      %2403 = vmatpush1.msra.mxu0 %v2331
      %2404 = vmatprep.subr.mxu0 0.0
      %2405 = vmatpush1.msra.mxu0 %v2332
      %2406 = vmatprep.subr.mxu0 0.0
      %2407 = vmatpush1.msra.mxu0 %v2333
      %2408 = vmatprep.subr.mxu0 0.0
      %2409 = vmatpush1.msra.mxu0 %v2334
      %2410 = vmatprep.subr.mxu0 0.0
      %2411 = vmatpush1.msra.mxu0 %v2335
      %2412 = vmatprep.subr.mxu0 0.0
      %2413 = vmatpush1.msra.mxu0 %v2336
      %2414 = vmatprep.subr.mxu0 0.0
      %2415 = vmatpush1.msra.mxu0 %v2337
      %2416 = vmatprep.subr.mxu0 0.0
      %2417 = vmatpush1.msra.mxu0 %v2338
      %2418 = vmatprep.subr.mxu0 0.0
      %2419 = vmatpush1.msra.mxu0 %v2339
      %2420 = vmatprep.mubr.f32.mxu0 %v2212
      %2421 = vmatmul.mubr.f32.gmra.mrb[0].mxu0 %v2211
      %v2422 = vpop.f32.mrb[0].mxu0
      %v2423 = vadd.f32 0.0, %v2422
      %v2424 = vpop.f32.mrb[0].mxu0
      %2425 = vmatprep.mubr.f32.mxu0 %v2215
      %2426 = vmatmul.mubr.f32.gmra.mrb[0].mxu0 %v2214
      %v2427 = vpop.f32.mrb[0].mxu0
      %v2428 = vadd.f32 0.0, %v2427
      %v2429 = vpop.f32.mrb[0].mxu0
      %2430 = vmatprep.mubr.f32.mxu0 %v2218
      %2431 = vmatmul.mubr.f32.gmra.mrb[0].mxu0 %v2217
      %v2432 = vpop.f32.mrb[0].mxu0
      %v2433 = vadd.f32 0.0, %v2432
      %v2434 = vpop.f32.mrb[0].mxu0
      %2435 = vmatprep.mubr.f32.mxu0 %v2221
      %2436 = vmatmul.mubr.f32.gmra.mrb[0].mxu0 %v2220
      %v2437 = vpop.f32.mrb[0].mxu0
      %v2438 = vadd.f32 0.0, %v2437
      %v2439 = vpop.f32.mrb[0].mxu0
      %2440 = vmatprep.mubr.f32.mxu0 %v2224
      %2441 = vmatmul.mubr.f32.gmra.mrb[0].mxu0 %v2223
      %v2442 = vpop.f32.mrb[0].mxu0
      %v2443 = vadd.f32 0.0, %v2442
      %v2444 = vpop.f32.mrb[0].mxu0
      %2445 = vmatprep.mubr.f32.mxu0 %v2227
      %2446 = vmatmul.mubr.f32.gmra.mrb[0].mxu0 %v2226
      %v2447 = vpop.f32.mrb[0].mxu0
      %v2448 = vadd.f32 0.0, %v2447
      %v2449 = vpop.f32.mrb[0].mxu0
      %2450 = vmatprep.mubr.f32.mxu0 %v2230
      %2451 = vmatmul.mubr.f32.gmra.mrb[0].mxu0 %v2229
      %v2452 = vpop.f32.mrb[0].mxu0
      %v2453 = vadd.f32 0.0, %v2452
      %v2454 = vpop.f32.mrb[0].mxu0
      %2455 = vmatprep.mubr.f32.mxu0 %v2233
      %2456 = vmatmul.mubr.f32.gmra.mrb[0].mxu0 %v2232
      %v2457 = vpop.f32.mrb[0].mxu0
      %v2458 = vadd.f32 0.0, %v2457
      %v2459 = vpop.f32.mrb[0].mxu0
      %2460 = vmatprep.mubr.f32.mxu0 %v2236
      %2461 = vmatmul.mubr.f32.gmra.mrb[0].mxu0 %v2235
      %v2462 = vpop.f32.mrb[0].mxu0
      %v2463 = vadd.f32 0.0, %v2462
      %v2464 = vpop.f32.mrb[0].mxu0
      %2465 = vmatprep.mubr.f32.mxu0 %v2239
      %2466 = vmatmul.mubr.f32.gmra.mrb[0].mxu0 %v2238
      %v2467 = vpop.f32.mrb[0].mxu0
      %v2468 = vadd.f32 0.0, %v2467
      %v2469 = vpop.f32.mrb[0].mxu0
      %2470 = vmatprep.mubr.f32.mxu0 %v2242
      %2471 = vmatmul.mubr.f32.gmra.mrb[0].mxu0 %v2241
      %v2472 = vpop.f32.mrb[0].mxu0
      %v2473 = vadd.f32 0.0, %v2472
      %v2474 = vpop.f32.mrb[0].mxu0
      %2475 = vmatprep.mubr.f32.mxu0 %v2245
      %2476 = vmatmul.mubr.f32.gmra.mrb[0].mxu0 %v2244
      %v2477 = vpop.f32.mrb[0].mxu0
      %v2478 = vadd.f32 0.0, %v2477
      %v2479 = vpop.f32.mrb[0].mxu0
      %2480 = vmatprep.mubr.f32.mxu0 %v2248
      %2481 = vmatmul.mubr.f32.gmra.mrb[0].mxu0 %v2247
      %v2482 = vpop.f32.mrb[0].mxu0
      %v2483 = vadd.f32 0.0, %v2482
      %v2484 = vpop.f32.mrb[0].mxu0
      %2485 = vmatprep.mubr.f32.mxu0 %v2251
      %2486 = vmatmul.mubr.f32.gmra.mrb[0].mxu0 %v2250
      %v2487 = vpop.f32.mrb[0].mxu0
      %v2488 = vadd.f32 0.0, %v2487
      %v2489 = vpop.f32.mrb[0].mxu0
      %2490 = vmatprep.mubr.f32.mxu0 %v2254
      %2491 = vmatmul.mubr.f32.gmra.mrb[0].mxu0 %v2253
      %v2492 = vpop.f32.mrb[0].mxu0
      %v2493 = vadd.f32 0.0, %v2492
      %v2494 = vpop.f32.mrb[0].mxu0
      %2495 = vmatprep.mubr.f32.mxu0 %v2257
      %2496 = vmatmul.mubr.f32.gmra.mrb[0].mxu0 %v2256
      %v2497 = vpop.f32.mrb[0].mxu0
      %v2498 = vadd.f32 0.0, %v2497
      %v2499 = vpop.f32.mrb[0].mxu0
      %2500 = vmatprep.mubr.f32.mxu0 %v2260
      %2501 = vmatmul.mubr.f32.gmra.mrb[0].mxu0 %v2259
      %v2502 = vpop.f32.mrb[0].mxu0
      %v2503 = vadd.f32 0.0, %v2502
      %v2504 = vpop.f32.mrb[0].mxu0
      %2505 = vmatprep.mubr.f32.mxu0 %v2263
      %2506 = vmatmul.mubr.f32.gmra.mrb[0].mxu0 %v2262
      %v2507 = vpop.f32.mrb[0].mxu0
      %v2508 = vadd.f32 0.0, %v2507
      %v2509 = vpop.f32.mrb[0].mxu0
      %2510 = vmatprep.mubr.f32.mxu0 %v2266
      %2511 = vmatmul.mubr.f32.gmra.mrb[0].mxu0 %v2265
      %v2512 = vpop.f32.mrb[0].mxu0
      %v2513 = vadd.f32 0.0, %v2512
      %v2514 = vpop.f32.mrb[0].mxu0
      %2515 = vmatprep.mubr.f32.mxu0 %v2269
      %2516 = vmatmul.mubr.f32.gmra.mrb[0].mxu0 %v2268
      %v2517 = vpop.f32.mrb[0].mxu0
      %v2518 = vadd.f32 0.0, %v2517
      %v2519 = vpop.f32.mrb[0].mxu0
      %2520 = vmatprep.mubr.f32.mxu0 %v2272
      %2521 = vmatmul.mubr.f32.gmra.mrb[0].mxu0 %v2271
      %v2522 = vpop.f32.mrb[0].mxu0
      %v2523 = vadd.f32 0.0, %v2522
      %v2524 = vpop.f32.mrb[0].mxu0
      %2525 = vmatprep.mubr.f32.mxu0 %v2275
      %2526 = vmatmul.mubr.f32.gmra.mrb[0].mxu0 %v2274
      %v2527 = vpop.f32.mrb[0].mxu0
      %v2528 = vadd.f32 0.0, %v2527
      %v2529 = vpop.f32.mrb[0].mxu0
      %2530 = vmatprep.mubr.f32.mxu0 %v2278
      %2531 = vmatmul.mubr.f32.gmra.mrb[0].mxu0 %v2277
      %v2532 = vpop.f32.mrb[0].mxu0
      %v2533 = vadd.f32 0.0, %v2532
      %v2534 = vpop.f32.mrb[0].mxu0
      %2535 = vmatprep.mubr.f32.mxu0 %v2281
      %2536 = vmatmul.mubr.f32.gmra.mrb[0].mxu0 %v2280
      %v2537 = vpop.f32.mrb[0].mxu0
      %v2538 = vadd.f32 0.0, %v2537
      %v2539 = vpop.f32.mrb[0].mxu0
      %2540 = vmatprep.mubr.f32.mxu0 %v2284
      %2541 = vmatmul.mubr.f32.gmra.mrb[0].mxu0 %v2283
      %v2542 = vpop.f32.mrb[0].mxu0
      %v2543 = vadd.f32 0.0, %v2542
      %v2544 = vpop.f32.mrb[0].mxu0
      %2545 = vmatprep.mubr.f32.mxu0 %v2287
      %2546 = vmatmul.mubr.f32.gmra.mrb[0].mxu0 %v2286
      %v2547 = vpop.f32.mrb[0].mxu0
      %v2548 = vadd.f32 0.0, %v2547
      %v2549 = vpop.f32.mrb[0].mxu0
      %2550 = vmatprep.mubr.f32.mxu0 %v2290
      %2551 = vmatmul.mubr.f32.gmra.mrb[0].mxu0 %v2289
      %v2552 = vpop.f32.mrb[0].mxu0
      %v2553 = vadd.f32 0.0, %v2552
      %v2554 = vpop.f32.mrb[0].mxu0
      %2555 = vmatprep.mubr.f32.mxu0 %v2293
      %2556 = vmatmul.mubr.f32.gmra.mrb[0].mxu0 %v2292
      %v2557 = vpop.f32.mrb[0].mxu0
      %v2558 = vadd.f32 0.0, %v2557
      %v2559 = vpop.f32.mrb[0].mxu0
      %2560 = vmatprep.mubr.f32.mxu0 %v2296
      %2561 = vmatmul.mubr.f32.gmra.mrb[0].mxu0 %v2295
      %v2562 = vpop.f32.mrb[0].mxu0
      %v2563 = vadd.f32 0.0, %v2562
      %v2564 = vpop.f32.mrb[0].mxu0
      %2565 = vmatprep.mubr.f32.mxu0 %v2299
      %2566 = vmatmul.mubr.f32.gmra.mrb[0].mxu0 %v2298
      %v2567 = vpop.f32.mrb[0].mxu0
      %v2568 = vadd.f32 0.0, %v2567
      %v2569 = vpop.f32.mrb[0].mxu0
      %2570 = vmatprep.mubr.f32.mxu0 %v2302
      %2571 = vmatmul.mubr.f32.gmra.mrb[0].mxu0 %v2301
      %v2572 = vpop.f32.mrb[0].mxu0
      %v2573 = vadd.f32 0.0, %v2572
      %v2574 = vpop.f32.mrb[0].mxu0
      %2575 = vmatprep.mubr.f32.mxu0 %v2305
      %2576 = vmatmul.mubr.f32.gmra.mrb[0].mxu0 %v2304
      %v2577 = vpop.f32.mrb[0].mxu0
      %v2578 = vadd.f32 0.0, %v2577
      %v2579 = vpop.f32.mrb[0].mxu0
      %2580 = vdwg.mxu0
      %2581 = vmatprep.subr.mxu0 0.0
      %2582 = vmatpush1.msra.mxu0 %v2340
      %2583 = vmatprep.subr.mxu0 0.0
      %2584 = vmatpush1.msra.mxu0 %v2341
      %2585 = vmatprep.subr.mxu0 0.0
      %2586 = vmatpush1.msra.mxu0 %v2342
      %2587 = vmatprep.subr.mxu0 0.0
      %2588 = vmatpush1.msra.mxu0 %v2343
      %2589 = vmatprep.subr.mxu0 0.0
      %2590 = vmatpush1.msra.mxu0 %v2344
      %2591 = vmatprep.subr.mxu0 0.0
      %2592 = vmatpush1.msra.mxu0 %v2345
      %2593 = vmatprep.subr.mxu0 0.0
      %2594 = vmatpush1.msra.mxu0 %v2346
      %2595 = vmatprep.subr.mxu0 0.0
      %2596 = vmatpush1.msra.mxu0 %v2347
      %2597 = vmatprep.subr.mxu0 0.0
      %2598 = vmatpush1.msra.mxu0 %v2348
      %2599 = vmatprep.subr.mxu0 0.0
      %2600 = vmatpush1.msra.mxu0 %v2349
      %2601 = vmatprep.subr.mxu0 0.0
      %2602 = vmatpush1.msra.mxu0 %v2350
      %2603 = vmatprep.subr.mxu0 0.0
      %2604 = vmatpush1.msra.mxu0 %v2351
      %2605 = vmatprep.subr.mxu0 0.0
      %2606 = vmatpush1.msra.mxu0 %v2352
      %2607 = vmatprep.subr.mxu0 0.0
      %2608 = vmatpush1.msra.mxu0 %v2353
      %2609 = vmatprep.subr.mxu0 0.0
      %2610 = vmatpush1.msra.mxu0 %v2354
      %2611 = vmatprep.subr.mxu0 0.0
      %2612 = vmatpush1.msra.mxu0 %v2355
      %2613 = vmatprep.subr.mxu0 0.0
      %2614 = vmatpush1.msra.mxu0 0.0
      %2615 = vmatprep.subr.mxu0 0.0
      %2616 = vmatpush1.msra.mxu0 0.0
      %2617 = vmatprep.subr.mxu0 0.0
      %2618 = vmatpush1.msra.mxu0 0.0
      %2619 = vmatprep.subr.mxu0 0.0
      %2620 = vmatpush1.msra.mxu0 0.0
      %2621 = vmatprep.subr.mxu0 0.0
      %2622 = vmatpush1.msra.mxu0 0.0
      %2623 = vmatprep.subr.mxu0 0.0
      %2624 = vmatpush1.msra.mxu0 0.0
      %2625 = vmatprep.subr.mxu0 0.0
      %2626 = vmatpush1.msra.mxu0 0.0
      %2627 = vmatprep.subr.mxu0 0.0
      %2628 = vmatpush1.msra.mxu0 0.0
      %2629 = vmatprep.subr.mxu0 0.0
      %2630 = vmatpush1.msra.mxu0 0.0
      %2631 = vmatprep.subr.mxu0 0.0
      %2632 = vmatpush1.msra.mxu0 0.0
      %2633 = vmatprep.subr.mxu0 0.0
      %2634 = vmatpush1.msra.mxu0 0.0
      %2635 = vmatprep.subr.mxu0 0.0
      %2636 = vmatpush1.msra.mxu0 0.0
      %2637 = vmatprep.subr.mxu0 0.0
      %2638 = vmatpush1.msra.mxu0 0.0
      %2639 = vmatprep.subr.mxu0 0.0
      %2640 = vmatpush1.msra.mxu0 0.0
      %2641 = vmatprep.subr.mxu0 0.0
      %2642 = vmatpush1.msra.mxu0 0.0
      %2643 = vmatprep.subr.mxu0 0.0
      %2644 = vmatpush1.msra.mxu0 0.0
      %2645 = vmatprep.mubr.f32.mxu0 0.0
      %2646 = vmatmul.mubr.f32.gmra.mrb[0].mxu0 %v2213
      %v2647 = vpop.f32.mrb[0].mxu0
      %v2648 = vadd.f32 %v2423, %v2647
      %v2649 = vpop.f32.mrb[0].mxu0
      %2650 = vmatprep.mubr.f32.mxu0 0.0
      %2651 = vmatmul.mubr.f32.gmra.mrb[0].mxu0 %v2216
      %v2652 = vpop.f32.mrb[0].mxu0
      %v2653 = vadd.f32 %v2428, %v2652
      %v2654 = vpop.f32.mrb[0].mxu0
      %2655 = vmatprep.mubr.f32.mxu0 0.0
      %2656 = vmatmul.mubr.f32.gmra.mrb[0].mxu0 %v2219
      %v2657 = vpop.f32.mrb[0].mxu0
      %v2658 = vadd.f32 %v2433, %v2657
      %v2659 = vpop.f32.mrb[0].mxu0
      %2660 = vmatprep.mubr.f32.mxu0 0.0
      %2661 = vmatmul.mubr.f32.gmra.mrb[0].mxu0 %v2222
      %v2662 = vpop.f32.mrb[0].mxu0
      %v2663 = vadd.f32 %v2438, %v2662
      %v2664 = vpop.f32.mrb[0].mxu0
      %2665 = vmatprep.mubr.f32.mxu0 0.0
      %2666 = vmatmul.mubr.f32.gmra.mrb[0].mxu0 %v2225
      %v2667 = vpop.f32.mrb[0].mxu0
      %v2668 = vadd.f32 %v2443, %v2667
      %v2669 = vpop.f32.mrb[0].mxu0
      %2670 = vmatprep.mubr.f32.mxu0 0.0
      %2671 = vmatmul.mubr.f32.gmra.mrb[0].mxu0 %v2228
      %v2672 = vpop.f32.mrb[0].mxu0
      %v2673 = vadd.f32 %v2448, %v2672
      %v2674 = vpop.f32.mrb[0].mxu0
      %2675 = vmatprep.mubr.f32.mxu0 0.0
      %2676 = vmatmul.mubr.f32.gmra.mrb[0].mxu0 %v2231
      %v2677 = vpop.f32.mrb[0].mxu0
      %v2678 = vadd.f32 %v2453, %v2677
      %v2679 = vpop.f32.mrb[0].mxu0
      %2680 = vmatprep.mubr.f32.mxu0 0.0
      %2681 = vmatmul.mubr.f32.gmra.mrb[0].mxu0 %v2234
      %v2682 = vpop.f32.mrb[0].mxu0
      %v2683 = vadd.f32 %v2458, %v2682
      %v2684 = vpop.f32.mrb[0].mxu0
      %2685 = vmatprep.mubr.f32.mxu0 0.0
      %2686 = vmatmul.mubr.f32.gmra.mrb[0].mxu0 %v2237
      %v2687 = vpop.f32.mrb[0].mxu0
      %v2688 = vadd.f32 %v2463, %v2687
      %v2689 = vpop.f32.mrb[0].mxu0
      %2690 = vmatprep.mubr.f32.mxu0 0.0
      %2691 = vmatmul.mubr.f32.gmra.mrb[0].mxu0 %v2240
      %v2692 = vpop.f32.mrb[0].mxu0
      %v2693 = vadd.f32 %v2468, %v2692
      %v2694 = vpop.f32.mrb[0].mxu0
      %2695 = vmatprep.mubr.f32.mxu0 0.0
      %2696 = vmatmul.mubr.f32.gmra.mrb[0].mxu0 %v2243
      %v2697 = vpop.f32.mrb[0].mxu0
      %v2698 = vadd.f32 %v2473, %v2697
      %v2699 = vpop.f32.mrb[0].mxu0
      %2700 = vmatprep.mubr.f32.mxu0 0.0
      %2701 = vmatmul.mubr.f32.gmra.mrb[0].mxu0 %v2246
      %v2702 = vpop.f32.mrb[0].mxu0
      %v2703 = vadd.f32 %v2478, %v2702
      %v2704 = vpop.f32.mrb[0].mxu0
      %2705 = vmatprep.mubr.f32.mxu0 0.0
      %2706 = vmatmul.mubr.f32.gmra.mrb[0].mxu0 %v2249
      %v2707 = vpop.f32.mrb[0].mxu0
      %v2708 = vadd.f32 %v2483, %v2707
      %v2709 = vpop.f32.mrb[0].mxu0
      %2710 = vmatprep.mubr.f32.mxu0 0.0
      %2711 = vmatmul.mubr.f32.gmra.mrb[0].mxu0 %v2252
      %v2712 = vpop.f32.mrb[0].mxu0
      %v2713 = vadd.f32 %v2488, %v2712
      %v2714 = vpop.f32.mrb[0].mxu0
      %2715 = vmatprep.mubr.f32.mxu0 0.0
      %2716 = vmatmul.mubr.f32.gmra.mrb[0].mxu0 %v2255
      %v2717 = vpop.f32.mrb[0].mxu0
      %v2718 = vadd.f32 %v2493, %v2717
      %v2719 = vpop.f32.mrb[0].mxu0
      %2720 = vmatprep.mubr.f32.mxu0 0.0
      %2721 = vmatmul.mubr.f32.gmra.mrb[0].mxu0 %v2258
      %v2722 = vpop.f32.mrb[0].mxu0
      %v2723 = vadd.f32 %v2498, %v2722
      %v2724 = vpop.f32.mrb[0].mxu0
      %2725 = vmatprep.mubr.f32.mxu0 0.0
      %2726 = vmatmul.mubr.f32.gmra.mrb[0].mxu0 %v2261
      %v2727 = vpop.f32.mrb[0].mxu0
      %v2728 = vadd.f32 %v2503, %v2727
      %v2729 = vpop.f32.mrb[0].mxu0
      %2730 = vmatprep.mubr.f32.mxu0 0.0
      %2731 = vmatmul.mubr.f32.gmra.mrb[0].mxu0 %v2264
      %v2732 = vpop.f32.mrb[0].mxu0
      %v2733 = vadd.f32 %v2508, %v2732
      %v2734 = vpop.f32.mrb[0].mxu0
      %2735 = vmatprep.mubr.f32.mxu0 0.0
      %2736 = vmatmul.mubr.f32.gmra.mrb[0].mxu0 %v2267
      %v2737 = vpop.f32.mrb[0].mxu0
      %v2738 = vadd.f32 %v2513, %v2737
      %v2739 = vpop.f32.mrb[0].mxu0
      %2740 = vmatprep.mubr.f32.mxu0 0.0
      %2741 = vmatmul.mubr.f32.gmra.mrb[0].mxu0 %v2270
      %v2742 = vpop.f32.mrb[0].mxu0
      %v2743 = vadd.f32 %v2518, %v2742
      %v2744 = vpop.f32.mrb[0].mxu0
      %2745 = vmatprep.mubr.f32.mxu0 0.0
      %2746 = vmatmul.mubr.f32.gmra.mrb[0].mxu0 %v2273
      %v2747 = vpop.f32.mrb[0].mxu0
      %v2748 = vadd.f32 %v2523, %v2747
      %v2749 = vpop.f32.mrb[0].mxu0
      %2750 = vmatprep.mubr.f32.mxu0 0.0
      %2751 = vmatmul.mubr.f32.gmra.mrb[0].mxu0 %v2276
      %v2752 = vpop.f32.mrb[0].mxu0
      %v2753 = vadd.f32 %v2528, %v2752
      %v2754 = vpop.f32.mrb[0].mxu0
      %2755 = vmatprep.mubr.f32.mxu0 0.0
      %2756 = vmatmul.mubr.f32.gmra.mrb[0].mxu0 %v2279
      %v2757 = vpop.f32.mrb[0].mxu0
      %v2758 = vadd.f32 %v2533, %v2757
      %v2759 = vpop.f32.mrb[0].mxu0
      %2760 = vmatprep.mubr.f32.mxu0 0.0
      %2761 = vmatmul.mubr.f32.gmra.mrb[0].mxu0 %v2282
      %v2762 = vpop.f32.mrb[0].mxu0
      %v2763 = vadd.f32 %v2538, %v2762
      %v2764 = vpop.f32.mrb[0].mxu0
      %2765 = vmatprep.mubr.f32.mxu0 0.0
      %2766 = vmatmul.mubr.f32.gmra.mrb[0].mxu0 %v2285
      %v2767 = vpop.f32.mrb[0].mxu0
      %v2768 = vadd.f32 %v2543, %v2767
      %v2769 = vpop.f32.mrb[0].mxu0
      %2770 = vmatprep.mubr.f32.mxu0 0.0
      %2771 = vmatmul.mubr.f32.gmra.mrb[0].mxu0 %v2288
      %v2772 = vpop.f32.mrb[0].mxu0
      %v2773 = vadd.f32 %v2548, %v2772
      %v2774 = vpop.f32.mrb[0].mxu0
      %2775 = vmatprep.mubr.f32.mxu0 0.0
      %2776 = vmatmul.mubr.f32.gmra.mrb[0].mxu0 %v2291
      %v2777 = vpop.f32.mrb[0].mxu0
      %v2778 = vadd.f32 %v2553, %v2777
      %v2779 = vpop.f32.mrb[0].mxu0
      %2780 = vmatprep.mubr.f32.mxu0 0.0
      %2781 = vmatmul.mubr.f32.gmra.mrb[0].mxu0 %v2294
      %v2782 = vpop.f32.mrb[0].mxu0
      %v2783 = vadd.f32 %v2558, %v2782
      %v2784 = vpop.f32.mrb[0].mxu0
      %2785 = vmatprep.mubr.f32.mxu0 0.0
      %2786 = vmatmul.mubr.f32.gmra.mrb[0].mxu0 %v2297
      %v2787 = vpop.f32.mrb[0].mxu0
      %v2788 = vadd.f32 %v2563, %v2787
      %v2789 = vpop.f32.mrb[0].mxu0
      %2790 = vmatprep.mubr.f32.mxu0 0.0
      %2791 = vmatmul.mubr.f32.gmra.mrb[0].mxu0 %v2300
      %v2792 = vpop.f32.mrb[0].mxu0
      %v2793 = vadd.f32 %v2568, %v2792
      %v2794 = vpop.f32.mrb[0].mxu0
      %2795 = vmatprep.mubr.f32.mxu0 0.0
      %2796 = vmatmul.mubr.f32.gmra.mrb[0].mxu0 %v2303
      %v2797 = vpop.f32.mrb[0].mxu0
      %v2798 = vadd.f32 %v2573, %v2797
      %v2799 = vpop.f32.mrb[0].mxu0
      %2800 = vmatprep.mubr.f32.mxu0 0.0
      %2801 = vmatmul.mubr.f32.gmra.mrb[0].mxu0 %v2306
      %v2802 = vpop.f32.mrb[0].mxu0
      %v2803 = vadd.f32 %v2578, %v2802
      %v2804 = vpop.f32.mrb[0].mxu0
      %2805 = vdwg.mxu0
      %v2806 = vadd.f32 %v2052, %v2648
      %v2807 = vadd.f32 %v2057, %v2653
      %v2808 = vadd.f32 %v2062, %v2658
      %v2809 = vadd.f32 %v2067, %v2663
      %v2810 = vadd.f32 %v2072, %v2668
      %v2811 = vadd.f32 %v2077, %v2673
      %v2812 = vadd.f32 %v2082, %v2678
      %v2813 = vadd.f32 %v2087, %v2683
      %v2814 = vadd.f32 %v2092, %v2688
      %v2815 = vadd.f32 %v2097, %v2693
      %v2816 = vadd.f32 %v2102, %v2698
      %v2817 = vadd.f32 %v2107, %v2703
      %v2818 = vadd.f32 %v2112, %v2708
      %v2819 = vadd.f32 %v2117, %v2713
      %v2820 = vadd.f32 %v2122, %v2718
      %v2821 = vadd.f32 %v2127, %v2723
      %v2822 = vadd.f32 %v2132, %v2728
      %v2823 = vadd.f32 %v2137, %v2733
      %v2824 = vadd.f32 %v2142, %v2738
      %v2825 = vadd.f32 %v2147, %v2743
      %v2826 = vadd.f32 %v2152, %v2748
      %v2827 = vadd.f32 %v2157, %v2753
      %v2828 = vadd.f32 %v2162, %v2758
      %v2829 = vadd.f32 %v2167, %v2763
      %v2830 = vadd.f32 %v2172, %v2768
      %v2831 = vadd.f32 %v2177, %v2773
      %v2832 = vadd.f32 %v2182, %v2778
      %v2833 = vadd.f32 %v2187, %v2783
      %v2834 = vadd.f32 %v2192, %v2788
      %v2835 = vadd.f32 %v2197, %v2793
      %v2836 = vadd.f32 %v2202, %v2798
      %v2837 = vadd.f32 %v2207, %v2803
      %v2838 = vld [vmem:[%s4] sm:$0x1]
      %v2840 = vlaneseq
      %v2841 = vshrl.u32 %v2840, 7
      %v2842 = vsub.s32 0, %v2841
      %v2843 = vrot.slane %v2838, %v2842
      %v2845 = vadd.f32 %v2806, %v2843
      %v2846 = vadd.f32 %v2807, %v2843
      %v2847 = vadd.f32 %v2808, %v2843
      %v2848 = vadd.f32 %v2809, %v2843
      %v2849 = vadd.f32 %v2810, %v2843
      %v2850 = vadd.f32 %v2811, %v2843
      %v2851 = vadd.f32 %v2812, %v2843
      %v2852 = vadd.f32 %v2813, %v2843
      %v2853 = vadd.f32 %v2814, %v2843
      %v2854 = vadd.f32 %v2815, %v2843
      %v2855 = vadd.f32 %v2816, %v2843
      %v2856 = vadd.f32 %v2817, %v2843
      %v2857 = vadd.f32 %v2818, %v2843
      %v2858 = vadd.f32 %v2819, %v2843
      %v2859 = vadd.f32 %v2820, %v2843
      %v2860 = vadd.f32 %v2821, %v2843
      %v2861 = vadd.f32 %v2822, %v2843
      %v2862 = vadd.f32 %v2823, %v2843
      %v2863 = vadd.f32 %v2824, %v2843
      %v2864 = vadd.f32 %v2825, %v2843
      %v2865 = vadd.f32 %v2826, %v2843
      %v2866 = vadd.f32 %v2827, %v2843
      %v2867 = vadd.f32 %v2828, %v2843
      %v2868 = vadd.f32 %v2829, %v2843
      %v2869 = vadd.f32 %v2830, %v2843
      %v2870 = vadd.f32 %v2831, %v2843
      %v2871 = vadd.f32 %v2832, %v2843
      %v2872 = vadd.f32 %v2833, %v2843
      %v2873 = vadd.f32 %v2834, %v2843
      %v2874 = vadd.f32 %v2835, %v2843
      %v2875 = vadd.f32 %v2836, %v2843
      %v2876 = vadd.f32 %v2837, %v2843
      %v2877 = vmax.f32 %v2845, 0.0
      %v2878 = vmax.f32 %v2846, 0.0
      %v2879 = vmax.f32 %v2847, 0.0
      %v2880 = vmax.f32 %v2848, 0.0
      %v2881 = vmax.f32 %v2849, 0.0
      %v2882 = vmax.f32 %v2850, 0.0
      %v2883 = vmax.f32 %v2851, 0.0
      %v2884 = vmax.f32 %v2852, 0.0
      %v2885 = vmax.f32 %v2853, 0.0
      %v2886 = vmax.f32 %v2854, 0.0
      %v2887 = vmax.f32 %v2855, 0.0
      %v2888 = vmax.f32 %v2856, 0.0
      %v2889 = vmax.f32 %v2857, 0.0
      %v2890 = vmax.f32 %v2858, 0.0
      %v2891 = vmax.f32 %v2859, 0.0
      %v2892 = vmax.f32 %v2860, 0.0
      %v2893 = vmax.f32 %v2861, 0.0
      %v2894 = vmax.f32 %v2862, 0.0
      %v2895 = vmax.f32 %v2863, 0.0
      %v2896 = vmax.f32 %v2864, 0.0
      %v2897 = vmax.f32 %v2865, 0.0
      %v2898 = vmax.f32 %v2866, 0.0
      %v2899 = vmax.f32 %v2867, 0.0
      %v2900 = vmax.f32 %v2868, 0.0
      %v2901 = vmax.f32 %v2869, 0.0
      %v2902 = vmax.f32 %v2870, 0.0
      %v2903 = vmax.f32 %v2871, 0.0
      %v2904 = vmax.f32 %v2872, 0.0
      %v2905 = vmax.f32 %v2873, 0.0
      %v2906 = vmax.f32 %v2874, 0.0
      %v2907 = vmax.f32 %v2875, 0.0
      %v2908 = vmax.f32 %v2876, 0.0
      %v2909 = vld [vmem:[%s5] sm:$0xff]
      %v2910 = vld [vmem:[%s5 + $0x8] sm:$0xff]
      %v2911 = vld [vmem:[%s5 + $0x10] sm:$0xff]
      %v2912 = vld [vmem:[%s5 + $0x18] sm:$0xff]
      %v2913 = vld [vmem:[%s5 + $0x20] sm:$0xff]
      %v2914 = vld [vmem:[%s5 + $0x28] sm:$0xff]
      %v2915 = vld [vmem:[%s5 + $0x30] sm:$0xff]
      %v2916 = vld [vmem:[%s5 + $0x38] sm:$0xff]
      %v2917 = vld [vmem:[%s5 + $0x40] sm:$0xff]
      %v2918 = vld [vmem:[%s5 + $0x48] sm:$0xff]
      %v2919 = vld [vmem:[%s5 + $0x50] sm:$0xff]
      %v2920 = vld [vmem:[%s5 + $0x58] sm:$0xff]
      %v2921 = vld [vmem:[%s5 + $0x60] sm:$0xff]
      %v2922 = vld [vmem:[%s5 + $0x68] sm:$0xff]
      %v2923 = vld [vmem:[%s5 + $0x70] sm:$0xff]
      %v2924 = vld [vmem:[%s5 + $0x78] sm:$0xff]
      %v2925 = vld [vmem:[%s6] sm:$0x1]
      %v2927 = vlaneseq
      %v2928 = vshrl.u32 %v2927, 7
      %v2929 = vsub.s32 0, %v2928
      %v2930 = vrot.slane %v2925, %v2929
      %2932 = vmatprep.subr.mxu0 0.0
      %2933 = vmatpush1.msra.mxu0 %v2909
      %2934 = vmatprep.subr.mxu0 0.0
      %2935 = vmatpush1.msra.mxu0 %v2910
      %2936 = vmatprep.subr.mxu0 0.0
      %2937 = vmatpush1.msra.mxu0 %v2911
      %2938 = vmatprep.subr.mxu0 0.0
      %2939 = vmatpush1.msra.mxu0 %v2912
      %2940 = vmatprep.subr.mxu0 0.0
      %2941 = vmatpush1.msra.mxu0 %v2913
      %2942 = vmatprep.subr.mxu0 0.0
      %2943 = vmatpush1.msra.mxu0 %v2914
      %2944 = vmatprep.subr.mxu0 0.0
      %2945 = vmatpush1.msra.mxu0 %v2915
      %2946 = vmatprep.subr.mxu0 0.0
      %2947 = vmatpush1.msra.mxu0 %v2916
      %2948 = vmatprep.subr.mxu0 0.0
      %2949 = vmatpush1.msra.mxu0 %v2917
      %2950 = vmatprep.subr.mxu0 0.0
      %2951 = vmatpush1.msra.mxu0 %v2918
      %2952 = vmatprep.subr.mxu0 0.0
      %2953 = vmatpush1.msra.mxu0 %v2919
      %2954 = vmatprep.subr.mxu0 0.0
      %2955 = vmatpush1.msra.mxu0 %v2920
      %2956 = vmatprep.subr.mxu0 0.0
      %2957 = vmatpush1.msra.mxu0 %v2921
      %2958 = vmatprep.subr.mxu0 0.0
      %2959 = vmatpush1.msra.mxu0 %v2922
      %2960 = vmatprep.subr.mxu0 0.0
      %2961 = vmatpush1.msra.mxu0 %v2923
      %2962 = vmatprep.subr.mxu0 0.0
      %2963 = vmatpush1.msra.mxu0 %v2924
      %2964 = vmatprep.subr.mxu0 0.0
      %2965 = vmatpush1.msra.mxu0 0.0
      %2966 = vmatprep.subr.mxu0 0.0
      %2967 = vmatpush1.msra.mxu0 0.0
      %2968 = vmatprep.subr.mxu0 0.0
      %2969 = vmatpush1.msra.mxu0 0.0
      %2970 = vmatprep.subr.mxu0 0.0
      %2971 = vmatpush1.msra.mxu0 0.0
      %2972 = vmatprep.subr.mxu0 0.0
      %2973 = vmatpush1.msra.mxu0 0.0
      %2974 = vmatprep.subr.mxu0 0.0
      %2975 = vmatpush1.msra.mxu0 0.0
      %2976 = vmatprep.subr.mxu0 0.0
      %2977 = vmatpush1.msra.mxu0 0.0
      %2978 = vmatprep.subr.mxu0 0.0
      %2979 = vmatpush1.msra.mxu0 0.0
      %2980 = vmatprep.subr.mxu0 0.0
      %2981 = vmatpush1.msra.mxu0 0.0
      %2982 = vmatprep.subr.mxu0 0.0
      %2983 = vmatpush1.msra.mxu0 0.0
      %2984 = vmatprep.subr.mxu0 0.0
      %2985 = vmatpush1.msra.mxu0 0.0
      %2986 = vmatprep.subr.mxu0 0.0
      %2987 = vmatpush1.msra.mxu0 0.0
      %2988 = vmatprep.subr.mxu0 0.0
      %2989 = vmatpush1.msra.mxu0 0.0
      %2990 = vmatprep.subr.mxu0 0.0
      %2991 = vmatpush1.msra.mxu0 0.0
      %2992 = vmatprep.subr.mxu0 0.0
      %2993 = vmatpush1.msra.mxu0 0.0
      %2994 = vmatprep.subr.mxu0 0.0
      %2995 = vmatpush1.msra.mxu0 0.0
      %2996 = vmatprep.mubr.f32.mxu0 0.0
      %2997 = vmatmul.mubr.f32.gmra.mrb[0].mxu0 %v2877
      %v2998 = vpop.f32.mrb[0].mxu0
      %v2999 = vadd.f32 %v2930, %v2998
      %v3000 = vpop.f32.mrb[0].mxu0
      %3001 = vmatprep.mubr.f32.mxu0 0.0
      %3002 = vmatmul.mubr.f32.gmra.mrb[0].mxu0 %v2878
      %v3003 = vpop.f32.mrb[0].mxu0
      %v3004 = vadd.f32 %v2930, %v3003
      %v3005 = vpop.f32.mrb[0].mxu0
      %3006 = vmatprep.mubr.f32.mxu0 0.0
      %3007 = vmatmul.mubr.f32.gmra.mrb[0].mxu0 %v2879
      %v3008 = vpop.f32.mrb[0].mxu0
      %v3009 = vadd.f32 %v2930, %v3008
      %v3010 = vpop.f32.mrb[0].mxu0
      %3011 = vmatprep.mubr.f32.mxu0 0.0
      %3012 = vmatmul.mubr.f32.gmra.mrb[0].mxu0 %v2880
      %v3013 = vpop.f32.mrb[0].mxu0
      %v3014 = vadd.f32 %v2930, %v3013
      %v3015 = vpop.f32.mrb[0].mxu0
      %3016 = vmatprep.mubr.f32.mxu0 0.0
      %3017 = vmatmul.mubr.f32.gmra.mrb[0].mxu0 %v2881
      %v3018 = vpop.f32.mrb[0].mxu0
      %v3019 = vadd.f32 %v2930, %v3018
      %v3020 = vpop.f32.mrb[0].mxu0
      %3021 = vmatprep.mubr.f32.mxu0 0.0
      %3022 = vmatmul.mubr.f32.gmra.mrb[0].mxu0 %v2882
      %v3023 = vpop.f32.mrb[0].mxu0
      %v3024 = vadd.f32 %v2930, %v3023
      %v3025 = vpop.f32.mrb[0].mxu0
      %3026 = vmatprep.mubr.f32.mxu0 0.0
      %3027 = vmatmul.mubr.f32.gmra.mrb[0].mxu0 %v2883
      %v3028 = vpop.f32.mrb[0].mxu0
      %v3029 = vadd.f32 %v2930, %v3028
      %v3030 = vpop.f32.mrb[0].mxu0
      %3031 = vmatprep.mubr.f32.mxu0 0.0
      %3032 = vmatmul.mubr.f32.gmra.mrb[0].mxu0 %v2884
      %v3033 = vpop.f32.mrb[0].mxu0
      %v3034 = vadd.f32 %v2930, %v3033
      %v3035 = vpop.f32.mrb[0].mxu0
      %3036 = vmatprep.mubr.f32.mxu0 0.0
      %3037 = vmatmul.mubr.f32.gmra.mrb[0].mxu0 %v2885
      %v3038 = vpop.f32.mrb[0].mxu0
      %v3039 = vadd.f32 %v2930, %v3038
      %v3040 = vpop.f32.mrb[0].mxu0
      %3041 = vmatprep.mubr.f32.mxu0 0.0
      %3042 = vmatmul.mubr.f32.gmra.mrb[0].mxu0 %v2886
      %v3043 = vpop.f32.mrb[0].mxu0
      %v3044 = vadd.f32 %v2930, %v3043
      %v3045 = vpop.f32.mrb[0].mxu0
      %3046 = vmatprep.mubr.f32.mxu0 0.0
      %3047 = vmatmul.mubr.f32.gmra.mrb[0].mxu0 %v2887
      %v3048 = vpop.f32.mrb[0].mxu0
      %v3049 = vadd.f32 %v2930, %v3048
      %v3050 = vpop.f32.mrb[0].mxu0
      %3051 = vmatprep.mubr.f32.mxu0 0.0
      %3052 = vmatmul.mubr.f32.gmra.mrb[0].mxu0 %v2888
      %v3053 = vpop.f32.mrb[0].mxu0
      %v3054 = vadd.f32 %v2930, %v3053
      %v3055 = vpop.f32.mrb[0].mxu0
      %3056 = vmatprep.mubr.f32.mxu0 0.0
      %3057 = vmatmul.mubr.f32.gmra.mrb[0].mxu0 %v2889
      %v3058 = vpop.f32.mrb[0].mxu0
      %v3059 = vadd.f32 %v2930, %v3058
      %v3060 = vpop.f32.mrb[0].mxu0
      %3061 = vmatprep.mubr.f32.mxu0 0.0
      %3062 = vmatmul.mubr.f32.gmra.mrb[0].mxu0 %v2890
      %v3063 = vpop.f32.mrb[0].mxu0
      %v3064 = vadd.f32 %v2930, %v3063
      %v3065 = vpop.f32.mrb[0].mxu0
      %3066 = vmatprep.mubr.f32.mxu0 0.0
      %3067 = vmatmul.mubr.f32.gmra.mrb[0].mxu0 %v2891
      %v3068 = vpop.f32.mrb[0].mxu0
      %v3069 = vadd.f32 %v2930, %v3068
      %v3070 = vpop.f32.mrb[0].mxu0
      %3071 = vmatprep.mubr.f32.mxu0 0.0
      %3072 = vmatmul.mubr.f32.gmra.mrb[0].mxu0 %v2892
      %v3073 = vpop.f32.mrb[0].mxu0
      %v3074 = vadd.f32 %v2930, %v3073
      %v3075 = vpop.f32.mrb[0].mxu0
      %3076 = vmatprep.mubr.f32.mxu0 0.0
      %3077 = vmatmul.mubr.f32.gmra.mrb[0].mxu0 %v2893
      %v3078 = vpop.f32.mrb[0].mxu0
      %v3079 = vadd.f32 %v2930, %v3078
      %v3080 = vpop.f32.mrb[0].mxu0
      %3081 = vmatprep.mubr.f32.mxu0 0.0
      %3082 = vmatmul.mubr.f32.gmra.mrb[0].mxu0 %v2894
      %v3083 = vpop.f32.mrb[0].mxu0
      %v3084 = vadd.f32 %v2930, %v3083
      %v3085 = vpop.f32.mrb[0].mxu0
      %3086 = vmatprep.mubr.f32.mxu0 0.0
      %3087 = vmatmul.mubr.f32.gmra.mrb[0].mxu0 %v2895
      %v3088 = vpop.f32.mrb[0].mxu0
      %v3089 = vadd.f32 %v2930, %v3088
      %v3090 = vpop.f32.mrb[0].mxu0
      %3091 = vmatprep.mubr.f32.mxu0 0.0
      %3092 = vmatmul.mubr.f32.gmra.mrb[0].mxu0 %v2896
      %v3093 = vpop.f32.mrb[0].mxu0
      %v3094 = vadd.f32 %v2930, %v3093
      %v3095 = vpop.f32.mrb[0].mxu0
      %3096 = vmatprep.mubr.f32.mxu0 0.0
      %3097 = vmatmul.mubr.f32.gmra.mrb[0].mxu0 %v2897
      %v3098 = vpop.f32.mrb[0].mxu0
      %v3099 = vadd.f32 %v2930, %v3098
      %v3100 = vpop.f32.mrb[0].mxu0
      %3101 = vmatprep.mubr.f32.mxu0 0.0
      %3102 = vmatmul.mubr.f32.gmra.mrb[0].mxu0 %v2898
      %v3103 = vpop.f32.mrb[0].mxu0
      %v3104 = vadd.f32 %v2930, %v3103
      %v3105 = vpop.f32.mrb[0].mxu0
      %3106 = vmatprep.mubr.f32.mxu0 0.0
      %3107 = vmatmul.mubr.f32.gmra.mrb[0].mxu0 %v2899
      %v3108 = vpop.f32.mrb[0].mxu0
      %v3109 = vadd.f32 %v2930, %v3108
      %v3110 = vpop.f32.mrb[0].mxu0
      %3111 = vmatprep.mubr.f32.mxu0 0.0
      %3112 = vmatmul.mubr.f32.gmra.mrb[0].mxu0 %v2900
      %v3113 = vpop.f32.mrb[0].mxu0
      %v3114 = vadd.f32 %v2930, %v3113
      %v3115 = vpop.f32.mrb[0].mxu0
      %3116 = vmatprep.mubr.f32.mxu0 0.0
      %3117 = vmatmul.mubr.f32.gmra.mrb[0].mxu0 %v2901
      %v3118 = vpop.f32.mrb[0].mxu0
      %v3119 = vadd.f32 %v2930, %v3118
      %v3120 = vpop.f32.mrb[0].mxu0
      %3121 = vmatprep.mubr.f32.mxu0 0.0
      %3122 = vmatmul.mubr.f32.gmra.mrb[0].mxu0 %v2902
      %v3123 = vpop.f32.mrb[0].mxu0
      %v3124 = vadd.f32 %v2930, %v3123
      %v3125 = vpop.f32.mrb[0].mxu0
      %3126 = vmatprep.mubr.f32.mxu0 0.0
      %3127 = vmatmul.mubr.f32.gmra.mrb[0].mxu0 %v2903
      %v3128 = vpop.f32.mrb[0].mxu0
      %v3129 = vadd.f32 %v2930, %v3128
      %v3130 = vpop.f32.mrb[0].mxu0
      %3131 = vmatprep.mubr.f32.mxu0 0.0
      %3132 = vmatmul.mubr.f32.gmra.mrb[0].mxu0 %v2904
      %v3133 = vpop.f32.mrb[0].mxu0
      %v3134 = vadd.f32 %v2930, %v3133
      %v3135 = vpop.f32.mrb[0].mxu0
      %3136 = vmatprep.mubr.f32.mxu0 0.0
      %3137 = vmatmul.mubr.f32.gmra.mrb[0].mxu0 %v2905
      %v3138 = vpop.f32.mrb[0].mxu0
      %v3139 = vadd.f32 %v2930, %v3138
      %v3140 = vpop.f32.mrb[0].mxu0
      %3141 = vmatprep.mubr.f32.mxu0 0.0
      %3142 = vmatmul.mubr.f32.gmra.mrb[0].mxu0 %v2906
      %v3143 = vpop.f32.mrb[0].mxu0
      %v3144 = vadd.f32 %v2930, %v3143
      %v3145 = vpop.f32.mrb[0].mxu0
      %3146 = vmatprep.mubr.f32.mxu0 0.0
      %3147 = vmatmul.mubr.f32.gmra.mrb[0].mxu0 %v2907
      %v3148 = vpop.f32.mrb[0].mxu0
      %v3149 = vadd.f32 %v2930, %v3148
      %v3150 = vpop.f32.mrb[0].mxu0
      %3151 = vmatprep.mubr.f32.mxu0 0.0
      %3152 = vmatmul.mubr.f32.gmra.mrb[0].mxu0 %v2908
      %v3153 = vpop.f32.mrb[0].mxu0
      %v3154 = vadd.f32 %v2930, %v3153
      %v3155 = vpop.f32.mrb[0].mxu0
      %3156 = vdwg.mxu0
      %v3157 = vadd.f32 %v2999, %v3004
      %v3158 = vadd.f32 %v3157, %v3009
      %v3159 = vadd.f32 %v3158, %v3014
      %v3160 = vadd.f32 %v3159, %v3019
      %v3161 = vadd.f32 %v3160, %v3024
      %v3162 = vadd.f32 %v3161, %v3029
      %v3163 = vadd.f32 %v3162, %v3034
      %v3164 = vadd.f32 %v3163, %v3039
      %v3165 = vadd.f32 %v3164, %v3044
      %v3166 = vadd.f32 %v3165, %v3049
      %v3167 = vadd.f32 %v3166, %v3054
      %v3168 = vadd.f32 %v3167, %v3059
      %v3169 = vadd.f32 %v3168, %v3064
      %v3170 = vadd.f32 %v3169, %v3069
      %v3171 = vadd.f32 %v3170, %v3074
      %v3172 = vadd.f32 %v3171, %v3079
      %v3173 = vadd.f32 %v3172, %v3084
      %v3174 = vadd.f32 %v3173, %v3089
      %v3175 = vadd.f32 %v3174, %v3094
      %v3176 = vadd.f32 %v3175, %v3099
      %v3177 = vadd.f32 %v3176, %v3104
      %v3178 = vadd.f32 %v3177, %v3109
      %v3179 = vadd.f32 %v3178, %v3114
      %v3180 = vadd.f32 %v3179, %v3119
      %v3181 = vadd.f32 %v3180, %v3124
      %v3182 = vadd.f32 %v3181, %v3129
      %v3183 = vadd.f32 %v3182, %v3134
      %v3184 = vadd.f32 %v3183, %v3139
      %v3185 = vadd.f32 %v3184, %v3144
      %v3186 = vadd.f32 %v3185, %v3149
      %v3187 = vadd.f32 %v3186, %v3154
      %v3188 = vrot.slane %v3187, 4
      %v3189 = vadd.f32 %v3187, %v3188
      %v3190 = vrot.slane %v3189, 2
      %v3191 = vadd.f32 %v3189, %v3190
      %v3192 = vrot.slane %v3191, 1
      %v3193 = vadd.f32 %v3191, %v3192
      %v3194 = vrcp.pop 256.0
      %v3195 = vmul.f32 %v3193, %v3194
      %v3196 = vld [vmem:[%s7] sm:$0xff]
      %v3197 = vld [vmem:[%s7 + $0x8] sm:$0xff]
      %v3198 = vld [vmem:[%s7 + $0x10] sm:$0xff]
      %v3199 = vld [vmem:[%s7 + $0x18] sm:$0xff]
      %v3200 = vld [vmem:[%s7 + $0x20] sm:$0xff]
      %v3201 = vld [vmem:[%s7 + $0x28] sm:$0xff]
      %v3202 = vld [vmem:[%s7 + $0x30] sm:$0xff]
      %v3203 = vld [vmem:[%s7 + $0x38] sm:$0xff]
      %v3204 = vld [vmem:[%s7 + $0x40] sm:$0xff]
      %v3205 = vld [vmem:[%s7 + $0x48] sm:$0xff]
      %v3206 = vld [vmem:[%s7 + $0x50] sm:$0xff]
      %v3207 = vld [vmem:[%s7 + $0x58] sm:$0xff]
      %v3208 = vld [vmem:[%s7 + $0x60] sm:$0xff]
      %v3209 = vld [vmem:[%s7 + $0x68] sm:$0xff]
      %v3210 = vld [vmem:[%s7 + $0x70] sm:$0xff]
      %v3211 = vld [vmem:[%s7 + $0x78] sm:$0xff]
      %3212 = vmatprep.subr.mxu0 0.0
      %3213 = vmatpush1.msra.mxu0 %v3196
      %3214 = vmatprep.subr.mxu0 0.0
      %3215 = vmatpush1.msra.mxu0 %v3197
      %3216 = vmatprep.subr.mxu0 0.0
      %3217 = vmatpush1.msra.mxu0 %v3198
      %3218 = vmatprep.subr.mxu0 0.0
      %3219 = vmatpush1.msra.mxu0 %v3199
      %3220 = vmatprep.subr.mxu0 0.0
      %3221 = vmatpush1.msra.mxu0 %v3200
      %3222 = vmatprep.subr.mxu0 0.0
      %3223 = vmatpush1.msra.mxu0 %v3201
      %3224 = vmatprep.subr.mxu0 0.0
      %3225 = vmatpush1.msra.mxu0 %v3202
      %3226 = vmatprep.subr.mxu0 0.0
      %3227 = vmatpush1.msra.mxu0 %v3203
      %3228 = vmatprep.subr.mxu0 0.0
      %3229 = vmatpush1.msra.mxu0 %v3204
      %3230 = vmatprep.subr.mxu0 0.0
      %3231 = vmatpush1.msra.mxu0 %v3205
      %3232 = vmatprep.subr.mxu0 0.0
      %3233 = vmatpush1.msra.mxu0 %v3206
      %3234 = vmatprep.subr.mxu0 0.0
      %3235 = vmatpush1.msra.mxu0 %v3207
      %3236 = vmatprep.subr.mxu0 0.0
      %3237 = vmatpush1.msra.mxu0 %v3208
      %3238 = vmatprep.subr.mxu0 0.0
      %3239 = vmatpush1.msra.mxu0 %v3209
      %3240 = vmatprep.subr.mxu0 0.0
      %3241 = vmatpush1.msra.mxu0 %v3210
      %3242 = vmatprep.subr.mxu0 0.0
      %3243 = vmatpush1.msra.mxu0 %v3211
      %3244 = vmatprep.subr.mxu0 0.0
      %3245 = vmatpush1.msra.mxu0 0.0
      %3246 = vmatprep.subr.mxu0 0.0
      %3247 = vmatpush1.msra.mxu0 0.0
      %3248 = vmatprep.subr.mxu0 0.0
      %3249 = vmatpush1.msra.mxu0 0.0
      %3250 = vmatprep.subr.mxu0 0.0
      %3251 = vmatpush1.msra.mxu0 0.0
      %3252 = vmatprep.subr.mxu0 0.0
      %3253 = vmatpush1.msra.mxu0 0.0
      %3254 = vmatprep.subr.mxu0 0.0
      %3255 = vmatpush1.msra.mxu0 0.0
      %3256 = vmatprep.subr.mxu0 0.0
      %3257 = vmatpush1.msra.mxu0 0.0
      %3258 = vmatprep.subr.mxu0 0.0
      %3259 = vmatpush1.msra.mxu0 0.0
      %3260 = vmatprep.subr.mxu0 0.0
      %3261 = vmatpush1.msra.mxu0 0.0
      %3262 = vmatprep.subr.mxu0 0.0
      %3263 = vmatpush1.msra.mxu0 0.0
      %3264 = vmatprep.subr.mxu0 0.0
      %3265 = vmatpush1.msra.mxu0 0.0
      %3266 = vmatprep.subr.mxu0 0.0
      %3267 = vmatpush1.msra.mxu0 0.0
      %3268 = vmatprep.subr.mxu0 0.0
      %3269 = vmatpush1.msra.mxu0 0.0
      %3270 = vmatprep.subr.mxu0 0.0
      %3271 = vmatpush1.msra.mxu0 0.0
      %3272 = vmatprep.subr.mxu0 0.0
      %3273 = vmatpush1.msra.mxu0 0.0
      %3274 = vmatprep.subr.mxu0 0.0
      %3275 = vmatpush1.msra.mxu0 0.0
      %3276 = vmatprep.mubr.f32.mxu0 0.0
      %3277 = vmatmul.mubr.f32.gmra.mrb[0].mxu0 %v3195
      %v3278 = vpop.f32.mrb[0].mxu0
      %v3279 = vadd.f32 0.0, %v3278
      %v3280 = vpop.f32.mrb[0].mxu0
      %3281 = vdwg.mxu0
      %v3282 = vmax.f32 %v3279, 0.0
      %v3283 = vld [vmem:[%s8] sm:$0xff]
      %v3284 = vld [vmem:[%s8 + $0x8] sm:$0xff]
      %v3285 = vld [vmem:[%s8 + $0x10] sm:$0xff]
      %v3286 = vld [vmem:[%s8 + $0x18] sm:$0xff]
      %v3287 = vld [vmem:[%s8 + $0x20] sm:$0xff]
      %v3288 = vld [vmem:[%s8 + $0x28] sm:$0xff]
      %v3289 = vld [vmem:[%s8 + $0x30] sm:$0xff]
      %v3290 = vld [vmem:[%s8 + $0x38] sm:$0xff]
      %v3291 = vld [vmem:[%s8 + $0x40] sm:$0xff]
      %v3292 = vld [vmem:[%s8 + $0x48] sm:$0xff]
      %v3293 = vld [vmem:[%s8 + $0x50] sm:$0xff]
      %v3294 = vld [vmem:[%s8 + $0x58] sm:$0xff]
      %v3295 = vld [vmem:[%s8 + $0x60] sm:$0xff]
      %v3296 = vld [vmem:[%s8 + $0x68] sm:$0xff]
      %v3297 = vld [vmem:[%s8 + $0x70] sm:$0xff]
      %v3298 = vld [vmem:[%s8 + $0x78] sm:$0xff]
      %3299 = vmatprep.subr.mxu0 0.0
      %3300 = vmatpush1.msra.mxu0 %v3283
      %3301 = vmatprep.subr.mxu0 0.0
      %3302 = vmatpush1.msra.mxu0 %v3284
      %3303 = vmatprep.subr.mxu0 0.0
      %3304 = vmatpush1.msra.mxu0 %v3285
      %3305 = vmatprep.subr.mxu0 0.0
      %3306 = vmatpush1.msra.mxu0 %v3286
      %3307 = vmatprep.subr.mxu0 0.0
      %3308 = vmatpush1.msra.mxu0 %v3287
      %3309 = vmatprep.subr.mxu0 0.0
      %3310 = vmatpush1.msra.mxu0 %v3288
      %3311 = vmatprep.subr.mxu0 0.0
      %3312 = vmatpush1.msra.mxu0 %v3289
      %3313 = vmatprep.subr.mxu0 0.0
      %3314 = vmatpush1.msra.mxu0 %v3290
      %3315 = vmatprep.subr.mxu0 0.0
      %3316 = vmatpush1.msra.mxu0 %v3291
      %3317 = vmatprep.subr.mxu0 0.0
      %3318 = vmatpush1.msra.mxu0 %v3292
      %3319 = vmatprep.subr.mxu0 0.0
      %3320 = vmatpush1.msra.mxu0 %v3293
      %3321 = vmatprep.subr.mxu0 0.0
      %3322 = vmatpush1.msra.mxu0 %v3294
      %3323 = vmatprep.subr.mxu0 0.0
      %3324 = vmatpush1.msra.mxu0 %v3295
      %3325 = vmatprep.subr.mxu0 0.0
      %3326 = vmatpush1.msra.mxu0 %v3296
      %3327 = vmatprep.subr.mxu0 0.0
      %3328 = vmatpush1.msra.mxu0 %v3297
      %3329 = vmatprep.subr.mxu0 0.0
      %3330 = vmatpush1.msra.mxu0 %v3298
      %3331 = vmatprep.subr.mxu0 0.0
      %3332 = vmatpush1.msra.mxu0 0.0
      %3333 = vmatprep.subr.mxu0 0.0
      %3334 = vmatpush1.msra.mxu0 0.0
      %3335 = vmatprep.subr.mxu0 0.0
      %3336 = vmatpush1.msra.mxu0 0.0
      %3337 = vmatprep.subr.mxu0 0.0
      %3338 = vmatpush1.msra.mxu0 0.0
      %3339 = vmatprep.subr.mxu0 0.0
      %3340 = vmatpush1.msra.mxu0 0.0
      %3341 = vmatprep.subr.mxu0 0.0
      %3342 = vmatpush1.msra.mxu0 0.0
      %3343 = vmatprep.subr.mxu0 0.0
      %3344 = vmatpush1.msra.mxu0 0.0
      %3345 = vmatprep.subr.mxu0 0.0
      %3346 = vmatpush1.msra.mxu0 0.0
      %3347 = vmatprep.subr.mxu0 0.0
      %3348 = vmatpush1.msra.mxu0 0.0
      %3349 = vmatprep.subr.mxu0 0.0
      %3350 = vmatpush1.msra.mxu0 0.0
      %3351 = vmatprep.subr.mxu0 0.0
      %3352 = vmatpush1.msra.mxu0 0.0
      %3353 = vmatprep.subr.mxu0 0.0
      %3354 = vmatpush1.msra.mxu0 0.0
      %3355 = vmatprep.subr.mxu0 0.0
      %3356 = vmatpush1.msra.mxu0 0.0
      %3357 = vmatprep.subr.mxu0 0.0
      %3358 = vmatpush1.msra.mxu0 0.0
      %3359 = vmatprep.subr.mxu0 0.0
      %3360 = vmatpush1.msra.mxu0 0.0
      %3361 = vmatprep.subr.mxu0 0.0
      %3362 = vmatpush1.msra.mxu0 0.0
      %3363 = vmatprep.mubr.f32.mxu0 0.0
      %3364 = vmatmul.mubr.f32.gmra.mrb[0].mxu0 %v3282
      %v3365 = vpop.f32.mrb[0].mxu0
      %v3366 = vadd.f32 0.0, %v3365
      %v3367 = vpop.f32.mrb[0].mxu0
      %3368 = vdwg.mxu0
      %v3369 = vxor.u32 %v3366, 2147483648
      %v3370 = vmul.f32 %v3369, 1.442695
      %v3371 = vpow.pop %v3370
      %v3372 = vadd.f32 %v3371, 1.0
      %v3373 = vrcp.pop %v3372
      %v3374 = vmul.f32 1.0, %v3373
      %v3375 = vlaneseq
      %v3376 = vshrl.u32 %v3375, 7
      %v3377 = vsub.s32 0, %v3376
      %v3378 = vrot.slane %v3374, %v3377
      %v3379 = vmul.f32 %v2999, %v3378
      %v3380 = vmul.f32 %v3004, %v3378
      %v3381 = vmul.f32 %v3009, %v3378
      %v3382 = vmul.f32 %v3014, %v3378
      %v3383 = vmul.f32 %v3019, %v3378
      %v3384 = vmul.f32 %v3024, %v3378
      %v3385 = vmul.f32 %v3029, %v3378
      %v3386 = vmul.f32 %v3034, %v3378
      %v3387 = vmul.f32 %v3039, %v3378
      %v3388 = vmul.f32 %v3044, %v3378
      %v3389 = vmul.f32 %v3049, %v3378
      %v3390 = vmul.f32 %v3054, %v3378
      %v3391 = vmul.f32 %v3059, %v3378
      %v3392 = vmul.f32 %v3064, %v3378
      %v3393 = vmul.f32 %v3069, %v3378
      %v3394 = vmul.f32 %v3074, %v3378
      %v3395 = vmul.f32 %v3079, %v3378
      %v3396 = vmul.f32 %v3084, %v3378
      %v3397 = vmul.f32 %v3089, %v3378
      %v3398 = vmul.f32 %v3094, %v3378
      %v3399 = vmul.f32 %v3099, %v3378
      %v3400 = vmul.f32 %v3104, %v3378
      %v3401 = vmul.f32 %v3109, %v3378
      %v3402 = vmul.f32 %v3114, %v3378
      %v3403 = vmul.f32 %v3119, %v3378
      %v3404 = vmul.f32 %v3124, %v3378
      %v3405 = vmul.f32 %v3129, %v3378
      %v3406 = vmul.f32 %v3134, %v3378
      %v3407 = vmul.f32 %v3139, %v3378
      %v3408 = vmul.f32 %v3144, %v3378
      %v3409 = vmul.f32 %v3149, %v3378
      %v3410 = vmul.f32 %v3154, %v3378
      %v3411 = vld [vmem:[%s9] sm:$0xff]
      %v3412 = vld [vmem:[%s9 + $0x8] sm:$0xff]
      %v3413 = vld [vmem:[%s9 + $0x10] sm:$0xff]
      %v3414 = vld [vmem:[%s9 + $0x18] sm:$0xff]
      %v3415 = vld [vmem:[%s9 + $0x20] sm:$0xff]
      %v3416 = vld [vmem:[%s9 + $0x28] sm:$0xff]
      %v3417 = vld [vmem:[%s9 + $0x30] sm:$0xff]
      %v3418 = vld [vmem:[%s9 + $0x38] sm:$0xff]
      %v3419 = vld [vmem:[%s9 + $0x40] sm:$0xff]
      %v3420 = vld [vmem:[%s9 + $0x48] sm:$0xff]
      %v3421 = vld [vmem:[%s9 + $0x50] sm:$0xff]
      %v3422 = vld [vmem:[%s9 + $0x58] sm:$0xff]
      %v3423 = vld [vmem:[%s9 + $0x60] sm:$0xff]
      %v3424 = vld [vmem:[%s9 + $0x68] sm:$0xff]
      %v3425 = vld [vmem:[%s9 + $0x70] sm:$0xff]
      %v3426 = vld [vmem:[%s9 + $0x78] sm:$0xff]
      %v3427 = vld [vmem:[%s10] sm:$0x1]
      %v3429 = vlaneseq
      %v3430 = vshrl.u32 %v3429, 7
      %v3431 = vsub.s32 0, %v3430
      %v3432 = vrot.slane %v3427, %v3431
      %3434 = vmatprep.subr.mxu0 0.0
      %3435 = vmatpush1.msra.mxu0 %v3411
      %3436 = vmatprep.subr.mxu0 0.0
      %3437 = vmatpush1.msra.mxu0 %v3412
      %3438 = vmatprep.subr.mxu0 0.0
      %3439 = vmatpush1.msra.mxu0 %v3413
      %3440 = vmatprep.subr.mxu0 0.0
      %3441 = vmatpush1.msra.mxu0 %v3414
      %3442 = vmatprep.subr.mxu0 0.0
      %3443 = vmatpush1.msra.mxu0 %v3415
      %3444 = vmatprep.subr.mxu0 0.0
      %3445 = vmatpush1.msra.mxu0 %v3416
      %3446 = vmatprep.subr.mxu0 0.0
      %3447 = vmatpush1.msra.mxu0 %v3417
      %3448 = vmatprep.subr.mxu0 0.0
      %3449 = vmatpush1.msra.mxu0 %v3418
      %3450 = vmatprep.subr.mxu0 0.0
      %3451 = vmatpush1.msra.mxu0 %v3419
      %3452 = vmatprep.subr.mxu0 0.0
      %3453 = vmatpush1.msra.mxu0 %v3420
      %3454 = vmatprep.subr.mxu0 0.0
      %3455 = vmatpush1.msra.mxu0 %v3421
      %3456 = vmatprep.subr.mxu0 0.0
      %3457 = vmatpush1.msra.mxu0 %v3422
      %3458 = vmatprep.subr.mxu0 0.0
      %3459 = vmatpush1.msra.mxu0 %v3423
      %3460 = vmatprep.subr.mxu0 0.0
      %3461 = vmatpush1.msra.mxu0 %v3424
      %3462 = vmatprep.subr.mxu0 0.0
      %3463 = vmatpush1.msra.mxu0 %v3425
      %3464 = vmatprep.subr.mxu0 0.0
      %3465 = vmatpush1.msra.mxu0 %v3426
      %3466 = vmatprep.subr.mxu0 0.0
      %3467 = vmatpush1.msra.mxu0 0.0
      %3468 = vmatprep.subr.mxu0 0.0
      %3469 = vmatpush1.msra.mxu0 0.0
      %3470 = vmatprep.subr.mxu0 0.0
      %3471 = vmatpush1.msra.mxu0 0.0
      %3472 = vmatprep.subr.mxu0 0.0
      %3473 = vmatpush1.msra.mxu0 0.0
      %3474 = vmatprep.subr.mxu0 0.0
      %3475 = vmatpush1.msra.mxu0 0.0
      %3476 = vmatprep.subr.mxu0 0.0
      %3477 = vmatpush1.msra.mxu0 0.0
      %3478 = vmatprep.subr.mxu0 0.0
      %3479 = vmatpush1.msra.mxu0 0.0
      %3480 = vmatprep.subr.mxu0 0.0
      %3481 = vmatpush1.msra.mxu0 0.0
      %3482 = vmatprep.subr.mxu0 0.0
      %3483 = vmatpush1.msra.mxu0 0.0
      %3484 = vmatprep.subr.mxu0 0.0
      %3485 = vmatpush1.msra.mxu0 0.0
      %3486 = vmatprep.subr.mxu0 0.0
      %3487 = vmatpush1.msra.mxu0 0.0
      %3488 = vmatprep.subr.mxu0 0.0
      %3489 = vmatpush1.msra.mxu0 0.0
      %3490 = vmatprep.subr.mxu0 0.0
      %3491 = vmatpush1.msra.mxu0 0.0
      %3492 = vmatprep.subr.mxu0 0.0
      %3493 = vmatpush1.msra.mxu0 0.0
      %3494 = vmatprep.subr.mxu0 0.0
      %3495 = vmatpush1.msra.mxu0 0.0
      %3496 = vmatprep.subr.mxu0 0.0
      %3497 = vmatpush1.msra.mxu0 0.0
      %3498 = vmatprep.mubr.f32.mxu0 0.0
      %3499 = vmatmul.mubr.f32.gmra.mrb[0].mxu0 %v387
      %v3500 = vpop.f32.mrb[0].mxu0
      %v3501 = vadd.f32 %v3432, %v3500
      %v3502 = vpop.f32.mrb[0].mxu0
      %3503 = vmatprep.mubr.f32.mxu0 0.0
      %3504 = vmatmul.mubr.f32.gmra.mrb[0].mxu0 %v388
      %v3505 = vpop.f32.mrb[0].mxu0
      %v3506 = vadd.f32 %v3432, %v3505
      %v3507 = vpop.f32.mrb[0].mxu0
      %3508 = vmatprep.mubr.f32.mxu0 0.0
      %3509 = vmatmul.mubr.f32.gmra.mrb[0].mxu0 %v389
      %v3510 = vpop.f32.mrb[0].mxu0
      %v3511 = vadd.f32 %v3432, %v3510
      %v3512 = vpop.f32.mrb[0].mxu0
      %3513 = vmatprep.mubr.f32.mxu0 0.0
      %3514 = vmatmul.mubr.f32.gmra.mrb[0].mxu0 %v390
      %v3515 = vpop.f32.mrb[0].mxu0
      %v3516 = vadd.f32 %v3432, %v3515
      %v3517 = vpop.f32.mrb[0].mxu0
      %3518 = vmatprep.mubr.f32.mxu0 0.0
      %3519 = vmatmul.mubr.f32.gmra.mrb[0].mxu0 %v391
      %v3520 = vpop.f32.mrb[0].mxu0
      %v3521 = vadd.f32 %v3432, %v3520
      %v3522 = vpop.f32.mrb[0].mxu0
      %3523 = vmatprep.mubr.f32.mxu0 0.0
      %3524 = vmatmul.mubr.f32.gmra.mrb[0].mxu0 %v392
      %v3525 = vpop.f32.mrb[0].mxu0
      %v3526 = vadd.f32 %v3432, %v3525
      %v3527 = vpop.f32.mrb[0].mxu0
      %3528 = vmatprep.mubr.f32.mxu0 0.0
      %3529 = vmatmul.mubr.f32.gmra.mrb[0].mxu0 %v393
      %v3530 = vpop.f32.mrb[0].mxu0
      %v3531 = vadd.f32 %v3432, %v3530
      %v3532 = vpop.f32.mrb[0].mxu0
      %3533 = vmatprep.mubr.f32.mxu0 0.0
      %3534 = vmatmul.mubr.f32.gmra.mrb[0].mxu0 %v394
      %v3535 = vpop.f32.mrb[0].mxu0
      %v3536 = vadd.f32 %v3432, %v3535
      %v3537 = vpop.f32.mrb[0].mxu0
      %3538 = vmatprep.mubr.f32.mxu0 0.0
      %3539 = vmatmul.mubr.f32.gmra.mrb[0].mxu0 %v395
      %v3540 = vpop.f32.mrb[0].mxu0
      %v3541 = vadd.f32 %v3432, %v3540
      %v3542 = vpop.f32.mrb[0].mxu0
      %3543 = vmatprep.mubr.f32.mxu0 0.0
      %3544 = vmatmul.mubr.f32.gmra.mrb[0].mxu0 %v396
      %v3545 = vpop.f32.mrb[0].mxu0
      %v3546 = vadd.f32 %v3432, %v3545
      %v3547 = vpop.f32.mrb[0].mxu0
      %3548 = vmatprep.mubr.f32.mxu0 0.0
      %3549 = vmatmul.mubr.f32.gmra.mrb[0].mxu0 %v397
      %v3550 = vpop.f32.mrb[0].mxu0
      %v3551 = vadd.f32 %v3432, %v3550
      %v3552 = vpop.f32.mrb[0].mxu0
      %3553 = vmatprep.mubr.f32.mxu0 0.0
      %3554 = vmatmul.mubr.f32.gmra.mrb[0].mxu0 %v398
      %v3555 = vpop.f32.mrb[0].mxu0
      %v3556 = vadd.f32 %v3432, %v3555
      %v3557 = vpop.f32.mrb[0].mxu0
      %3558 = vmatprep.mubr.f32.mxu0 0.0
      %3559 = vmatmul.mubr.f32.gmra.mrb[0].mxu0 %v399
      %v3560 = vpop.f32.mrb[0].mxu0
      %v3561 = vadd.f32 %v3432, %v3560
      %v3562 = vpop.f32.mrb[0].mxu0
      %3563 = vmatprep.mubr.f32.mxu0 0.0
      %3564 = vmatmul.mubr.f32.gmra.mrb[0].mxu0 %v400
      %v3565 = vpop.f32.mrb[0].mxu0
      %v3566 = vadd.f32 %v3432, %v3565
      %v3567 = vpop.f32.mrb[0].mxu0
      %3568 = vmatprep.mubr.f32.mxu0 0.0
      %3569 = vmatmul.mubr.f32.gmra.mrb[0].mxu0 %v401
      %v3570 = vpop.f32.mrb[0].mxu0
      %v3571 = vadd.f32 %v3432, %v3570
      %v3572 = vpop.f32.mrb[0].mxu0
      %3573 = vmatprep.mubr.f32.mxu0 0.0
      %3574 = vmatmul.mubr.f32.gmra.mrb[0].mxu0 %v402
      %v3575 = vpop.f32.mrb[0].mxu0
      %v3576 = vadd.f32 %v3432, %v3575
      %v3577 = vpop.f32.mrb[0].mxu0
      %3578 = vmatprep.mubr.f32.mxu0 0.0
      %3579 = vmatmul.mubr.f32.gmra.mrb[0].mxu0 %v403
      %v3580 = vpop.f32.mrb[0].mxu0
      %v3581 = vadd.f32 %v3432, %v3580
      %v3582 = vpop.f32.mrb[0].mxu0
      %3583 = vmatprep.mubr.f32.mxu0 0.0
      %3584 = vmatmul.mubr.f32.gmra.mrb[0].mxu0 %v404
      %v3585 = vpop.f32.mrb[0].mxu0
      %v3586 = vadd.f32 %v3432, %v3585
      %v3587 = vpop.f32.mrb[0].mxu0
      %3588 = vmatprep.mubr.f32.mxu0 0.0
      %3589 = vmatmul.mubr.f32.gmra.mrb[0].mxu0 %v405
      %v3590 = vpop.f32.mrb[0].mxu0
      %v3591 = vadd.f32 %v3432, %v3590
      %v3592 = vpop.f32.mrb[0].mxu0
      %3593 = vmatprep.mubr.f32.mxu0 0.0
      %3594 = vmatmul.mubr.f32.gmra.mrb[0].mxu0 %v406
      %v3595 = vpop.f32.mrb[0].mxu0
      %v3596 = vadd.f32 %v3432, %v3595
      %v3597 = vpop.f32.mrb[0].mxu0
      %3598 = vmatprep.mubr.f32.mxu0 0.0
      %3599 = vmatmul.mubr.f32.gmra.mrb[0].mxu0 %v407
      %v3600 = vpop.f32.mrb[0].mxu0
      %v3601 = vadd.f32 %v3432, %v3600
      %v3602 = vpop.f32.mrb[0].mxu0
      %3603 = vmatprep.mubr.f32.mxu0 0.0
      %3604 = vmatmul.mubr.f32.gmra.mrb[0].mxu0 %v408
      %v3605 = vpop.f32.mrb[0].mxu0
      %v3606 = vadd.f32 %v3432, %v3605
      %v3607 = vpop.f32.mrb[0].mxu0
      %3608 = vmatprep.mubr.f32.mxu0 0.0
      %3609 = vmatmul.mubr.f32.gmra.mrb[0].mxu0 %v409
      %v3610 = vpop.f32.mrb[0].mxu0
      %v3611 = vadd.f32 %v3432, %v3610
      %v3612 = vpop.f32.mrb[0].mxu0
      %3613 = vmatprep.mubr.f32.mxu0 0.0
      %3614 = vmatmul.mubr.f32.gmra.mrb[0].mxu0 %v410
      %v3615 = vpop.f32.mrb[0].mxu0
      %v3616 = vadd.f32 %v3432, %v3615
      %v3617 = vpop.f32.mrb[0].mxu0
      %3618 = vmatprep.mubr.f32.mxu0 0.0
      %3619 = vmatmul.mubr.f32.gmra.mrb[0].mxu0 %v411
      %v3620 = vpop.f32.mrb[0].mxu0
      %v3621 = vadd.f32 %v3432, %v3620
      %v3622 = vpop.f32.mrb[0].mxu0
      %3623 = vmatprep.mubr.f32.mxu0 0.0
      %3624 = vmatmul.mubr.f32.gmra.mrb[0].mxu0 %v412
      %v3625 = vpop.f32.mrb[0].mxu0
      %v3626 = vadd.f32 %v3432, %v3625
      %v3627 = vpop.f32.mrb[0].mxu0
      %3628 = vmatprep.mubr.f32.mxu0 0.0
      %3629 = vmatmul.mubr.f32.gmra.mrb[0].mxu0 %v413
      %v3630 = vpop.f32.mrb[0].mxu0
      %v3631 = vadd.f32 %v3432, %v3630
      %v3632 = vpop.f32.mrb[0].mxu0
      %3633 = vmatprep.mubr.f32.mxu0 0.0
      %3634 = vmatmul.mubr.f32.gmra.mrb[0].mxu0 %v414
      %v3635 = vpop.f32.mrb[0].mxu0
      %v3636 = vadd.f32 %v3432, %v3635
      %v3637 = vpop.f32.mrb[0].mxu0
      %3638 = vmatprep.mubr.f32.mxu0 0.0
      %3639 = vmatmul.mubr.f32.gmra.mrb[0].mxu0 %v415
      %v3640 = vpop.f32.mrb[0].mxu0
      %v3641 = vadd.f32 %v3432, %v3640
      %v3642 = vpop.f32.mrb[0].mxu0
      %3643 = vmatprep.mubr.f32.mxu0 0.0
      %3644 = vmatmul.mubr.f32.gmra.mrb[0].mxu0 %v416
      %v3645 = vpop.f32.mrb[0].mxu0
      %v3646 = vadd.f32 %v3432, %v3645
      %v3647 = vpop.f32.mrb[0].mxu0
      %3648 = vmatprep.mubr.f32.mxu0 0.0
      %3649 = vmatmul.mubr.f32.gmra.mrb[0].mxu0 %v417
      %v3650 = vpop.f32.mrb[0].mxu0
      %v3651 = vadd.f32 %v3432, %v3650
      %v3652 = vpop.f32.mrb[0].mxu0
      %3653 = vmatprep.mubr.f32.mxu0 0.0
      %3654 = vmatmul.mubr.f32.gmra.mrb[0].mxu0 %v418
      %v3655 = vpop.f32.mrb[0].mxu0
      %v3656 = vadd.f32 %v3432, %v3655
      %v3657 = vpop.f32.mrb[0].mxu0
      %3658 = vdwg.mxu0
      %v3659 = vadd.f32 %v3379, %v3501
      %v3660 = vadd.f32 %v3380, %v3506
      %v3661 = vadd.f32 %v3381, %v3511
      %v3662 = vadd.f32 %v3382, %v3516
      %v3663 = vadd.f32 %v3383, %v3521
      %v3664 = vadd.f32 %v3384, %v3526
      %v3665 = vadd.f32 %v3385, %v3531
      %v3666 = vadd.f32 %v3386, %v3536
      %v3667 = vadd.f32 %v3387, %v3541
      %v3668 = vadd.f32 %v3388, %v3546
      %v3669 = vadd.f32 %v3389, %v3551
      %v3670 = vadd.f32 %v3390, %v3556
      %v3671 = vadd.f32 %v3391, %v3561
      %v3672 = vadd.f32 %v3392, %v3566
      %v3673 = vadd.f32 %v3393, %v3571
      %v3674 = vadd.f32 %v3394, %v3576
      %v3675 = vadd.f32 %v3395, %v3581
      %v3676 = vadd.f32 %v3396, %v3586
      %v3677 = vadd.f32 %v3397, %v3591
      %v3678 = vadd.f32 %v3398, %v3596
      %v3679 = vadd.f32 %v3399, %v3601
      %v3680 = vadd.f32 %v3400, %v3606
      %v3681 = vadd.f32 %v3401, %v3611
      %v3682 = vadd.f32 %v3402, %v3616
      %v3683 = vadd.f32 %v3403, %v3621
      %v3684 = vadd.f32 %v3404, %v3626
      %v3685 = vadd.f32 %v3405, %v3631
      %v3686 = vadd.f32 %v3406, %v3636
      %v3687 = vadd.f32 %v3407, %v3641
      %v3688 = vadd.f32 %v3408, %v3646
      %v3689 = vadd.f32 %v3409, %v3651
      %v3690 = vadd.f32 %v3410, %v3656
      %v3691 = vmax.f32 %v3659, 0.0
      %v3692 = vmax.f32 %v3660, 0.0
      %v3693 = vmax.f32 %v3661, 0.0
      %v3694 = vmax.f32 %v3662, 0.0
      %v3695 = vmax.f32 %v3663, 0.0
      %v3696 = vmax.f32 %v3664, 0.0
      %v3697 = vmax.f32 %v3665, 0.0
      %v3698 = vmax.f32 %v3666, 0.0
      %v3699 = vmax.f32 %v3667, 0.0
      %v3700 = vmax.f32 %v3668, 0.0
      %v3701 = vmax.f32 %v3669, 0.0
      %v3702 = vmax.f32 %v3670, 0.0
      %v3703 = vmax.f32 %v3671, 0.0
      %v3704 = vmax.f32 %v3672, 0.0
      %v3705 = vmax.f32 %v3673, 0.0
      %v3706 = vmax.f32 %v3674, 0.0
      %v3707 = vmax.f32 %v3675, 0.0
      %v3708 = vmax.f32 %v3676, 0.0
      %v3709 = vmax.f32 %v3677, 0.0
      %v3710 = vmax.f32 %v3678, 0.0
      %v3711 = vmax.f32 %v3679, 0.0
      %v3712 = vmax.f32 %v3680, 0.0
      %v3713 = vmax.f32 %v3681, 0.0
      %v3714 = vmax.f32 %v3682, 0.0
      %v3715 = vmax.f32 %v3683, 0.0
      %v3716 = vmax.f32 %v3684, 0.0
      %v3717 = vmax.f32 %v3685, 0.0
      %v3718 = vmax.f32 %v3686, 0.0
      %v3719 = vmax.f32 %v3687, 0.0
      %v3720 = vmax.f32 %v3688, 0.0
      %v3721 = vmax.f32 %v3689, 0.0
      %v3722 = vmax.f32 %v3690, 0.0
      %3723 = vst [vmem:[%s386] sm:$0xff] %v3691
      %3724 = vst [vmem:[%s386 + $0x8] sm:$0xff] %v3692
      %3725 = vst [vmem:[%s386 + $0x10] sm:$0xff] %v3693
      %3726 = vst [vmem:[%s386 + $0x18] sm:$0xff] %v3694
      %3727 = vst [vmem:[%s386 + $0x20] sm:$0xff] %v3695
      %3728 = vst [vmem:[%s386 + $0x28] sm:$0xff] %v3696
      %3729 = vst [vmem:[%s386 + $0x30] sm:$0xff] %v3697
      %3730 = vst [vmem:[%s386 + $0x38] sm:$0xff] %v3698
      %3731 = vst [vmem:[%s386 + $0x40] sm:$0xff] %v3699
      %3732 = vst [vmem:[%s386 + $0x48] sm:$0xff] %v3700
      %3733 = vst [vmem:[%s386 + $0x50] sm:$0xff] %v3701
      %3734 = vst [vmem:[%s386 + $0x58] sm:$0xff] %v3702
      %3735 = vst [vmem:[%s386 + $0x60] sm:$0xff] %v3703
      %3736 = vst [vmem:[%s386 + $0x68] sm:$0xff] %v3704
      %3737 = vst [vmem:[%s386 + $0x70] sm:$0xff] %v3705
      %3738 = vst [vmem:[%s386 + $0x78] sm:$0xff] %v3706
      %3739 = vst [vmem:[%s386 + $0x80] sm:$0xff] %v3707
      %3740 = vst [vmem:[%s386 + $0x88] sm:$0xff] %v3708
      %3741 = vst [vmem:[%s386 + $0x90] sm:$0xff] %v3709
      %3742 = vst [vmem:[%s386 + $0x98] sm:$0xff] %v3710
      %3743 = vst [vmem:[%s386 + $0xa0] sm:$0xff] %v3711
      %3744 = vst [vmem:[%s386 + $0xa8] sm:$0xff] %v3712
      %3745 = vst [vmem:[%s386 + $0xb0] sm:$0xff] %v3713
      %3746 = vst [vmem:[%s386 + $0xb8] sm:$0xff] %v3714
      %3747 = vst [vmem:[%s386 + $0xc0] sm:$0xff] %v3715
      %3748 = vst [vmem:[%s386 + $0xc8] sm:$0xff] %v3716
      %3749 = vst [vmem:[%s386 + $0xd0] sm:$0xff] %v3717
      %3750 = vst [vmem:[%s386 + $0xd8] sm:$0xff] %v3718
      %3751 = vst [vmem:[%s386 + $0xe0] sm:$0xff] %v3719
      %3752 = vst [vmem:[%s386 + $0xe8] sm:$0xff] %v3720
      %3753 = vst [vmem:[%s386 + $0xf0] sm:$0xff] %v3721
      %3754 = vst [vmem:[%s386 + $0xf8] sm:$0xff] %v3722
      %p3755 = scmp.lt.s32.totalorder %s22, 1
      %s3756 = scalar_select %p3755, %s22, 1
      %s3757 = smul.addr %s3756, 32
      %s3758 = smul.addr %s3757, 8
      %s3759 = scalar_lea.vmem %s11, %s3758
      // Predicated region
      $region65: #{bottleneck_forward.1} parent=63 // pred_check
        %p3760 = pneg %p276
      $region66: #{bottleneck_forward.1} parent=63 // pred_check_branch
        %3762 = sbr.rel (%p3760) target = $region68
      $region67: #{bottleneck_forward.1} parent=63 // pred_region
        _
      $region68: #{bottleneck_forward.1} parent=63 // pred_fallthru
        _
    $region64: #{bottleneck_forward.1} parent=5 // pred_fallthru
      _
    %p3763 = scmp.le.s32.totalorder 2, %s17
    // Predicated region
    $region69: #{bottleneck_forward.1} parent=5 // pred_check
      %p3764 = pneg %p3763
    $region70: #{bottleneck_forward.1} parent=5 // pred_check_branch
      %3766 = sbr.rel (%p3764) target = $region72
    $region71: #{bottleneck_forward.1} parent=5 // pred_region
      %s3767 = ssub.s32 %s17, 2
      // Predicated region
      $region73: #{bottleneck_forward.1} parent=71 // pred_check
        %p3768 = pneg %p282
      $region74: #{bottleneck_forward.1} parent=71 // pred_check_branch
        %3770 = sbr.rel (%p3768) target = $region76
      $region75: #{bottleneck_forward.1} parent=71 // pred_region
        %p3771 = scmp.lt.s32.totalorder %s23, 1
        %s3772 = scalar_select %p3771, %s23, 1
        %s3773 = smul.addr %s3772, 32
        %s3774 = smul.addr %s3773, 8
        %s3775 = scalar_lea.vmem %s11, %s3774
      $region76: #{bottleneck_forward.1} parent=71 // pred_fallthru
        _
    $region72: #{bottleneck_forward.1} parent=5 // pred_fallthru
      _
  $region6: #{bottleneck_forward.1} parent=0 // loop_footer
    %s21 = sadd.s32 1, %s17
  $region7: #{bottleneck_forward.1} parent=0 // loop_footer_branch
    %16 = sbr.rel target = $region3
  $region8: #{bottleneck_forward.1} parent=0 // loop_exit
    _

</llo_original>
